<compile_context>
chip_gen: v5e
topology: v5e:2x2
jax: 0.10.0
libtpu: 0.0.40
codegen_flags: <defaults>
</compile_context>

<pallas_src>
import jax
import jax.numpy as jnp
from jax import lax
from jax.experimental import pallas as pl
from jax.experimental.pallas import tpu as pltpu

_K = 7  # every Conv1d / ConvTranspose1d in the model uses kernel_size 7
        # (the 1x1 bottleneck / final layers are handled as plain affine ops)


# ---------------------------------------------------------------------------
# Fused whole-network kernel (one batch element per grid step).
# ---------------------------------------------------------------------------
def _fused_autoencoder_kernel(
    x_ref,
    w1_ref, b1_ref, w2_ref, b2_ref, w3_ref, b3_ref,
    sw1_ref, sb1_ref, sw2_ref, sb2_ref,
    wd_ref, bd_ref,
    wt1_ref, bt1_ref, wt2_ref, bt2_ref, wt3_ref, bt3_ref,
    wf_ref, bf_ref,
    o_ref,
):
    f32 = jnp.float32
    K = _K

    def conv_valid(x, w_mat, b_col):
        # Valid Conv1d, stride 1.  x: (C_in, L_in); w_mat: (C_out, K*C_in) with
        # column order k*C_in + c; b_col: (C_out, 1).
        c_in, l_in = x.shape
        l_out = l_in - K + 1
        if c_in == 1:
            # Degenerate contraction: VPU broadcast multiply-accumulate.
            c_out = w_mat.shape[0]
            acc = jnp.zeros((c_out, l_out), f32)
            for t in range(K):
                acc = acc + w_mat[:, t:t + 1] * x[:, t:t + l_out]
            return acc + b_col
        # im2col slab + ONE MXU matmul (single deep contraction).
        cols = jnp.concatenate([x[:, t:t + l_out] for t in range(K)], axis=0)
        return jnp.dot(w_mat, cols, preferred_element_type=f32) + b_col

    def avg_pool2(y):
        # AvgPool1d(kernel=stride=2, floor) as a matmul with a 0.5 two-hot
        # pooling matrix built from iota (lives entirely in vregs/VMEM).
        c, l = y.shape
        l2 = l // 2
        r = lax.broadcasted_iota(jnp.int32, (l, l2), 0)
        s = lax.broadcasted_iota(jnp.int32, (l, l2), 1)
        pmat = jnp.where((r == 2 * s) | (r == 2 * s + 1), 0.5, 0.0).astype(f32)
        return jnp.dot(y, pmat, preferred_element_type=f32)

    def dilate_pad(x, stride=2, out_pad=1):
        # Zero-dilated + edge-padded view for ConvTranspose1d (padding=0),
        # built in VMEM as x @ D with a one-hot scatter matrix (no HBM trip).
        c, l = x.shape
        lp = (l - 1) * stride + 1 + (K - 1) + (K - 1 + out_pad)
        r = lax.broadcasted_iota(jnp.int32, (l, lp), 0)
        s = lax.broadcasted_iota(jnp.int32, (l, lp), 1)
        dmat = jnp.where(s == stride * r + (K - 1), 1.0, 0.0).astype(f32)
        return jnp.dot(x, dmat, preferred_element_type=f32)

    def se_block(x):
        # Shared SE_Block1d(96, r=8): squeeze -> Linear/ReLU/Linear/Sigmoid -> scale.
        inv_l = 1.0 / x.shape[-1]
        m = jnp.sum(x, axis=-1, keepdims=True) * inv_l                        # (C, 1)
        h = jnp.dot(sw1_ref[...], m, preferred_element_type=f32) + sb1_ref[...]
        h = jnp.maximum(h, 0.0)
        g = jnp.dot(sw2_ref[...], h, preferred_element_type=f32) + sb2_ref[...]
        g = jax.nn.sigmoid(g)
        return x * g                                                          # lane-broadcast

    x = x_ref[0].astype(f32)                                                  # (1, L0)

    # ---- Encoder ----------------------------------------------------------
    h = avg_pool2(jnp.tanh(conv_valid(x, w1_ref[...], b1_ref[...])))          # mod1
    h = avg_pool2(jnp.tanh(conv_valid(h, w2_ref[...], b2_ref[...])))          # mod2
    h = jnp.tanh(conv_valid(h, w3_ref[...], b3_ref[...]))                     # mod3 conv
    h = avg_pool2(se_block(h))                                                # mod3 SE + pool

    # ---- Bottleneck: Conv1d(96, 1, k=1) + tanh ------------------------------
    h = jnp.tanh(jnp.dot(wd_ref[...], h, preferred_element_type=f32) + bd_ref[...])

    # ---- Decoder ------------------------------------------------------------
    h = conv_valid(dilate_pad(h), wt1_ref[...], bt1_ref[...])                 # modt1 convT
    h = jnp.tanh(se_block(h))                                                 # modt1 SE + tanh
    h = jnp.tanh(conv_valid(dilate_pad(h), wt2_ref[...], bt2_ref[...]))       # modt2
    h = jnp.tanh(conv_valid(dilate_pad(h), wt3_ref[...], bt3_ref[...]))       # modt3

    # ---- Output layer, fused epilogue ---------------------------------------
    # TODO(synk): the reference model's `output` layer is Conv1d(in=1, out=1, k=1)
    # but receives modt3's 32-channel tensor (PyTorch would raise a channel
    # mismatch); we apply the 1x1 conv per channel (channels as batch) as the
    # closest well-defined interpretation.
    y = jnp.tanh(h * wf_ref[...] + bf_ref[...])
    o_ref[0] = y.astype(o_ref.dtype)


# ---------------------------------------------------------------------------
# One-time weight prepacking (done outside the jitted forward).
# ---------------------------------------------------------------------------
def prepack_params(p):
    def conv_mat(w):                      # (C_out, C_in, K) -> (C_out, K*C_in)
        c_out, c_in, k = w.shape
        return jnp.transpose(w, (0, 2, 1)).reshape(c_out, k * c_in)

    def convt_mat(w):                     # (C_in, C_out, K) -> equivalent valid-conv matrix
        return conv_mat(jnp.flip(w, axis=-1).transpose(1, 0, 2))

    col = lambda b: b.reshape(-1, 1)
    return dict(
        w1=conv_mat(p["conv1_w"]),  b1=col(p["conv1_b"]),
        w2=conv_mat(p["conv2_w"]),  b2=col(p["conv2_b"]),
        w3=conv_mat(p["conv3_w"]),  b3=col(p["conv3_b"]),
        sw1=p["se_w1"],             sb1=col(p["se_b1"]),
        sw2=p["se_w2"],             sb2=col(p["se_b2"]),
        wd=p["dense_w"].reshape(1, -1), bd=col(p["dense_b"]),
        wt1=convt_mat(p["convt1_w"]), bt1=col(p["convt1_b"]),
        wt2=convt_mat(p["convt2_w"]), bt2=col(p["convt2_b"]),
        wt3=convt_mat(p["convt3_w"]), bt3=col(p["convt3_b"]),
        wf=p["final_w"].reshape(1, 1), bf=p["final_b"].reshape(1, 1),
    )


_PARAM_ORDER = ("w1", "b1", "w2", "b2", "w3", "b3",
                "sw1", "sb1", "sw2", "sb2",
                "wd", "bd",
                "wt1", "bt1", "wt2", "bt2", "wt3", "bt3",
                "wf", "bf")


def autoencoder_forward(x, q):
    B, c_in, l0 = x.shape
    assert c_in == 1
    K = _K
    # Static shape bookkeeping: encoder conv(-6) then pool(//2); decoder 2L+6.
    l1 = l0 - (K - 1); l1p = l1 // 2
    l2 = l1p - (K - 1); l2p = l2 // 2
    l3 = l2p - (K - 1); l3p = l3 // 2
    lt1 = 2 * l3p + (K - 1)
    lt2 = 2 * lt1 + (K - 1)
    lt3 = 2 * lt2 + (K - 1)
    c_out = q["wt3"].shape[0]

    weights = [q[name] for name in _PARAM_ORDER]

    def const_spec(a):
        nd = a.ndim
        return pl.BlockSpec(a.shape, lambda b, _n=nd: (0,) * _n)

    flops = 2 * B * K * (32 * 1 * l1 + 64 * 32 * l2 + 96 * 64 * l3
                         + 96 * 1 * lt1 + 64 * 96 * lt2 + 32 * 64 * lt3) \
        + 2 * B * (96 * l3p + 2 * 96 * 12)
    trans = B * (32 * l1 + 64 * l2 + 96 * l3 + l3p + 2 * 96 * lt1 + 64 * lt2
                 + 2 * 32 * lt3 + 2 * 96 + 2 * 12)
    nbytes = 4 * (x.size + sum(int(w.size) for w in weights) + B * c_out * lt3)

    return pl.pallas_call(
        _fused_autoencoder_kernel,
        out_shape=jax.ShapeDtypeStruct((B, c_out, lt3), x.dtype),
        grid=(B,),
        in_specs=[pl.BlockSpec((1, 1, l0), lambda b: (b, 0, 0))]
                 + [const_spec(w) for w in weights],
        out_specs=pl.BlockSpec((1, c_out, lt3), lambda b: (b, 0, 0)),
        compiler_params=pltpu.CompilerParams(
            dimension_semantics=("parallel",)),   # both TCs busy on v7x; cheap on v5e/v6e
        cost_estimate=pl.CostEstimate(flops=flops, transcendentals=trans,
                                      bytes_accessed=nbytes),
    )(x, *weights)


# ---------------------------------------------------------------------------
# Pure-JAX (lax) reference for validation.
# ---------------------------------------------------------------------------
_HI = jax.lax.Precision.HIGHEST


def _ref_conv1d(x, w, b):
    y = lax.conv_general_dilated(
        x, w, window_strides=(1,), padding="VALID",
        dimension_numbers=("NCH", "OIH", "NCH"), precision=_HI)
    return y + b[None, :, None]


def _ref_conv_transpose1d(x, w, b, *, stride=2, output_padding=1):
    K = w.shape[-1]
    w_conv = jnp.flip(w, axis=-1).transpose(1, 0, 2)
    y = lax.conv_general_dilated(
        x, w_conv, window_strides=(1,),
        padding=[(K - 1, K - 1 + output_padding)], lhs_dilation=(stride,),
        dimension_numbers=("NCH", "OIH", "NCH"), precision=_HI)
    return y + b[None, :, None]


def _ref_se(x, w1, b1, w2, b2):
    m = jnp.mean(x, axis=-1)
    h = jnp.maximum(jnp.dot(m, w1.T, precision=_HI) + b1, 0.0)
    g = jax.nn.sigmoid(jnp.dot(h, w2.T, precision=_HI) + b2)
    return x * g[:, :, None]


def _ref_avg_pool(x, k=2):
    B, C, L = x.shape
    L2 = L // k
    return jnp.mean(x[:, :, :L2 * k].reshape(B, C, L2, k), axis=-1)


def reference_forward(x, p):
    h = _ref_avg_pool(jnp.tanh(_ref_conv1d(x, p["conv1_w"], p["conv1_b"])))
    h = _ref_avg_pool(jnp.tanh(_ref_conv1d(h, p["conv2_w"], p["conv2_b"])))
    h = jnp.tanh(_ref_conv1d(h, p["conv3_w"], p["conv3_b"]))
    h = _ref_avg_pool(_ref_se(h, p["se_w1"], p["se_b1"], p["se_w2"], p["se_b2"]))
    h = jnp.tanh(_ref_conv1d(h, p["dense_w"], p["dense_b"]))
    h = _ref_conv_transpose1d(h, p["convt1_w"], p["convt1_b"])
    h = jnp.tanh(_ref_se(h, p["se_w1"], p["se_b1"], p["se_w2"], p["se_b2"]))
    h = jnp.tanh(_ref_conv_transpose1d(h, p["convt2_w"], p["convt2_b"]))
    h = jnp.tanh(_ref_conv_transpose1d(h, p["convt3_w"], p["convt3_b"]))
    return jnp.tanh(h * p["final_w"].reshape(()) + p["final_b"].reshape(()))


# ---------------------------------------------------------------------------
# Deterministic parameter init (PyTorch-like uniform fan-in scaling).
# ---------------------------------------------------------------------------
def init_params(key):
    def uniform(k, shape, fan_in):
        bound = 1.0 / (fan_in ** 0.5)
        return jax.random.uniform(k, shape, jnp.float32, -bound, bound)

    ks = iter(jax.random.split(key, 20))
    p = {}
    # Conv1d weights: (C_out, C_in, K).
    p["conv1_w"] = uniform(next(ks), (32, 1, 7), 7);    p["conv1_b"] = uniform(next(ks), (32,), 7)
    p["conv2_w"] = uniform(next(ks), (64, 32, 7), 224); p["conv2_b"] = uniform(next(ks), (64,), 224)
    p["conv3_w"] = uniform(next(ks), (96, 64, 7), 448); p["conv3_b"] = uniform(next(ks), (96,), 448)
    # ConvTranspose1d weights: (C_in, C_out, K).
    p["convt1_w"] = uniform(next(ks), (1, 96, 7), 7);    p["convt1_b"] = uniform(next(ks), (96,), 7)
    p["convt2_w"] = uniform(next(ks), (96, 64, 7), 672); p["convt2_b"] = uniform(next(ks), (64,), 672)
    p["convt3_w"] = uniform(next(ks), (64, 32, 7), 448); p["convt3_b"] = uniform(next(ks), (32,), 448)
    # Shared SE_Block1d(96, r=8): Linear layouts (out, in) + biases.
    p["se_w1"] = uniform(next(ks), (12, 96), 96); p["se_b1"] = uniform(next(ks), (12,), 96)
    p["se_w2"] = uniform(next(ks), (96, 12), 12); p["se_b2"] = uniform(next(ks), (96,), 12)
    # Bottleneck Conv1d(96, 1, 1) and final Conv1d(1, 1, 1).
    p["dense_w"] = uniform(next(ks), (1, 96, 1), 96); p["dense_b"] = uniform(next(ks), (1,), 96)
    p["final_w"] = uniform(next(ks), (1, 1, 1), 1);   p["final_b"] = uniform(next(ks), (1,), 1)
    return p


if __name__ == "__main__":
    B, L0 = 2, 128
    k_x, k_p = jax.random.split(jax.random.PRNGKey(0))
    params = init_params(k_p)
    packed = prepack_params(params)           # one-time weight re-layout
    x = jax.random.normal(k_x, (B, 1, L0), dtype=jnp.float32)

    out = jax.block_until_ready(jax.jit(autoencoder_forward)(x, packed))
    ref = jax.block_until_ready(jax.jit(reference_forward)(x, params))

    assert out.shape == (B, 32, 122), out.shape
    max_err = float(jnp.max(jnp.abs(out - ref)))
    assert max_err < 5e-4, f"max abs err {max_err}"
    print("KERNEL_OK")
</pallas_src>

<mosaic_0001>
module attributes {stable_mosaic.version = 11 : i64} {
  func.func @_fused_autoencoder_kernel(%arg0: i32, %arg1: memref<1x1x128xf32, #tpu.memory_space<vmem>>, %arg2: memref<32x7xf32, #tpu.memory_space<vmem>>, %arg3: memref<32x1xf32, #tpu.memory_space<vmem>>, %arg4: memref<64x224xf32, #tpu.memory_space<vmem>>, %arg5: memref<64x1xf32, #tpu.memory_space<vmem>>, %arg6: memref<96x448xf32, #tpu.memory_space<vmem>>, %arg7: memref<96x1xf32, #tpu.memory_space<vmem>>, %arg8: memref<12x96xf32, #tpu.memory_space<vmem>>, %arg9: memref<12x1xf32, #tpu.memory_space<vmem>>, %arg10: memref<96x12xf32, #tpu.memory_space<vmem>>, %arg11: memref<96x1xf32, #tpu.memory_space<vmem>>, %arg12: memref<1x96xf32, #tpu.memory_space<vmem>>, %arg13: memref<1x1xf32, #tpu.memory_space<vmem>>, %arg14: memref<96x7xf32, #tpu.memory_space<vmem>>, %arg15: memref<96x1xf32, #tpu.memory_space<vmem>>, %arg16: memref<64x672xf32, #tpu.memory_space<vmem>>, %arg17: memref<64x1xf32, #tpu.memory_space<vmem>>, %arg18: memref<32x448xf32, #tpu.memory_space<vmem>>, %arg19: memref<32x1xf32, #tpu.memory_space<vmem>>, %arg20: memref<1x1xf32, #tpu.memory_space<vmem>>, %arg21: memref<1x1xf32, #tpu.memory_space<vmem>>, %arg22: memref<1x32x122xf32, #tpu.memory_space<vmem>>) attributes {dimension_semantics = [#tpu.dimension_semantics<parallel>], iteration_bounds = array<i64: 2>, scalar_prefetch = 0 : i64, scratch_operands = 0 : i64, tpu.core_type = #tpu.core_type<tc>, window_params = [{transform_indices = @transform_0, window_bounds = array<i64: 1, 1, 128>}, {pipeline_mode = #tpu.pipeline_mode<synchronous>, transform_indices = @transform_1, window_bounds = array<i64: 32, 7>}, {pipeline_mode = #tpu.pipeline_mode<synchronous>, transform_indices = @transform_2, window_bounds = array<i64: 32, 1>}, {pipeline_mode = #tpu.pipeline_mode<synchronous>, transform_indices = @transform_3, window_bounds = array<i64: 64, 224>}, {pipeline_mode = #tpu.pipeline_mode<synchronous>, transform_indices = @transform_4, window_bounds = array<i64: 64, 1>}, {pipeline_mode = #tpu.pipeline_mode<synchronous>, transform_indices = @transform_5, window_bounds = array<i64: 96, 448>}, {pipeline_mode = #tpu.pipeline_mode<synchronous>, transform_indices = @transform_6, window_bounds = array<i64: 96, 1>}, {pipeline_mode = #tpu.pipeline_mode<synchronous>, transform_indices = @transform_7, window_bounds = array<i64: 12, 96>}, {pipeline_mode = #tpu.pipeline_mode<synchronous>, transform_indices = @transform_8, window_bounds = array<i64: 12, 1>}, {pipeline_mode = #tpu.pipeline_mode<synchronous>, transform_indices = @transform_9, window_bounds = array<i64: 96, 12>}, {pipeline_mode = #tpu.pipeline_mode<synchronous>, transform_indices = @transform_10, window_bounds = array<i64: 96, 1>}, {pipeline_mode = #tpu.pipeline_mode<synchronous>, transform_indices = @transform_11, window_bounds = array<i64: 1, 96>}, {pipeline_mode = #tpu.pipeline_mode<synchronous>, transform_indices = @transform_12, window_bounds = array<i64: 1, 1>}, {pipeline_mode = #tpu.pipeline_mode<synchronous>, transform_indices = @transform_13, window_bounds = array<i64: 96, 7>}, {pipeline_mode = #tpu.pipeline_mode<synchronous>, transform_indices = @transform_14, window_bounds = array<i64: 96, 1>}, {pipeline_mode = #tpu.pipeline_mode<synchronous>, transform_indices = @transform_15, window_bounds = array<i64: 64, 672>}, {pipeline_mode = #tpu.pipeline_mode<synchronous>, transform_indices = @transform_16, window_bounds = array<i64: 64, 1>}, {pipeline_mode = #tpu.pipeline_mode<synchronous>, transform_indices = @transform_17, window_bounds = array<i64: 32, 448>}, {pipeline_mode = #tpu.pipeline_mode<synchronous>, transform_indices = @transform_18, window_bounds = array<i64: 32, 1>}, {pipeline_mode = #tpu.pipeline_mode<synchronous>, transform_indices = @transform_19, window_bounds = array<i64: 1, 1>}, {pipeline_mode = #tpu.pipeline_mode<synchronous>, transform_indices = @transform_20, window_bounds = array<i64: 1, 1>}, {transform_indices = @transform_21, window_bounds = array<i64: 1, 32, 122>}]} {
    %c0 = arith.constant 0 : index
    %c0_0 = arith.constant 0 : index
    %c0_1 = arith.constant 0 : index
    %0 = vector.load %arg1[%c0, %c0_0, %c0_1] : memref<1x1x128xf32, #tpu.memory_space<vmem>>, vector<1x1x128xf32>
    %1 = vector.shape_cast %0 : vector<1x1x128xf32> to vector<1x128xf32>
    %c0_2 = arith.constant 0 : index
    %c0_3 = arith.constant 0 : index
    %2 = vector.load %arg2[%c0_2, %c0_3] : memref<32x7xf32, #tpu.memory_space<vmem>>, vector<32x7xf32>
    %c0_4 = arith.constant 0 : index
    %c0_5 = arith.constant 0 : index
    %3 = vector.load %arg3[%c0_4, %c0_5] : memref<32x1xf32, #tpu.memory_space<vmem>>, vector<32x1xf32>
    %cst = arith.constant 0.000000e+00 : f32
    %4 = vector.broadcast %cst : f32 to vector<32x122xf32>
    %5 = vector.extract_strided_slice %2 {offsets = [0, 0], sizes = [32, 1], strides = [1, 1]} : vector<32x7xf32> to vector<32x1xf32>
    %6 = vector.extract_strided_slice %1 {offsets = [0, 0], sizes = [1, 122], strides = [1, 1]} : vector<1x128xf32> to vector<1x122xf32>
    %7 = vector.broadcast %5 : vector<32x1xf32> to vector<32x122xf32>
    %8 = vector.broadcast %6 : vector<1x122xf32> to vector<32x122xf32>
    %9 = arith.mulf %7, %8 : vector<32x122xf32>
    %10 = arith.addf %4, %9 : vector<32x122xf32>
    %11 = vector.extract_strided_slice %2 {offsets = [0, 1], sizes = [32, 1], strides = [1, 1]} : vector<32x7xf32> to vector<32x1xf32>
    %12 = vector.extract_strided_slice %1 {offsets = [0, 1], sizes = [1, 122], strides = [1, 1]} : vector<1x128xf32> to vector<1x122xf32>
    %13 = vector.broadcast %11 : vector<32x1xf32> to vector<32x122xf32>
    %14 = vector.broadcast %12 : vector<1x122xf32> to vector<32x122xf32>
    %15 = arith.mulf %13, %14 : vector<32x122xf32>
    %16 = arith.addf %10, %15 : vector<32x122xf32>
    %17 = vector.extract_strided_slice %2 {offsets = [0, 2], sizes = [32, 1], strides = [1, 1]} : vector<32x7xf32> to vector<32x1xf32>
    %18 = vector.extract_strided_slice %1 {offsets = [0, 2], sizes = [1, 122], strides = [1, 1]} : vector<1x128xf32> to vector<1x122xf32>
    %19 = vector.broadcast %17 : vector<32x1xf32> to vector<32x122xf32>
    %20 = vector.broadcast %18 : vector<1x122xf32> to vector<32x122xf32>
    %21 = arith.mulf %19, %20 : vector<32x122xf32>
    %22 = arith.addf %16, %21 : vector<32x122xf32>
    %23 = vector.extract_strided_slice %2 {offsets = [0, 3], sizes = [32, 1], strides = [1, 1]} : vector<32x7xf32> to vector<32x1xf32>
    %24 = vector.extract_strided_slice %1 {offsets = [0, 3], sizes = [1, 122], strides = [1, 1]} : vector<1x128xf32> to vector<1x122xf32>
    %25 = vector.broadcast %23 : vector<32x1xf32> to vector<32x122xf32>
    %26 = vector.broadcast %24 : vector<1x122xf32> to vector<32x122xf32>
    %27 = arith.mulf %25, %26 : vector<32x122xf32>
    %28 = arith.addf %22, %27 : vector<32x122xf32>
    %29 = vector.extract_strided_slice %2 {offsets = [0, 4], sizes = [32, 1], strides = [1, 1]} : vector<32x7xf32> to vector<32x1xf32>
    %30 = vector.extract_strided_slice %1 {offsets = [0, 4], sizes = [1, 122], strides = [1, 1]} : vector<1x128xf32> to vector<1x122xf32>
    %31 = vector.broadcast %29 : vector<32x1xf32> to vector<32x122xf32>
    %32 = vector.broadcast %30 : vector<1x122xf32> to vector<32x122xf32>
    %33 = arith.mulf %31, %32 : vector<32x122xf32>
    %34 = arith.addf %28, %33 : vector<32x122xf32>
    %35 = vector.extract_strided_slice %2 {offsets = [0, 5], sizes = [32, 1], strides = [1, 1]} : vector<32x7xf32> to vector<32x1xf32>
    %36 = vector.extract_strided_slice %1 {offsets = [0, 5], sizes = [1, 122], strides = [1, 1]} : vector<1x128xf32> to vector<1x122xf32>
    %37 = vector.broadcast %35 : vector<32x1xf32> to vector<32x122xf32>
    %38 = vector.broadcast %36 : vector<1x122xf32> to vector<32x122xf32>
    %39 = arith.mulf %37, %38 : vector<32x122xf32>
    %40 = arith.addf %34, %39 : vector<32x122xf32>
    %41 = vector.extract_strided_slice %2 {offsets = [0, 6], sizes = [32, 1], strides = [1, 1]} : vector<32x7xf32> to vector<32x1xf32>
    %42 = vector.extract_strided_slice %1 {offsets = [0, 6], sizes = [1, 122], strides = [1, 1]} : vector<1x128xf32> to vector<1x122xf32>
    %43 = vector.broadcast %41 : vector<32x1xf32> to vector<32x122xf32>
    %44 = vector.broadcast %42 : vector<1x122xf32> to vector<32x122xf32>
    %45 = arith.mulf %43, %44 : vector<32x122xf32>
    %46 = arith.addf %40, %45 : vector<32x122xf32>
    %47 = vector.broadcast %3 : vector<32x1xf32> to vector<32x122xf32>
    %48 = arith.addf %46, %47 : vector<32x122xf32>
    %49 = math.tanh %48 : vector<32x122xf32>
    %50 = tpu.iota {dimensions = array<i32: 0>} : vector<122x61xi32>
    %51 = tpu.iota {dimensions = array<i32: 1>} : vector<122x61xi32>
    %c2_i32 = arith.constant 2 : i32
    %52 = vector.broadcast %c2_i32 : i32 to vector<122x61xi32>
    %53 = arith.muli %52, %51 : vector<122x61xi32>
    %54 = arith.cmpi eq, %50, %53 : vector<122x61xi32>
    %c2_i32_6 = arith.constant 2 : i32
    %55 = vector.broadcast %c2_i32_6 : i32 to vector<122x61xi32>
    %56 = arith.muli %55, %51 : vector<122x61xi32>
    %c1_i32 = arith.constant 1 : i32
    %57 = vector.broadcast %c1_i32 : i32 to vector<122x61xi32>
    %58 = arith.addi %56, %57 : vector<122x61xi32>
    %59 = arith.cmpi eq, %50, %58 : vector<122x61xi32>
    %60 = arith.ori %54, %59 : vector<122x61xi1>
    %cst_7 = arith.constant 5.000000e-01 : f32
    %cst_8 = arith.constant 0.000000e+00 : f32
    %61 = vector.broadcast %cst_7 : f32 to vector<122x61xf32>
    %62 = vector.broadcast %cst_8 : f32 to vector<122x61xf32>
    %63 = arith.select %60, %61, %62 : vector<122x61xi1>, vector<122x61xf32>
    %cst_9 = arith.constant dense<0.000000e+00> : vector<32x61xf32>
    %64 = tpu.matmul %49, %63, %cst_9 {dimension_numbers = #tpu.dot_dimension_numbers<[1], [0], [0], [1], [0, 0, 1, 1], [], []>} : vector<32x122xf32>, vector<122x61xf32>, vector<32x61xf32> -> vector<32x61xf32>
    %c0_10 = arith.constant 0 : index
    %c0_11 = arith.constant 0 : index
    %65 = vector.load %arg4[%c0_10, %c0_11] : memref<64x224xf32, #tpu.memory_space<vmem>>, vector<64x224xf32>
    %c0_12 = arith.constant 0 : index
    %c0_13 = arith.constant 0 : index
    %66 = vector.load %arg5[%c0_12, %c0_13] : memref<64x1xf32, #tpu.memory_space<vmem>>, vector<64x1xf32>
    %67 = vector.extract_strided_slice %64 {offsets = [0, 0], sizes = [32, 55], strides = [1, 1]} : vector<32x61xf32> to vector<32x55xf32>
    %68 = vector.extract_strided_slice %64 {offsets = [0, 1], sizes = [32, 55], strides = [1, 1]} : vector<32x61xf32> to vector<32x55xf32>
    %69 = vector.extract_strided_slice %64 {offsets = [0, 2], sizes = [32, 55], strides = [1, 1]} : vector<32x61xf32> to vector<32x55xf32>
    %70 = vector.extract_strided_slice %64 {offsets = [0, 3], sizes = [32, 55], strides = [1, 1]} : vector<32x61xf32> to vector<32x55xf32>
    %71 = vector.extract_strided_slice %64 {offsets = [0, 4], sizes = [32, 55], strides = [1, 1]} : vector<32x61xf32> to vector<32x55xf32>
    %72 = vector.extract_strided_slice %64 {offsets = [0, 5], sizes = [32, 55], strides = [1, 1]} : vector<32x61xf32> to vector<32x55xf32>
    %73 = vector.extract_strided_slice %64 {offsets = [0, 6], sizes = [32, 55], strides = [1, 1]} : vector<32x61xf32> to vector<32x55xf32>
    %74 = tpu.concatenate %67, %68, %69, %70, %71, %72, %73 in 0 : vector<32x55xf32>, vector<32x55xf32>, vector<32x55xf32>, vector<32x55xf32>, vector<32x55xf32>, vector<32x55xf32>, vector<32x55xf32> -> vector<224x55xf32>
    %cst_14 = arith.constant dense<0.000000e+00> : vector<64x55xf32>
    %75 = tpu.matmul %65, %74, %cst_14 {dimension_numbers = #tpu.dot_dimension_numbers<[1], [0], [0], [1], [0, 0, 1, 1], [], []>} : vector<64x224xf32>, vector<224x55xf32>, vector<64x55xf32> -> vector<64x55xf32>
    %76 = vector.broadcast %66 : vector<64x1xf32> to vector<64x55xf32>
    %77 = arith.addf %75, %76 : vector<64x55xf32>
    %78 = math.tanh %77 : vector<64x55xf32>
    %79 = tpu.iota {dimensions = array<i32: 0>} : vector<55x27xi32>
    %80 = tpu.iota {dimensions = array<i32: 1>} : vector<55x27xi32>
    %c2_i32_15 = arith.constant 2 : i32
    %81 = vector.broadcast %c2_i32_15 : i32 to vector<55x27xi32>
    %82 = arith.muli %81, %80 : vector<55x27xi32>
    %83 = arith.cmpi eq, %79, %82 : vector<55x27xi32>
    %c2_i32_16 = arith.constant 2 : i32
    %84 = vector.broadcast %c2_i32_16 : i32 to vector<55x27xi32>
    %85 = arith.muli %84, %80 : vector<55x27xi32>
    %c1_i32_17 = arith.constant 1 : i32
    %86 = vector.broadcast %c1_i32_17 : i32 to vector<55x27xi32>
    %87 = arith.addi %85, %86 : vector<55x27xi32>
    %88 = arith.cmpi eq, %79, %87 : vector<55x27xi32>
    %89 = arith.ori %83, %88 : vector<55x27xi1>
    %cst_18 = arith.constant 5.000000e-01 : f32
    %cst_19 = arith.constant 0.000000e+00 : f32
    %90 = vector.broadcast %cst_18 : f32 to vector<55x27xf32>
    %91 = vector.broadcast %cst_19 : f32 to vector<55x27xf32>
    %92 = arith.select %89, %90, %91 : vector<55x27xi1>, vector<55x27xf32>
    %cst_20 = arith.constant dense<0.000000e+00> : vector<64x27xf32>
    %93 = tpu.matmul %78, %92, %cst_20 {dimension_numbers = #tpu.dot_dimension_numbers<[1], [0], [0], [1], [0, 0, 1, 1], [], []>} : vector<64x55xf32>, vector<55x27xf32>, vector<64x27xf32> -> vector<64x27xf32>
    %c0_21 = arith.constant 0 : index
    %c0_22 = arith.constant 0 : index
    %94 = vector.load %arg6[%c0_21, %c0_22] : memref<96x448xf32, #tpu.memory_space<vmem>>, vector<96x448xf32>
    %c0_23 = arith.constant 0 : index
    %c0_24 = arith.constant 0 : index
    %95 = vector.load %arg7[%c0_23, %c0_24] : memref<96x1xf32, #tpu.memory_space<vmem>>, vector<96x1xf32>
    %96 = vector.extract_strided_slice %93 {offsets = [0, 0], sizes = [64, 21], strides = [1, 1]} : vector<64x27xf32> to vector<64x21xf32>
    %97 = vector.extract_strided_slice %93 {offsets = [0, 1], sizes = [64, 21], strides = [1, 1]} : vector<64x27xf32> to vector<64x21xf32>
    %98 = vector.extract_strided_slice %93 {offsets = [0, 2], sizes = [64, 21], strides = [1, 1]} : vector<64x27xf32> to vector<64x21xf32>
    %99 = vector.extract_strided_slice %93 {offsets = [0, 3], sizes = [64, 21], strides = [1, 1]} : vector<64x27xf32> to vector<64x21xf32>
    %100 = vector.extract_strided_slice %93 {offsets = [0, 4], sizes = [64, 21], strides = [1, 1]} : vector<64x27xf32> to vector<64x21xf32>
    %101 = vector.extract_strided_slice %93 {offsets = [0, 5], sizes = [64, 21], strides = [1, 1]} : vector<64x27xf32> to vector<64x21xf32>
    %102 = vector.extract_strided_slice %93 {offsets = [0, 6], sizes = [64, 21], strides = [1, 1]} : vector<64x27xf32> to vector<64x21xf32>
    %103 = tpu.concatenate %96, %97, %98, %99, %100, %101, %102 in 0 : vector<64x21xf32>, vector<64x21xf32>, vector<64x21xf32>, vector<64x21xf32>, vector<64x21xf32>, vector<64x21xf32>, vector<64x21xf32> -> vector<448x21xf32>
    %cst_25 = arith.constant dense<0.000000e+00> : vector<96x21xf32>
    %104 = tpu.matmul %94, %103, %cst_25 {dimension_numbers = #tpu.dot_dimension_numbers<[1], [0], [0], [1], [0, 0, 1, 1], [], []>} : vector<96x448xf32>, vector<448x21xf32>, vector<96x21xf32> -> vector<96x21xf32>
    %105 = vector.broadcast %95 : vector<96x1xf32> to vector<96x21xf32>
    %106 = arith.addf %104, %105 : vector<96x21xf32>
    %107 = math.tanh %106 : vector<96x21xf32>
    %cst_26 = arith.constant dense<0.000000e+00> : vector<96xf32>
    %108 = vector.multi_reduction <add>, %107, %cst_26 [1] : vector<96x21xf32> to vector<96xf32>
    %109 = vector.shape_cast %108 : vector<96xf32> to vector<96x1xf32>
    %cst_27 = arith.constant 0.0476190485 : f32
    %110 = vector.broadcast %cst_27 : f32 to vector<96x1xf32>
    %111 = arith.mulf %109, %110 : vector<96x1xf32>
    %c0_28 = arith.constant 0 : index
    %c0_29 = arith.constant 0 : index
    %112 = vector.load %arg8[%c0_28, %c0_29] : memref<12x96xf32, #tpu.memory_space<vmem>>, vector<12x96xf32>
    %cst_30 = arith.constant dense<0.000000e+00> : vector<12x1xf32>
    %113 = tpu.matmul %112, %111, %cst_30 {dimension_numbers = #tpu.dot_dimension_numbers<[1], [0], [0], [1], [0, 0, 1, 1], [], []>} : vector<12x96xf32>, vector<96x1xf32>, vector<12x1xf32> -> vector<12x1xf32>
    %c0_31 = arith.constant 0 : index
    %c0_32 = arith.constant 0 : index
    %114 = vector.load %arg9[%c0_31, %c0_32] : memref<12x1xf32, #tpu.memory_space<vmem>>, vector<12x1xf32>
    %115 = arith.addf %113, %114 : vector<12x1xf32>
    %cst_33 = arith.constant 0.000000e+00 : f32
    %116 = vector.broadcast %cst_33 : f32 to vector<12x1xf32>
    %117 = arith.maximumf %115, %116 : vector<12x1xf32>
    %c0_34 = arith.constant 0 : index
    %c0_35 = arith.constant 0 : index
    %118 = vector.load %arg10[%c0_34, %c0_35] : memref<96x12xf32, #tpu.memory_space<vmem>>, vector<96x12xf32>
    %cst_36 = arith.constant dense<0.000000e+00> : vector<96x1xf32>
    %119 = tpu.matmul %118, %117, %cst_36 {dimension_numbers = #tpu.dot_dimension_numbers<[1], [0], [0], [1], [0, 0, 1, 1], [], []>} : vector<96x12xf32>, vector<12x1xf32>, vector<96x1xf32> -> vector<96x1xf32>
    %c0_37 = arith.constant 0 : index
    %c0_38 = arith.constant 0 : index
    %120 = vector.load %arg11[%c0_37, %c0_38] : memref<96x1xf32, #tpu.memory_space<vmem>>, vector<96x1xf32>
    %121 = arith.addf %119, %120 : vector<96x1xf32>
    %122 = arith.negf %121 : vector<96x1xf32>
    %123 = math.exp %122 : vector<96x1xf32>
    %cst_39 = arith.constant 1.000000e+00 : f32
    %124 = vector.broadcast %cst_39 : f32 to vector<96x1xf32>
    %125 = arith.addf %124, %123 : vector<96x1xf32>
    %126 = arith.divf %124, %125 : vector<96x1xf32>
    %127 = vector.broadcast %126 : vector<96x1xf32> to vector<96x21xf32>
    %128 = arith.mulf %107, %127 : vector<96x21xf32>
    %129 = tpu.iota {dimensions = array<i32: 0>} : vector<21x10xi32>
    %130 = tpu.iota {dimensions = array<i32: 1>} : vector<21x10xi32>
    %c2_i32_40 = arith.constant 2 : i32
    %131 = vector.broadcast %c2_i32_40 : i32 to vector<21x10xi32>
    %132 = arith.muli %131, %130 : vector<21x10xi32>
    %133 = arith.cmpi eq, %129, %132 : vector<21x10xi32>
    %c2_i32_41 = arith.constant 2 : i32
    %134 = vector.broadcast %c2_i32_41 : i32 to vector<21x10xi32>
    %135 = arith.muli %134, %130 : vector<21x10xi32>
    %c1_i32_42 = arith.constant 1 : i32
    %136 = vector.broadcast %c1_i32_42 : i32 to vector<21x10xi32>
    %137 = arith.addi %135, %136 : vector<21x10xi32>
    %138 = arith.cmpi eq, %129, %137 : vector<21x10xi32>
    %139 = arith.ori %133, %138 : vector<21x10xi1>
    %cst_43 = arith.constant 5.000000e-01 : f32
    %cst_44 = arith.constant 0.000000e+00 : f32
    %140 = vector.broadcast %cst_43 : f32 to vector<21x10xf32>
    %141 = vector.broadcast %cst_44 : f32 to vector<21x10xf32>
    %142 = arith.select %139, %140, %141 : vector<21x10xi1>, vector<21x10xf32>
    %cst_45 = arith.constant dense<0.000000e+00> : vector<96x10xf32>
    %143 = tpu.matmul %128, %142, %cst_45 {dimension_numbers = #tpu.dot_dimension_numbers<[1], [0], [0], [1], [0, 0, 1, 1], [], []>} : vector<96x21xf32>, vector<21x10xf32>, vector<96x10xf32> -> vector<96x10xf32>
    %c0_46 = arith.constant 0 : index
    %c0_47 = arith.constant 0 : index
    %144 = vector.load %arg12[%c0_46, %c0_47] : memref<1x96xf32, #tpu.memory_space<vmem>>, vector<1x96xf32>
    %cst_48 = arith.constant dense<0.000000e+00> : vector<1x10xf32>
    %145 = tpu.matmul %144, %143, %cst_48 {dimension_numbers = #tpu.dot_dimension_numbers<[1], [0], [0], [1], [0, 0, 1, 1], [], []>} : vector<1x96xf32>, vector<96x10xf32>, vector<1x10xf32> -> vector<1x10xf32>
    %c0_49 = arith.constant 0 : index
    %c0_50 = arith.constant 0 : index
    %146 = vector.load %arg13[%c0_49, %c0_50] : memref<1x1xf32, #tpu.memory_space<vmem>>, vector<1x1xf32>
    %147 = vector.broadcast %146 : vector<1x1xf32> to vector<1x10xf32>
    %148 = arith.addf %145, %147 : vector<1x10xf32>
    %149 = math.tanh %148 : vector<1x10xf32>
    %150 = tpu.iota {dimensions = array<i32: 0>} : vector<10x32xi32>
    %151 = tpu.iota {dimensions = array<i32: 1>} : vector<10x32xi32>
    %c2_i32_51 = arith.constant 2 : i32
    %152 = vector.broadcast %c2_i32_51 : i32 to vector<10x32xi32>
    %153 = arith.muli %152, %150 : vector<10x32xi32>
    %c6_i32 = arith.constant 6 : i32
    %154 = vector.broadcast %c6_i32 : i32 to vector<10x32xi32>
    %155 = arith.addi %153, %154 : vector<10x32xi32>
    %156 = arith.cmpi eq, %151, %155 : vector<10x32xi32>
    %cst_52 = arith.constant 1.000000e+00 : f32
    %cst_53 = arith.constant 0.000000e+00 : f32
    %157 = vector.broadcast %cst_52 : f32 to vector<10x32xf32>
    %158 = vector.broadcast %cst_53 : f32 to vector<10x32xf32>
    %159 = arith.select %156, %157, %158 : vector<10x32xi1>, vector<10x32xf32>
    %cst_54 = arith.constant dense<0.000000e+00> : vector<1x32xf32>
    %160 = tpu.matmul %149, %159, %cst_54 {dimension_numbers = #tpu.dot_dimension_numbers<[1], [0], [0], [1], [0, 0, 1, 1], [], []>} : vector<1x10xf32>, vector<10x32xf32>, vector<1x32xf32> -> vector<1x32xf32>
    %c0_55 = arith.constant 0 : index
    %c0_56 = arith.constant 0 : index
    %161 = vector.load %arg14[%c0_55, %c0_56] : memref<96x7xf32, #tpu.memory_space<vmem>>, vector<96x7xf32>
    %c0_57 = arith.constant 0 : index
    %c0_58 = arith.constant 0 : index
    %162 = vector.load %arg15[%c0_57, %c0_58] : memref<96x1xf32, #tpu.memory_space<vmem>>, vector<96x1xf32>
    %cst_59 = arith.constant 0.000000e+00 : f32
    %163 = vector.broadcast %cst_59 : f32 to vector<96x26xf32>
    %164 = vector.extract_strided_slice %161 {offsets = [0, 0], sizes = [96, 1], strides = [1, 1]} : vector<96x7xf32> to vector<96x1xf32>
    %165 = vector.extract_strided_slice %160 {offsets = [0, 0], sizes = [1, 26], strides = [1, 1]} : vector<1x32xf32> to vector<1x26xf32>
    %166 = vector.broadcast %164 : vector<96x1xf32> to vector<96x26xf32>
    %167 = vector.broadcast %165 : vector<1x26xf32> to vector<96x26xf32>
    %168 = arith.mulf %166, %167 : vector<96x26xf32>
    %169 = arith.addf %163, %168 : vector<96x26xf32>
    %170 = vector.extract_strided_slice %161 {offsets = [0, 1], sizes = [96, 1], strides = [1, 1]} : vector<96x7xf32> to vector<96x1xf32>
    %171 = vector.extract_strided_slice %160 {offsets = [0, 1], sizes = [1, 26], strides = [1, 1]} : vector<1x32xf32> to vector<1x26xf32>
    %172 = vector.broadcast %170 : vector<96x1xf32> to vector<96x26xf32>
    %173 = vector.broadcast %171 : vector<1x26xf32> to vector<96x26xf32>
    %174 = arith.mulf %172, %173 : vector<96x26xf32>
    %175 = arith.addf %169, %174 : vector<96x26xf32>
    %176 = vector.extract_strided_slice %161 {offsets = [0, 2], sizes = [96, 1], strides = [1, 1]} : vector<96x7xf32> to vector<96x1xf32>
    %177 = vector.extract_strided_slice %160 {offsets = [0, 2], sizes = [1, 26], strides = [1, 1]} : vector<1x32xf32> to vector<1x26xf32>
    %178 = vector.broadcast %176 : vector<96x1xf32> to vector<96x26xf32>
    %179 = vector.broadcast %177 : vector<1x26xf32> to vector<96x26xf32>
    %180 = arith.mulf %178, %179 : vector<96x26xf32>
    %181 = arith.addf %175, %180 : vector<96x26xf32>
    %182 = vector.extract_strided_slice %161 {offsets = [0, 3], sizes = [96, 1], strides = [1, 1]} : vector<96x7xf32> to vector<96x1xf32>
    %183 = vector.extract_strided_slice %160 {offsets = [0, 3], sizes = [1, 26], strides = [1, 1]} : vector<1x32xf32> to vector<1x26xf32>
    %184 = vector.broadcast %182 : vector<96x1xf32> to vector<96x26xf32>
    %185 = vector.broadcast %183 : vector<1x26xf32> to vector<96x26xf32>
    %186 = arith.mulf %184, %185 : vector<96x26xf32>
    %187 = arith.addf %181, %186 : vector<96x26xf32>
    %188 = vector.extract_strided_slice %161 {offsets = [0, 4], sizes = [96, 1], strides = [1, 1]} : vector<96x7xf32> to vector<96x1xf32>
    %189 = vector.extract_strided_slice %160 {offsets = [0, 4], sizes = [1, 26], strides = [1, 1]} : vector<1x32xf32> to vector<1x26xf32>
    %190 = vector.broadcast %188 : vector<96x1xf32> to vector<96x26xf32>
    %191 = vector.broadcast %189 : vector<1x26xf32> to vector<96x26xf32>
    %192 = arith.mulf %190, %191 : vector<96x26xf32>
    %193 = arith.addf %187, %192 : vector<96x26xf32>
    %194 = vector.extract_strided_slice %161 {offsets = [0, 5], sizes = [96, 1], strides = [1, 1]} : vector<96x7xf32> to vector<96x1xf32>
    %195 = vector.extract_strided_slice %160 {offsets = [0, 5], sizes = [1, 26], strides = [1, 1]} : vector<1x32xf32> to vector<1x26xf32>
    %196 = vector.broadcast %194 : vector<96x1xf32> to vector<96x26xf32>
    %197 = vector.broadcast %195 : vector<1x26xf32> to vector<96x26xf32>
    %198 = arith.mulf %196, %197 : vector<96x26xf32>
    %199 = arith.addf %193, %198 : vector<96x26xf32>
    %200 = vector.extract_strided_slice %161 {offsets = [0, 6], sizes = [96, 1], strides = [1, 1]} : vector<96x7xf32> to vector<96x1xf32>
    %201 = vector.extract_strided_slice %160 {offsets = [0, 6], sizes = [1, 26], strides = [1, 1]} : vector<1x32xf32> to vector<1x26xf32>
    %202 = vector.broadcast %200 : vector<96x1xf32> to vector<96x26xf32>
    %203 = vector.broadcast %201 : vector<1x26xf32> to vector<96x26xf32>
    %204 = arith.mulf %202, %203 : vector<96x26xf32>
    %205 = arith.addf %199, %204 : vector<96x26xf32>
    %206 = vector.broadcast %162 : vector<96x1xf32> to vector<96x26xf32>
    %207 = arith.addf %205, %206 : vector<96x26xf32>
    %cst_60 = arith.constant dense<0.000000e+00> : vector<96xf32>
    %208 = vector.multi_reduction <add>, %207, %cst_60 [1] : vector<96x26xf32> to vector<96xf32>
    %209 = vector.shape_cast %208 : vector<96xf32> to vector<96x1xf32>
    %cst_61 = arith.constant 0.0384615399 : f32
    %210 = vector.broadcast %cst_61 : f32 to vector<96x1xf32>
    %211 = arith.mulf %209, %210 : vector<96x1xf32>
    %c0_62 = arith.constant 0 : index
    %c0_63 = arith.constant 0 : index
    %212 = vector.load %arg8[%c0_62, %c0_63] : memref<12x96xf32, #tpu.memory_space<vmem>>, vector<12x96xf32>
    %cst_64 = arith.constant dense<0.000000e+00> : vector<12x1xf32>
    %213 = tpu.matmul %212, %211, %cst_64 {dimension_numbers = #tpu.dot_dimension_numbers<[1], [0], [0], [1], [0, 0, 1, 1], [], []>} : vector<12x96xf32>, vector<96x1xf32>, vector<12x1xf32> -> vector<12x1xf32>
    %c0_65 = arith.constant 0 : index
    %c0_66 = arith.constant 0 : index
    %214 = vector.load %arg9[%c0_65, %c0_66] : memref<12x1xf32, #tpu.memory_space<vmem>>, vector<12x1xf32>
    %215 = arith.addf %213, %214 : vector<12x1xf32>
    %cst_67 = arith.constant 0.000000e+00 : f32
    %216 = vector.broadcast %cst_67 : f32 to vector<12x1xf32>
    %217 = arith.maximumf %215, %216 : vector<12x1xf32>
    %c0_68 = arith.constant 0 : index
    %c0_69 = arith.constant 0 : index
    %218 = vector.load %arg10[%c0_68, %c0_69] : memref<96x12xf32, #tpu.memory_space<vmem>>, vector<96x12xf32>
    %cst_70 = arith.constant dense<0.000000e+00> : vector<96x1xf32>
    %219 = tpu.matmul %218, %217, %cst_70 {dimension_numbers = #tpu.dot_dimension_numbers<[1], [0], [0], [1], [0, 0, 1, 1], [], []>} : vector<96x12xf32>, vector<12x1xf32>, vector<96x1xf32> -> vector<96x1xf32>
    %c0_71 = arith.constant 0 : index
    %c0_72 = arith.constant 0 : index
    %220 = vector.load %arg11[%c0_71, %c0_72] : memref<96x1xf32, #tpu.memory_space<vmem>>, vector<96x1xf32>
    %221 = arith.addf %219, %220 : vector<96x1xf32>
    %222 = arith.negf %221 : vector<96x1xf32>
    %223 = math.exp %222 : vector<96x1xf32>
    %cst_73 = arith.constant 1.000000e+00 : f32
    %224 = vector.broadcast %cst_73 : f32 to vector<96x1xf32>
    %225 = arith.addf %224, %223 : vector<96x1xf32>
    %226 = arith.divf %224, %225 : vector<96x1xf32>
    %227 = vector.broadcast %226 : vector<96x1xf32> to vector<96x26xf32>
    %228 = arith.mulf %207, %227 : vector<96x26xf32>
    %229 = math.tanh %228 : vector<96x26xf32>
    %230 = tpu.iota {dimensions = array<i32: 0>} : vector<26x64xi32>
    %231 = tpu.iota {dimensions = array<i32: 1>} : vector<26x64xi32>
    %c2_i32_74 = arith.constant 2 : i32
    %232 = vector.broadcast %c2_i32_74 : i32 to vector<26x64xi32>
    %233 = arith.muli %232, %230 : vector<26x64xi32>
    %c6_i32_75 = arith.constant 6 : i32
    %234 = vector.broadcast %c6_i32_75 : i32 to vector<26x64xi32>
    %235 = arith.addi %233, %234 : vector<26x64xi32>
    %236 = arith.cmpi eq, %231, %235 : vector<26x64xi32>
    %cst_76 = arith.constant 1.000000e+00 : f32
    %cst_77 = arith.constant 0.000000e+00 : f32
    %237 = vector.broadcast %cst_76 : f32 to vector<26x64xf32>
    %238 = vector.broadcast %cst_77 : f32 to vector<26x64xf32>
    %239 = arith.select %236, %237, %238 : vector<26x64xi1>, vector<26x64xf32>
    %cst_78 = arith.constant dense<0.000000e+00> : vector<96x64xf32>
    %240 = tpu.matmul %229, %239, %cst_78 {dimension_numbers = #tpu.dot_dimension_numbers<[1], [0], [0], [1], [0, 0, 1, 1], [], []>} : vector<96x26xf32>, vector<26x64xf32>, vector<96x64xf32> -> vector<96x64xf32>
    %c0_79 = arith.constant 0 : index
    %c0_80 = arith.constant 0 : index
    %241 = vector.load %arg16[%c0_79, %c0_80] : memref<64x672xf32, #tpu.memory_space<vmem>>, vector<64x672xf32>
    %c0_81 = arith.constant 0 : index
    %c0_82 = arith.constant 0 : index
    %242 = vector.load %arg17[%c0_81, %c0_82] : memref<64x1xf32, #tpu.memory_space<vmem>>, vector<64x1xf32>
    %243 = vector.extract_strided_slice %240 {offsets = [0, 0], sizes = [96, 58], strides = [1, 1]} : vector<96x64xf32> to vector<96x58xf32>
    %244 = vector.extract_strided_slice %240 {offsets = [0, 1], sizes = [96, 58], strides = [1, 1]} : vector<96x64xf32> to vector<96x58xf32>
    %245 = vector.extract_strided_slice %240 {offsets = [0, 2], sizes = [96, 58], strides = [1, 1]} : vector<96x64xf32> to vector<96x58xf32>
    %246 = vector.extract_strided_slice %240 {offsets = [0, 3], sizes = [96, 58], strides = [1, 1]} : vector<96x64xf32> to vector<96x58xf32>
    %247 = vector.extract_strided_slice %240 {offsets = [0, 4], sizes = [96, 58], strides = [1, 1]} : vector<96x64xf32> to vector<96x58xf32>
    %248 = vector.extract_strided_slice %240 {offsets = [0, 5], sizes = [96, 58], strides = [1, 1]} : vector<96x64xf32> to vector<96x58xf32>
    %249 = vector.extract_strided_slice %240 {offsets = [0, 6], sizes = [96, 58], strides = [1, 1]} : vector<96x64xf32> to vector<96x58xf32>
    %250 = tpu.concatenate %243, %244, %245, %246, %247, %248, %249 in 0 : vector<96x58xf32>, vector<96x58xf32>, vector<96x58xf32>, vector<96x58xf32>, vector<96x58xf32>, vector<96x58xf32>, vector<96x58xf32> -> vector<672x58xf32>
    %cst_83 = arith.constant dense<0.000000e+00> : vector<64x58xf32>
    %251 = tpu.matmul %241, %250, %cst_83 {dimension_numbers = #tpu.dot_dimension_numbers<[1], [0], [0], [1], [0, 0, 1, 1], [], []>} : vector<64x672xf32>, vector<672x58xf32>, vector<64x58xf32> -> vector<64x58xf32>
    %252 = vector.broadcast %242 : vector<64x1xf32> to vector<64x58xf32>
    %253 = arith.addf %251, %252 : vector<64x58xf32>
    %254 = math.tanh %253 : vector<64x58xf32>
    %255 = tpu.iota {dimensions = array<i32: 0>} : vector<58x128xi32>
    %256 = tpu.iota {dimensions = array<i32: 1>} : vector<58x128xi32>
    %c2_i32_84 = arith.constant 2 : i32
    %257 = vector.broadcast %c2_i32_84 : i32 to vector<58x128xi32>
    %258 = arith.muli %257, %255 : vector<58x128xi32>
    %c6_i32_85 = arith.constant 6 : i32
    %259 = vector.broadcast %c6_i32_85 : i32 to vector<58x128xi32>
    %260 = arith.addi %258, %259 : vector<58x128xi32>
    %261 = arith.cmpi eq, %256, %260 : vector<58x128xi32>
    %cst_86 = arith.constant 1.000000e+00 : f32
    %cst_87 = arith.constant 0.000000e+00 : f32
    %262 = vector.broadcast %cst_86 : f32 to vector<58x128xf32>
    %263 = vector.broadcast %cst_87 : f32 to vector<58x128xf32>
    %264 = arith.select %261, %262, %263 : vector<58x128xi1>, vector<58x128xf32>
    %cst_88 = arith.constant dense<0.000000e+00> : vector<64x128xf32>
    %265 = tpu.matmul %254, %264, %cst_88 {dimension_numbers = #tpu.dot_dimension_numbers<[1], [0], [0], [1], [0, 0, 1, 1], [], []>} : vector<64x58xf32>, vector<58x128xf32>, vector<64x128xf32> -> vector<64x128xf32>
    %c0_89 = arith.constant 0 : index
    %c0_90 = arith.constant 0 : index
    %266 = vector.load %arg18[%c0_89, %c0_90] : memref<32x448xf32, #tpu.memory_space<vmem>>, vector<32x448xf32>
    %c0_91 = arith.constant 0 : index
    %c0_92 = arith.constant 0 : index
    %267 = vector.load %arg19[%c0_91, %c0_92] : memref<32x1xf32, #tpu.memory_space<vmem>>, vector<32x1xf32>
    %268 = vector.extract_strided_slice %265 {offsets = [0, 0], sizes = [64, 122], strides = [1, 1]} : vector<64x128xf32> to vector<64x122xf32>
    %269 = vector.extract_strided_slice %265 {offsets = [0, 1], sizes = [64, 122], strides = [1, 1]} : vector<64x128xf32> to vector<64x122xf32>
    %270 = vector.extract_strided_slice %265 {offsets = [0, 2], sizes = [64, 122], strides = [1, 1]} : vector<64x128xf32> to vector<64x122xf32>
    %271 = vector.extract_strided_slice %265 {offsets = [0, 3], sizes = [64, 122], strides = [1, 1]} : vector<64x128xf32> to vector<64x122xf32>
    %272 = vector.extract_strided_slice %265 {offsets = [0, 4], sizes = [64, 122], strides = [1, 1]} : vector<64x128xf32> to vector<64x122xf32>
    %273 = vector.extract_strided_slice %265 {offsets = [0, 5], sizes = [64, 122], strides = [1, 1]} : vector<64x128xf32> to vector<64x122xf32>
    %274 = vector.extract_strided_slice %265 {offsets = [0, 6], sizes = [64, 122], strides = [1, 1]} : vector<64x128xf32> to vector<64x122xf32>
    %275 = tpu.concatenate %268, %269, %270, %271, %272, %273, %274 in 0 : vector<64x122xf32>, vector<64x122xf32>, vector<64x122xf32>, vector<64x122xf32>, vector<64x122xf32>, vector<64x122xf32>, vector<64x122xf32> -> vector<448x122xf32>
    %cst_93 = arith.constant dense<0.000000e+00> : vector<32x122xf32>
    %276 = tpu.matmul %266, %275, %cst_93 {dimension_numbers = #tpu.dot_dimension_numbers<[1], [0], [0], [1], [0, 0, 1, 1], [], []>} : vector<32x448xf32>, vector<448x122xf32>, vector<32x122xf32> -> vector<32x122xf32>
    %277 = vector.broadcast %267 : vector<32x1xf32> to vector<32x122xf32>
    %278 = arith.addf %276, %277 : vector<32x122xf32>
    %279 = math.tanh %278 : vector<32x122xf32>
    %c0_94 = arith.constant 0 : index
    %c0_95 = arith.constant 0 : index
    %280 = vector.load %arg20[%c0_94, %c0_95] : memref<1x1xf32, #tpu.memory_space<vmem>>, vector<1x1xf32>
    %281 = vector.broadcast %280 : vector<1x1xf32> to vector<32x122xf32>
    %282 = arith.mulf %279, %281 : vector<32x122xf32>
    %c0_96 = arith.constant 0 : index
    %c0_97 = arith.constant 0 : index
    %283 = vector.load %arg21[%c0_96, %c0_97] : memref<1x1xf32, #tpu.memory_space<vmem>>, vector<1x1xf32>
    %284 = vector.broadcast %283 : vector<1x1xf32> to vector<32x122xf32>
    %285 = arith.addf %282, %284 : vector<32x122xf32>
    %286 = math.tanh %285 : vector<32x122xf32>
    %c0_98 = arith.constant 0 : index
    %c0_99 = arith.constant 0 : index
    %c0_100 = arith.constant 0 : index
    %287 = vector.load %arg22[%c0_98, %c0_99, %c0_100] : memref<1x32x122xf32, #tpu.memory_space<vmem>>, vector<1x32x122xf32>
    %288 = vector.shape_cast %287 : vector<1x32x122xf32> to vector<32x122xf32>
    %289 = vector.shape_cast %286 : vector<32x122xf32> to vector<1x32x122xf32>
    tpu.vector_store %arg22[%c0_98, %c0_99, %c0_100], %289 {strides = array<i32>} : memref<1x32x122xf32, #tpu.memory_space<vmem>>, vector<1x32x122xf32>,
    return
  }
  func.func @transform_0(%arg0: i32) -> (i32, i32, i32) {
    %c0_i32 = arith.constant 0 : i32
    %c0_i32_0 = arith.constant 0 : i32
    %c0_i32_1 = arith.constant 0 : i32
    return %arg0, %c0_i32, %c0_i32_0 : i32, i32, i32
  }
  func.func @transform_1(%arg0: i32) -> (i32, i32) {
    %c0_i32 = arith.constant 0 : i32
    %c0_i32_0 = arith.constant 0 : i32
    %c0_i32_1 = arith.constant 0 : i32
    return %c0_i32, %c0_i32_0 : i32, i32
  }
  func.func @transform_2(%arg0: i32) -> (i32, i32) {
    %c0_i32 = arith.constant 0 : i32
    %c0_i32_0 = arith.constant 0 : i32
    %c0_i32_1 = arith.constant 0 : i32
    return %c0_i32, %c0_i32_0 : i32, i32
  }
  func.func @transform_3(%arg0: i32) -> (i32, i32) {
    %c0_i32 = arith.constant 0 : i32
    %c0_i32_0 = arith.constant 0 : i32
    %c0_i32_1 = arith.constant 0 : i32
    return %c0_i32, %c0_i32_0 : i32, i32
  }
  func.func @transform_4(%arg0: i32) -> (i32, i32) {
    %c0_i32 = arith.constant 0 : i32
    %c0_i32_0 = arith.constant 0 : i32
    %c0_i32_1 = arith.constant 0 : i32
    return %c0_i32, %c0_i32_0 : i32, i32
  }
  func.func @transform_5(%arg0: i32) -> (i32, i32) {
    %c0_i32 = arith.constant 0 : i32
    %c0_i32_0 = arith.constant 0 : i32
    %c0_i32_1 = arith.constant 0 : i32
    return %c0_i32, %c0_i32_0 : i32, i32
  }
  func.func @transform_6(%arg0: i32) -> (i32, i32) {
    %c0_i32 = arith.constant 0 : i32
    %c0_i32_0 = arith.constant 0 : i32
    %c0_i32_1 = arith.constant 0 : i32
    return %c0_i32, %c0_i32_0 : i32, i32
  }
  func.func @transform_7(%arg0: i32) -> (i32, i32) {
    %c0_i32 = arith.constant 0 : i32
    %c0_i32_0 = arith.constant 0 : i32
    %c0_i32_1 = arith.constant 0 : i32
    return %c0_i32, %c0_i32_0 : i32, i32
  }
  func.func @transform_8(%arg0: i32) -> (i32, i32) {
    %c0_i32 = arith.constant 0 : i32
    %c0_i32_0 = arith.constant 0 : i32
    %c0_i32_1 = arith.constant 0 : i32
    return %c0_i32, %c0_i32_0 : i32, i32
  }
  func.func @transform_9(%arg0: i32) -> (i32, i32) {
    %c0_i32 = arith.constant 0 : i32
    %c0_i32_0 = arith.constant 0 : i32
    %c0_i32_1 = arith.constant 0 : i32
    return %c0_i32, %c0_i32_0 : i32, i32
  }
  func.func @transform_10(%arg0: i32) -> (i32, i32) {
    %c0_i32 = arith.constant 0 : i32
    %c0_i32_0 = arith.constant 0 : i32
    %c0_i32_1 = arith.constant 0 : i32
    return %c0_i32, %c0_i32_0 : i32, i32
  }
  func.func @transform_11(%arg0: i32) -> (i32, i32) {
    %c0_i32 = arith.constant 0 : i32
    %c0_i32_0 = arith.constant 0 : i32
    %c0_i32_1 = arith.constant 0 : i32
    return %c0_i32, %c0_i32_0 : i32, i32
  }
  func.func @transform_12(%arg0: i32) -> (i32, i32) {
    %c0_i32 = arith.constant 0 : i32
    %c0_i32_0 = arith.constant 0 : i32
    %c0_i32_1 = arith.constant 0 : i32
    return %c0_i32, %c0_i32_0 : i32, i32
  }
  func.func @transform_13(%arg0: i32) -> (i32, i32) {
    %c0_i32 = arith.constant 0 : i32
    %c0_i32_0 = arith.constant 0 : i32
    %c0_i32_1 = arith.constant 0 : i32
    return %c0_i32, %c0_i32_0 : i32, i32
  }
  func.func @transform_14(%arg0: i32) -> (i32, i32) {
    %c0_i32 = arith.constant 0 : i32
    %c0_i32_0 = arith.constant 0 : i32
    %c0_i32_1 = arith.constant 0 : i32
    return %c0_i32, %c0_i32_0 : i32, i32
  }
  func.func @transform_15(%arg0: i32) -> (i32, i32) {
    %c0_i32 = arith.constant 0 : i32
    %c0_i32_0 = arith.constant 0 : i32
    %c0_i32_1 = arith.constant 0 : i32
    return %c0_i32, %c0_i32_0 : i32, i32
  }
  func.func @transform_16(%arg0: i32) -> (i32, i32) {
    %c0_i32 = arith.constant 0 : i32
    %c0_i32_0 = arith.constant 0 : i32
    %c0_i32_1 = arith.constant 0 : i32
    return %c0_i32, %c0_i32_0 : i32, i32
  }
  func.func @transform_17(%arg0: i32) -> (i32, i32) {
    %c0_i32 = arith.constant 0 : i32
    %c0_i32_0 = arith.constant 0 : i32
    %c0_i32_1 = arith.constant 0 : i32
    return %c0_i32, %c0_i32_0 : i32, i32
  }
  func.func @transform_18(%arg0: i32) -> (i32, i32) {
    %c0_i32 = arith.constant 0 : i32
    %c0_i32_0 = arith.constant 0 : i32
    %c0_i32_1 = arith.constant 0 : i32
    return %c0_i32, %c0_i32_0 : i32, i32
  }
  func.func @transform_19(%arg0: i32) -> (i32, i32) {
    %c0_i32 = arith.constant 0 : i32
    %c0_i32_0 = arith.constant 0 : i32
    %c0_i32_1 = arith.constant 0 : i32
    return %c0_i32, %c0_i32_0 : i32, i32
  }
  func.func @transform_20(%arg0: i32) -> (i32, i32) {
    %c0_i32 = arith.constant 0 : i32
    %c0_i32_0 = arith.constant 0 : i32
    %c0_i32_1 = arith.constant 0 : i32
    return %c0_i32, %c0_i32_0 : i32, i32
  }
  func.func @transform_21(%arg0: i32) -> (i32, i32, i32) {
    %c0_i32 = arith.constant 0 : i32
    %c0_i32_0 = arith.constant 0 : i32
    %c0_i32_1 = arith.constant 0 : i32
    return %arg0, %c0_i32, %c0_i32_0 : i32, i32, i32
  }
}

</mosaic_0001>

<llo_original>
// kernel: autoencoder_forward.1
$region0: #{autoencoder_forward.1}
  #allocation0 [shape = 'u32[]', space=smem, size = 0x4, offset = 0x4, fixed_abs, tag = 'smem constant byte address 0x4 - core index']
  #allocation1 [shape = 'u32[72,128]{1,0:T(1,128)}', space=vmem, size = 0x9000, scoped, tag = 'internal scratch']
  #allocation2 [shape = 'f32[1,1]{1,0:T(1,128)S(1)}', space=vmem, size = 0x200, scoped, tag = 'scoped memory for autoencoder_forward.1']
  #allocation3 [shape = 'f32[1,1]{1,0:T(1,128)S(1)}', space=vmem, size = 0x200, scoped, tag = 'scoped memory for autoencoder_forward.1']
  #allocation4 [shape = 'f32[1,1]{1,0:T(1,128)S(1)}', space=vmem, size = 0x200, scoped, tag = 'scoped memory for autoencoder_forward.1']
  %s0 = inlined_call_operand.hbm [shape: f32[2,1,128], index: 0, kind: input, shape index: {}]
  %s1 = inlined_call_operand.vmem [shape: f32[32,7], index: 1, kind: input, shape index: {}]
  %s2 = inlined_call_operand.vmem [shape: f32[32,1], index: 2, kind: input, shape index: {}]
  %s3 = inlined_call_operand.hbm [shape: f32[64,224], index: 3, kind: input, shape index: {}]
  %s4 = inlined_call_operand.vmem [shape: f32[64,1], index: 4, kind: input, shape index: {}]
  %s5 = inlined_call_operand.vmem [shape: f32[96,448], index: 5, kind: input, shape index: {}]
  %s6 = inlined_call_operand.vmem [shape: f32[96,1], index: 6, kind: input, shape index: {}]
  %s7 = inlined_call_operand.hbm [shape: f32[12,96], index: 7, kind: input, shape index: {}]
  %s8 = inlined_call_operand.vmem [shape: f32[12,1], index: 8, kind: input, shape index: {}]
  %s9 = inlined_call_operand.vmem [shape: f32[96,12], index: 9, kind: input, shape index: {}]
  %s10 = inlined_call_operand.vmem [shape: f32[96,1], index: 10, kind: input, shape index: {}]
  %s11 = inlined_call_operand.vmem [shape: f32[1,96], index: 11, kind: input, shape index: {}]
  %s12 = inlined_call_operand.<no memory space> [shape: f32[1,1], index: 12, kind: input, shape index: {}]
  %s13 = inlined_call_operand.vmem [shape: f32[96,7], index: 13, kind: input, shape index: {}]
  %s14 = inlined_call_operand.vmem [shape: f32[96,1], index: 14, kind: input, shape index: {}]
  %s15 = inlined_call_operand.vmem [shape: f32[64,672], index: 15, kind: input, shape index: {}]
  %s16 = inlined_call_operand.vmem [shape: f32[64,1], index: 16, kind: input, shape index: {}]
  %s17 = inlined_call_operand.hbm [shape: f32[32,448], index: 17, kind: input, shape index: {}]
  %s18 = inlined_call_operand.vmem [shape: f32[32,1], index: 18, kind: input, shape index: {}]
  %s19 = inlined_call_operand.<no memory space> [shape: f32[1,1], index: 19, kind: input, shape index: {}]
  %s20 = inlined_call_operand.<no memory space> [shape: f32[1,1], index: 20, kind: input, shape index: {}]
  %s21 = inlined_call_operand.hbm [shape: f32[2,32,122], index: 21, kind: output, shape index: {}]
  %s22 = sld [smem:[#allocation0]]
  $region133: #{autoencoder_forward.1} parent=0
    _
  %s24 = ssub.s32 1, %s22
  %s25 = scalar_select 0, %s24, %s22
  %v26 = vstv %s12
  %27 = vst [vmem:[#allocation2] sm:$0x1] %v26
  %v28 = vstv %s19
  %29 = vst [vmem:[#allocation3] sm:$0x1] %v28
  %v30 = vstv %s20
  %31 = vst [vmem:[#allocation4] sm:$0x1] %v30
  $region1: #{autoencoder_forward.1} parent=0
    #allocation5 [shape = 'u8[1024]{0}', space=vmem, size = 0x400, scoped, tag = 'input window, operand 0']
    #allocation6 [shape = 's32[2]{0}', space=sflag, size = 0x8, scoped, tag = 'scoped memory for autoencoder_forward.1']
    #allocation7 [shape = 's32[2]{0}', space=sflag, size = 0x8, scoped, tag = 'scoped memory for autoencoder_forward.1']
    #allocation8 [shape = 'u8[65536]{0}', space=vmem, size = 0x10000, scoped, tag = 'input window, operand 3, single buffered']
    #allocation9 [shape = 's32[1]{0}', space=sflag, size = 0x4, scoped, tag = 'scoped memory for autoencoder_forward.1']
    #allocation10 [shape = 'u8[8192]{0}', space=vmem, size = 0x2000, scoped, tag = 'input window, operand 7, single buffered']
    #allocation11 [shape = 'u8[65536]{0}', space=vmem, size = 0x10000, scoped, tag = 'input window, operand 17, single buffered']
    #allocation12 [shape = 's32[1]{0}', space=sflag, size = 0x4, scoped, tag = 'scoped memory for autoencoder_forward.1']
    #allocation13 [shape = 'u8[32768]{0}', space=vmem, size = 0x8000, scoped, tag = 'output window, operand 0']
    %32 = vsyncpa [#allocation6], 0
    %s33 = scalar_lea.sflag [#allocation6], 1
    %34 = vsyncpa %s33, 0
    %35 = vsyncpa [#allocation9], 0
    %36 = vsyncpa [#allocation12], 0
    %37 = vsyncpa [#allocation7], 0
    %s38 = scalar_lea.sflag [#allocation7], 1
    %39 = vsyncpa %s38, 0
    loop: start=0, step=1, limit=4
    $region2: #{autoencoder_forward.1} parent=1 // loop_pre_header
      _
    $region3: #{autoencoder_forward.1} parent=1 // loop_header
      %s41 = sphi 0, %s45
      %p42 = scmp.ge.s32.totalorder %s41, 4
      %s51 = sphi 0, %s53
      %s54 = sphi 0, %s51
      %s55 = sphi 0, %s54
      %s71 = sphi 0, %s55
      %s75 = sphi 0, %s75
      %s77 = sphi 0, %s75
      %s78 = sphi 0, %s77
      %s92 = sphi 0, %s78
      %s96 = sphi 0, %s96
      %s98 = sphi 0, %s96
      %s99 = sphi 0, %s98
      %s113 = sphi 0, %s99
      %s117 = sphi 0, %s117
      %s119 = sphi 0, %s117
      %s120 = sphi 0, %s119
      %s134 = sphi 0, %s120
      %s138 = sphi 0, %s138
      %s140 = sphi 0, %s138
      %s141 = sphi 0, %s140
      %s155 = sphi 0, %s141
      %s159 = sphi 0, %s159
      %s161 = sphi 0, %s159
      %s162 = sphi 0, %s161
      %s176 = sphi 0, %s162
      %s180 = sphi 0, %s180
      %s182 = sphi 0, %s180
      %s183 = sphi 0, %s182
      %s197 = sphi 0, %s183
      %s201 = sphi 0, %s201
      %s203 = sphi 0, %s201
      %s204 = sphi 0, %s203
      %s218 = sphi 0, %s204
      %s222 = sphi 0, %s222
      %s224 = sphi 0, %s222
      %s225 = sphi 0, %s224
      %s239 = sphi 0, %s225
      %s243 = sphi 0, %s243
      %s245 = sphi 0, %s243
      %s246 = sphi 0, %s245
      %s260 = sphi 0, %s246
      %s264 = sphi 0, %s264
      %s266 = sphi 0, %s264
      %s267 = sphi 0, %s266
      %s281 = sphi 0, %s267
      %s285 = sphi 0, %s285
      %s287 = sphi 0, %s285
      %s288 = sphi 0, %s287
      %s302 = sphi 0, %s288
      %s306 = sphi 0, %s306
      %s308 = sphi 0, %s306
      %s309 = sphi 0, %s308
      %s323 = sphi 0, %s309
      %s327 = sphi 0, %s327
      %s329 = sphi 0, %s327
      %s330 = sphi 0, %s329
      %s344 = sphi 0, %s330
      %s348 = sphi 0, %s348
      %s350 = sphi 0, %s348
      %s351 = sphi 0, %s350
      %s365 = sphi 0, %s351
      %s369 = sphi 0, %s369
      %s371 = sphi 0, %s369
      %s372 = sphi 0, %s371
      %s386 = sphi 0, %s372
      %s390 = sphi 0, %s390
      %s392 = sphi 0, %s390
      %s393 = sphi 0, %s392
      %s407 = sphi 0, %s393
      %s411 = sphi 0, %s411
      %s413 = sphi 0, %s411
      %s414 = sphi 0, %s413
      %s428 = sphi 0, %s414
      %s432 = sphi 0, %s432
      %s434 = sphi 0, %s432
      %s435 = sphi 0, %s434
      %s449 = sphi 0, %s435
      %s453 = sphi 0, %s453
      %s455 = sphi 0, %s453
      %s456 = sphi 0, %s455
      %s470 = sphi 0, %s456
      %s474 = sphi 0, %s474
      %s476 = sphi 0, %s474
      %s477 = sphi 0, %s476
      %s491 = sphi 0, %s477
      %s497 = sphi 0, %s499
      %s500 = sphi 0, %s497
      %s501 = sphi 0, %s500
      %s517 = sphi 0, %s501
    $region4: #{autoencoder_forward.1} parent=1 // loop_header_branch
      %44 = sbr.rel (%p42) target = $region8
    $region5: #{autoencoder_forward.1} parent=1 // loop_body
      %s46 = ssub.s32 %s41, 1
      %s47 = ssub.s32 %s41, 2
      %s48 = sadd.s32 %s41, 1
      %s49 = ssub.s32 %s41, %s48
      %p50 = scmp.eq.s32.totalorder %s49, 0
      %s52 = sadd.s32 %s51, 1
      %s53 = scalar_select %p50, %s51, %s52
      %p56 = pneg %p50
      %p57 = scmp.eq.s32.totalorder %s41, 1
      %p58 = por %p56, %p57
      %p59 = scmp.ne.s32.totalorder %s51, %s54
      %p60 = scmp.eq.s32.totalorder %s41, 0
      %p61 = por %p59, %p60
      %p62 = scmp.ne.s32.totalorder %s51, %s54
      %p63 = scmp.eq.s32.totalorder %s46, 1
      %p64 = por %p62, %p63
      %p65 = scmp.ne.s32.totalorder %s54, %s55
      %p66 = scmp.eq.s32.totalorder %s46, 0
      %p67 = por %p65, %p66
      %p68 = scmp.ne.s32.totalorder %s54, %s55
      %p69 = scmp.eq.s32.totalorder %s47, 1
      %p70 = por %p68, %p69
      %p72 = scmp.ne.s32.totalorder %s55, %s71
      %p73 = scmp.eq.s32.totalorder %s47, 0
      %p74 = por %p72, %p73
      %s76 = sadd.s32 %s75, 1
      %p79 = scmp.eq.s32.totalorder %s41, 1
      %p80 = scmp.ne.s32.totalorder %s75, %s77
      %p81 = scmp.eq.s32.totalorder %s41, 0
      %p82 = por %p80, %p81
      %p83 = scmp.ne.s32.totalorder %s75, %s77
      %p84 = scmp.eq.s32.totalorder %s46, 1
      %p85 = por %p83, %p84
      %p86 = scmp.ne.s32.totalorder %s77, %s78
      %p87 = scmp.eq.s32.totalorder %s46, 0
      %p88 = por %p86, %p87
      %p89 = scmp.ne.s32.totalorder %s77, %s78
      %p90 = scmp.eq.s32.totalorder %s47, 1
      %p91 = por %p89, %p90
      %p93 = scmp.ne.s32.totalorder %s78, %s92
      %p94 = scmp.eq.s32.totalorder %s47, 0
      %p95 = por %p93, %p94
      %s97 = sadd.s32 %s96, 1
      %p100 = scmp.eq.s32.totalorder %s41, 1
      %p101 = scmp.ne.s32.totalorder %s96, %s98
      %p102 = scmp.eq.s32.totalorder %s41, 0
      %p103 = por %p101, %p102
      %p104 = scmp.ne.s32.totalorder %s96, %s98
      %p105 = scmp.eq.s32.totalorder %s46, 1
      %p106 = por %p104, %p105
      %p107 = scmp.ne.s32.totalorder %s98, %s99
      %p108 = scmp.eq.s32.totalorder %s46, 0
      %p109 = por %p107, %p108
      %p110 = scmp.ne.s32.totalorder %s98, %s99
      %p111 = scmp.eq.s32.totalorder %s47, 1
      %p112 = por %p110, %p111
      %p114 = scmp.ne.s32.totalorder %s99, %s113
      %p115 = scmp.eq.s32.totalorder %s47, 0
      %p116 = por %p114, %p115
      %s118 = sadd.s32 %s117, 1
      %p121 = scmp.eq.s32.totalorder %s41, 1
      %p122 = scmp.ne.s32.totalorder %s117, %s119
      %p123 = scmp.eq.s32.totalorder %s41, 0
      %p124 = por %p122, %p123
      %p125 = scmp.ne.s32.totalorder %s117, %s119
      %p126 = scmp.eq.s32.totalorder %s46, 1
      %p127 = por %p125, %p126
      %p128 = scmp.ne.s32.totalorder %s119, %s120
      %p129 = scmp.eq.s32.totalorder %s46, 0
      %p130 = por %p128, %p129
      %p131 = scmp.ne.s32.totalorder %s119, %s120
      %p132 = scmp.eq.s32.totalorder %s47, 1
      %p133 = por %p131, %p132
      %p135 = scmp.ne.s32.totalorder %s120, %s134
      %p136 = scmp.eq.s32.totalorder %s47, 0
      %p137 = por %p135, %p136
      %s139 = sadd.s32 %s138, 1
      %p142 = scmp.eq.s32.totalorder %s41, 1
      %p143 = scmp.ne.s32.totalorder %s138, %s140
      %p144 = scmp.eq.s32.totalorder %s41, 0
      %p145 = por %p143, %p144
      %p146 = scmp.ne.s32.totalorder %s138, %s140
      %p147 = scmp.eq.s32.totalorder %s46, 1
      %p148 = por %p146, %p147
      %p149 = scmp.ne.s32.totalorder %s140, %s141
      %p150 = scmp.eq.s32.totalorder %s46, 0
      %p151 = por %p149, %p150
      %p152 = scmp.ne.s32.totalorder %s140, %s141
      %p153 = scmp.eq.s32.totalorder %s47, 1
      %p154 = por %p152, %p153
      %p156 = scmp.ne.s32.totalorder %s141, %s155
      %p157 = scmp.eq.s32.totalorder %s47, 0
      %p158 = por %p156, %p157
      %s160 = sadd.s32 %s159, 1
      %p163 = scmp.eq.s32.totalorder %s41, 1
      %p164 = scmp.ne.s32.totalorder %s159, %s161
      %p165 = scmp.eq.s32.totalorder %s41, 0
      %p166 = por %p164, %p165
      %p167 = scmp.ne.s32.totalorder %s159, %s161
      %p168 = scmp.eq.s32.totalorder %s46, 1
      %p169 = por %p167, %p168
      %p170 = scmp.ne.s32.totalorder %s161, %s162
      %p171 = scmp.eq.s32.totalorder %s46, 0
      %p172 = por %p170, %p171
      %p173 = scmp.ne.s32.totalorder %s161, %s162
      %p174 = scmp.eq.s32.totalorder %s47, 1
      %p175 = por %p173, %p174
      %p177 = scmp.ne.s32.totalorder %s162, %s176
      %p178 = scmp.eq.s32.totalorder %s47, 0
      %p179 = por %p177, %p178
      %s181 = sadd.s32 %s180, 1
      %p184 = scmp.eq.s32.totalorder %s41, 1
      %p185 = scmp.ne.s32.totalorder %s180, %s182
      %p186 = scmp.eq.s32.totalorder %s41, 0
      %p187 = por %p185, %p186
      %p188 = scmp.ne.s32.totalorder %s180, %s182
      %p189 = scmp.eq.s32.totalorder %s46, 1
      %p190 = por %p188, %p189
      %p191 = scmp.ne.s32.totalorder %s182, %s183
      %p192 = scmp.eq.s32.totalorder %s46, 0
      %p193 = por %p191, %p192
      %p194 = scmp.ne.s32.totalorder %s182, %s183
      %p195 = scmp.eq.s32.totalorder %s47, 1
      %p196 = por %p194, %p195
      %p198 = scmp.ne.s32.totalorder %s183, %s197
      %p199 = scmp.eq.s32.totalorder %s47, 0
      %p200 = por %p198, %p199
      %s202 = sadd.s32 %s201, 1
      %p205 = scmp.eq.s32.totalorder %s41, 1
      %p206 = scmp.ne.s32.totalorder %s201, %s203
      %p207 = scmp.eq.s32.totalorder %s41, 0
      %p208 = por %p206, %p207
      %p209 = scmp.ne.s32.totalorder %s201, %s203
      %p210 = scmp.eq.s32.totalorder %s46, 1
      %p211 = por %p209, %p210
      %p212 = scmp.ne.s32.totalorder %s203, %s204
      %p213 = scmp.eq.s32.totalorder %s46, 0
      %p214 = por %p212, %p213
      %p215 = scmp.ne.s32.totalorder %s203, %s204
      %p216 = scmp.eq.s32.totalorder %s47, 1
      %p217 = por %p215, %p216
      %p219 = scmp.ne.s32.totalorder %s204, %s218
      %p220 = scmp.eq.s32.totalorder %s47, 0
      %p221 = por %p219, %p220
      %s223 = sadd.s32 %s222, 1
      %p226 = scmp.eq.s32.totalorder %s41, 1
      %p227 = scmp.ne.s32.totalorder %s222, %s224
      %p228 = scmp.eq.s32.totalorder %s41, 0
      %p229 = por %p227, %p228
      %p230 = scmp.ne.s32.totalorder %s222, %s224
      %p231 = scmp.eq.s32.totalorder %s46, 1
      %p232 = por %p230, %p231
      %p233 = scmp.ne.s32.totalorder %s224, %s225
      %p234 = scmp.eq.s32.totalorder %s46, 0
      %p235 = por %p233, %p234
      %p236 = scmp.ne.s32.totalorder %s224, %s225
      %p237 = scmp.eq.s32.totalorder %s47, 1
      %p238 = por %p236, %p237
      %p240 = scmp.ne.s32.totalorder %s225, %s239
      %p241 = scmp.eq.s32.totalorder %s47, 0
      %p242 = por %p240, %p241
      %s244 = sadd.s32 %s243, 1
      %p247 = scmp.eq.s32.totalorder %s41, 1
      %p248 = scmp.ne.s32.totalorder %s243, %s245
      %p249 = scmp.eq.s32.totalorder %s41, 0
      %p250 = por %p248, %p249
      %p251 = scmp.ne.s32.totalorder %s243, %s245
      %p252 = scmp.eq.s32.totalorder %s46, 1
      %p253 = por %p251, %p252
      %p254 = scmp.ne.s32.totalorder %s245, %s246
      %p255 = scmp.eq.s32.totalorder %s46, 0
      %p256 = por %p254, %p255
      %p257 = scmp.ne.s32.totalorder %s245, %s246
      %p258 = scmp.eq.s32.totalorder %s47, 1
      %p259 = por %p257, %p258
      %p261 = scmp.ne.s32.totalorder %s246, %s260
      %p262 = scmp.eq.s32.totalorder %s47, 0
      %p263 = por %p261, %p262
      %s265 = sadd.s32 %s264, 1
      %p268 = scmp.eq.s32.totalorder %s41, 1
      %p269 = scmp.ne.s32.totalorder %s264, %s266
      %p270 = scmp.eq.s32.totalorder %s41, 0
      %p271 = por %p269, %p270
      %p272 = scmp.ne.s32.totalorder %s264, %s266
      %p273 = scmp.eq.s32.totalorder %s46, 1
      %p274 = por %p272, %p273
      %p275 = scmp.ne.s32.totalorder %s266, %s267
      %p276 = scmp.eq.s32.totalorder %s46, 0
      %p277 = por %p275, %p276
      %p278 = scmp.ne.s32.totalorder %s266, %s267
      %p279 = scmp.eq.s32.totalorder %s47, 1
      %p280 = por %p278, %p279
      %p282 = scmp.ne.s32.totalorder %s267, %s281
      %p283 = scmp.eq.s32.totalorder %s47, 0
      %p284 = por %p282, %p283
      %s286 = sadd.s32 %s285, 1
      %p289 = scmp.eq.s32.totalorder %s41, 1
      %p290 = scmp.ne.s32.totalorder %s285, %s287
      %p291 = scmp.eq.s32.totalorder %s41, 0
      %p292 = por %p290, %p291
      %p293 = scmp.ne.s32.totalorder %s285, %s287
      %p294 = scmp.eq.s32.totalorder %s46, 1
      %p295 = por %p293, %p294
      %p296 = scmp.ne.s32.totalorder %s287, %s288
      %p297 = scmp.eq.s32.totalorder %s46, 0
      %p298 = por %p296, %p297
      %p299 = scmp.ne.s32.totalorder %s287, %s288
      %p300 = scmp.eq.s32.totalorder %s47, 1
      %p301 = por %p299, %p300
      %p303 = scmp.ne.s32.totalorder %s288, %s302
      %p304 = scmp.eq.s32.totalorder %s47, 0
      %p305 = por %p303, %p304
      %s307 = sadd.s32 %s306, 1
      %p310 = scmp.eq.s32.totalorder %s41, 1
      %p311 = scmp.ne.s32.totalorder %s306, %s308
      %p312 = scmp.eq.s32.totalorder %s41, 0
      %p313 = por %p311, %p312
      %p314 = scmp.ne.s32.totalorder %s306, %s308
      %p315 = scmp.eq.s32.totalorder %s46, 1
      %p316 = por %p314, %p315
      %p317 = scmp.ne.s32.totalorder %s308, %s309
      %p318 = scmp.eq.s32.totalorder %s46, 0
      %p319 = por %p317, %p318
      %p320 = scmp.ne.s32.totalorder %s308, %s309
      %p321 = scmp.eq.s32.totalorder %s47, 1
      %p322 = por %p320, %p321
      %p324 = scmp.ne.s32.totalorder %s309, %s323
      %p325 = scmp.eq.s32.totalorder %s47, 0
      %p326 = por %p324, %p325
      %s328 = sadd.s32 %s327, 1
      %p331 = scmp.eq.s32.totalorder %s41, 1
      %p332 = scmp.ne.s32.totalorder %s327, %s329
      %p333 = scmp.eq.s32.totalorder %s41, 0
      %p334 = por %p332, %p333
      %p335 = scmp.ne.s32.totalorder %s327, %s329
      %p336 = scmp.eq.s32.totalorder %s46, 1
      %p337 = por %p335, %p336
      %p338 = scmp.ne.s32.totalorder %s329, %s330
      %p339 = scmp.eq.s32.totalorder %s46, 0
      %p340 = por %p338, %p339
      %p341 = scmp.ne.s32.totalorder %s329, %s330
      %p342 = scmp.eq.s32.totalorder %s47, 1
      %p343 = por %p341, %p342
      %p345 = scmp.ne.s32.totalorder %s330, %s344
      %p346 = scmp.eq.s32.totalorder %s47, 0
      %p347 = por %p345, %p346
      %s349 = sadd.s32 %s348, 1
      %p352 = scmp.eq.s32.totalorder %s41, 1
      %p353 = scmp.ne.s32.totalorder %s348, %s350
      %p354 = scmp.eq.s32.totalorder %s41, 0
      %p355 = por %p353, %p354
      %p356 = scmp.ne.s32.totalorder %s348, %s350
      %p357 = scmp.eq.s32.totalorder %s46, 1
      %p358 = por %p356, %p357
      %p359 = scmp.ne.s32.totalorder %s350, %s351
      %p360 = scmp.eq.s32.totalorder %s46, 0
      %p361 = por %p359, %p360
      %p362 = scmp.ne.s32.totalorder %s350, %s351
      %p363 = scmp.eq.s32.totalorder %s47, 1
      %p364 = por %p362, %p363
      %p366 = scmp.ne.s32.totalorder %s351, %s365
      %p367 = scmp.eq.s32.totalorder %s47, 0
      %p368 = por %p366, %p367
      %s370 = sadd.s32 %s369, 1
      %p373 = scmp.eq.s32.totalorder %s41, 1
      %p374 = scmp.ne.s32.totalorder %s369, %s371
      %p375 = scmp.eq.s32.totalorder %s41, 0
      %p376 = por %p374, %p375
      %p377 = scmp.ne.s32.totalorder %s369, %s371
      %p378 = scmp.eq.s32.totalorder %s46, 1
      %p379 = por %p377, %p378
      %p380 = scmp.ne.s32.totalorder %s371, %s372
      %p381 = scmp.eq.s32.totalorder %s46, 0
      %p382 = por %p380, %p381
      %p383 = scmp.ne.s32.totalorder %s371, %s372
      %p384 = scmp.eq.s32.totalorder %s47, 1
      %p385 = por %p383, %p384
      %p387 = scmp.ne.s32.totalorder %s372, %s386
      %p388 = scmp.eq.s32.totalorder %s47, 0
      %p389 = por %p387, %p388
      %s391 = sadd.s32 %s390, 1
      %p394 = scmp.eq.s32.totalorder %s41, 1
      %p395 = scmp.ne.s32.totalorder %s390, %s392
      %p396 = scmp.eq.s32.totalorder %s41, 0
      %p397 = por %p395, %p396
      %p398 = scmp.ne.s32.totalorder %s390, %s392
      %p399 = scmp.eq.s32.totalorder %s46, 1
      %p400 = por %p398, %p399
      %p401 = scmp.ne.s32.totalorder %s392, %s393
      %p402 = scmp.eq.s32.totalorder %s46, 0
      %p403 = por %p401, %p402
      %p404 = scmp.ne.s32.totalorder %s392, %s393
      %p405 = scmp.eq.s32.totalorder %s47, 1
      %p406 = por %p404, %p405
      %p408 = scmp.ne.s32.totalorder %s393, %s407
      %p409 = scmp.eq.s32.totalorder %s47, 0
      %p410 = por %p408, %p409
      %s412 = sadd.s32 %s411, 1
      %p415 = scmp.eq.s32.totalorder %s41, 1
      %p416 = scmp.ne.s32.totalorder %s411, %s413
      %p417 = scmp.eq.s32.totalorder %s41, 0
      %p418 = por %p416, %p417
      %p419 = scmp.ne.s32.totalorder %s411, %s413
      %p420 = scmp.eq.s32.totalorder %s46, 1
      %p421 = por %p419, %p420
      %p422 = scmp.ne.s32.totalorder %s413, %s414
      %p423 = scmp.eq.s32.totalorder %s46, 0
      %p424 = por %p422, %p423
      %p425 = scmp.ne.s32.totalorder %s413, %s414
      %p426 = scmp.eq.s32.totalorder %s47, 1
      %p427 = por %p425, %p426
      %p429 = scmp.ne.s32.totalorder %s414, %s428
      %p430 = scmp.eq.s32.totalorder %s47, 0
      %p431 = por %p429, %p430
      %s433 = sadd.s32 %s432, 1
      %p436 = scmp.eq.s32.totalorder %s41, 1
      %p437 = scmp.ne.s32.totalorder %s432, %s434
      %p438 = scmp.eq.s32.totalorder %s41, 0
      %p439 = por %p437, %p438
      %p440 = scmp.ne.s32.totalorder %s432, %s434
      %p441 = scmp.eq.s32.totalorder %s46, 1
      %p442 = por %p440, %p441
      %p443 = scmp.ne.s32.totalorder %s434, %s435
      %p444 = scmp.eq.s32.totalorder %s46, 0
      %p445 = por %p443, %p444
      %p446 = scmp.ne.s32.totalorder %s434, %s435
      %p447 = scmp.eq.s32.totalorder %s47, 1
      %p448 = por %p446, %p447
      %p450 = scmp.ne.s32.totalorder %s435, %s449
      %p451 = scmp.eq.s32.totalorder %s47, 0
      %p452 = por %p450, %p451
      %s454 = sadd.s32 %s453, 1
      %p457 = scmp.eq.s32.totalorder %s41, 1
      %p458 = scmp.ne.s32.totalorder %s453, %s455
      %p459 = scmp.eq.s32.totalorder %s41, 0
      %p460 = por %p458, %p459
      %p461 = scmp.ne.s32.totalorder %s453, %s455
      %p462 = scmp.eq.s32.totalorder %s46, 1
      %p463 = por %p461, %p462
      %p464 = scmp.ne.s32.totalorder %s455, %s456
      %p465 = scmp.eq.s32.totalorder %s46, 0
      %p466 = por %p464, %p465
      %p467 = scmp.ne.s32.totalorder %s455, %s456
      %p468 = scmp.eq.s32.totalorder %s47, 1
      %p469 = por %p467, %p468
      %p471 = scmp.ne.s32.totalorder %s456, %s470
      %p472 = scmp.eq.s32.totalorder %s47, 0
      %p473 = por %p471, %p472
      %s475 = sadd.s32 %s474, 1
      %p478 = scmp.eq.s32.totalorder %s41, 1
      %p479 = scmp.ne.s32.totalorder %s474, %s476
      %p480 = scmp.eq.s32.totalorder %s41, 0
      %p481 = por %p479, %p480
      %p482 = scmp.ne.s32.totalorder %s474, %s476
      %p483 = scmp.eq.s32.totalorder %s46, 1
      %p484 = por %p482, %p483
      %p485 = scmp.ne.s32.totalorder %s476, %s477
      %p486 = scmp.eq.s32.totalorder %s46, 0
      %p487 = por %p485, %p486
      %p488 = scmp.ne.s32.totalorder %s476, %s477
      %p489 = scmp.eq.s32.totalorder %s47, 1
      %p490 = por %p488, %p489
      %p492 = scmp.ne.s32.totalorder %s477, %s491
      %p493 = scmp.eq.s32.totalorder %s47, 0
      %p494 = por %p492, %p493
      %s495 = ssub.s32 %s41, %s48
      %p496 = scmp.eq.s32.totalorder %s495, 0
      %s498 = sadd.s32 %s497, 1
      %s499 = scalar_select %p496, %s497, %s498
      %p502 = pneg %p496
      %p503 = scmp.eq.s32.totalorder %s41, 1
      %p504 = por %p502, %p503
      %p505 = scmp.ne.s32.totalorder %s497, %s500
      %p506 = scmp.eq.s32.totalorder %s41, 0
      %p507 = por %p505, %p506
      %p508 = scmp.ne.s32.totalorder %s497, %s500
      %p509 = scmp.eq.s32.totalorder %s46, 1
      %p510 = por %p508, %p509
      %p511 = scmp.ne.s32.totalorder %s500, %s501
      %p512 = scmp.eq.s32.totalorder %s46, 0
      %p513 = por %p511, %p512
      %p514 = scmp.ne.s32.totalorder %s500, %s501
      %p515 = scmp.eq.s32.totalorder %s47, 1
      %p516 = por %p514, %p515
      %p518 = scmp.ne.s32.totalorder %s501, %s517
      %p519 = scmp.eq.s32.totalorder %s47, 0
      %p520 = por %p518, %p519
      %p521 = scmp.le.s32.totalorder 1, %s41
      %p522 = scmp.lt.s32.totalorder %s41, 3
      %p523 = pnand %p521, %p522
      %p524 = pneg %p523
      // Predicated region
      $region9: #{autoencoder_forward.1} parent=5 // pred_check
        _
      $region10: #{autoencoder_forward.1} parent=5 // pred_check_branch
        %526 = sbr.rel (%p523) target = $region12
      $region11: #{autoencoder_forward.1} parent=5 // pred_region
        %s527 = ssub.s32 %s41, 1
        // Predicated region
        $region13: #{autoencoder_forward.1} parent=11 // pred_check
          %p528 = pneg %p88
        $region14: #{autoencoder_forward.1} parent=11 // pred_check_branch
          %530 = sbr.rel (%p528) target = $region16
        $region15: #{autoencoder_forward.1} parent=11 // pred_region
          _
        $region16: #{autoencoder_forward.1} parent=11 // pred_fallthru
          _
        // Predicated region
        $region17: #{autoencoder_forward.1} parent=11 // pred_check
          %p531 = pneg %p109
        $region18: #{autoencoder_forward.1} parent=11 // pred_check_branch
          %533 = sbr.rel (%p531) target = $region20
        $region19: #{autoencoder_forward.1} parent=11 // pred_region
          _
        $region20: #{autoencoder_forward.1} parent=11 // pred_fallthru
          _
        // Predicated region
        $region21: #{autoencoder_forward.1} parent=11 // pred_check
          %p534 = pneg %p130
        $region22: #{autoencoder_forward.1} parent=11 // pred_check_branch
          %536 = sbr.rel (%p534) target = $region24
        $region23: #{autoencoder_forward.1} parent=11 // pred_region
          %538 = vsyncadd [#allocation9], 0
          %s539 = sshll.u32 %s3, 4
          %s540 = int_to_ptr.hbm [resolvable:$true] %s539
          %s541 = sshll.u32 [#allocation8], 4
          %s542 = int_to_ptr.vmem [resolvable:$true] %s541
          %547 = dma.hbm_to_vmem [thread:$0]  %s540, 2048, %s542, [#allocation9], 256, 256, 16
        $region24: #{autoencoder_forward.1} parent=11 // pred_fallthru
          _
        // Predicated region
        $region25: #{autoencoder_forward.1} parent=11 // pred_check
          %p548 = pneg %p151
        $region26: #{autoencoder_forward.1} parent=11 // pred_check_branch
          %550 = sbr.rel (%p548) target = $region28
        $region27: #{autoencoder_forward.1} parent=11 // pred_region
          _
        $region28: #{autoencoder_forward.1} parent=11 // pred_fallthru
          _
        // Predicated region
        $region29: #{autoencoder_forward.1} parent=11 // pred_check
          %p551 = pneg %p172
        $region30: #{autoencoder_forward.1} parent=11 // pred_check_branch
          %553 = sbr.rel (%p551) target = $region32
        $region31: #{autoencoder_forward.1} parent=11 // pred_region
          _
        $region32: #{autoencoder_forward.1} parent=11 // pred_fallthru
          _
        // Predicated region
        $region33: #{autoencoder_forward.1} parent=11 // pred_check
          %p554 = pneg %p193
        $region34: #{autoencoder_forward.1} parent=11 // pred_check_branch
          %556 = sbr.rel (%p554) target = $region36
        $region35: #{autoencoder_forward.1} parent=11 // pred_region
          _
        $region36: #{autoencoder_forward.1} parent=11 // pred_fallthru
          _
        // Predicated region
        $region37: #{autoencoder_forward.1} parent=11 // pred_check
          %p557 = pneg %p214
        $region38: #{autoencoder_forward.1} parent=11 // pred_check_branch
          %559 = sbr.rel (%p557) target = $region40
        $region39: #{autoencoder_forward.1} parent=11 // pred_region
          %561 = vsyncadd [#allocation9], 0
          %s562 = sshll.u32 %s7, 4
          %s563 = int_to_ptr.hbm [resolvable:$true] %s562
          %s564 = sshll.u32 [#allocation10], 4
          %s565 = int_to_ptr.vmem [resolvable:$true] %s564
          %570 = dma.hbm_to_vmem [thread:$0]  %s563, 256, %s565, [#allocation9], 128, 128, 8
        $region40: #{autoencoder_forward.1} parent=11 // pred_fallthru
          _
        // Predicated region
        $region41: #{autoencoder_forward.1} parent=11 // pred_check
          %p571 = pneg %p235
        $region42: #{autoencoder_forward.1} parent=11 // pred_check_branch
          %573 = sbr.rel (%p571) target = $region44
        $region43: #{autoencoder_forward.1} parent=11 // pred_region
          _
        $region44: #{autoencoder_forward.1} parent=11 // pred_fallthru
          _
        // Predicated region
        $region45: #{autoencoder_forward.1} parent=11 // pred_check
          %p574 = pneg %p256
        $region46: #{autoencoder_forward.1} parent=11 // pred_check_branch
          %576 = sbr.rel (%p574) target = $region48
        $region47: #{autoencoder_forward.1} parent=11 // pred_region
          _
        $region48: #{autoencoder_forward.1} parent=11 // pred_fallthru
          _
        // Predicated region
        $region49: #{autoencoder_forward.1} parent=11 // pred_check
          %p577 = pneg %p277
        $region50: #{autoencoder_forward.1} parent=11 // pred_check_branch
          %579 = sbr.rel (%p577) target = $region52
        $region51: #{autoencoder_forward.1} parent=11 // pred_region
          _
        $region52: #{autoencoder_forward.1} parent=11 // pred_fallthru
          _
        // Predicated region
        $region53: #{autoencoder_forward.1} parent=11 // pred_check
          %p580 = pneg %p298
        $region54: #{autoencoder_forward.1} parent=11 // pred_check_branch
          %582 = sbr.rel (%p580) target = $region56
        $region55: #{autoencoder_forward.1} parent=11 // pred_region
          _
        $region56: #{autoencoder_forward.1} parent=11 // pred_fallthru
          _
        // Predicated region
        $region57: #{autoencoder_forward.1} parent=11 // pred_check
          %p583 = pneg %p319
        $region58: #{autoencoder_forward.1} parent=11 // pred_check_branch
          %585 = sbr.rel (%p583) target = $region60
        $region59: #{autoencoder_forward.1} parent=11 // pred_region
          _
        $region60: #{autoencoder_forward.1} parent=11 // pred_fallthru
          _
        // Predicated region
        $region61: #{autoencoder_forward.1} parent=11 // pred_check
          %p586 = pneg %p340
        $region62: #{autoencoder_forward.1} parent=11 // pred_check_branch
          %588 = sbr.rel (%p586) target = $region64
        $region63: #{autoencoder_forward.1} parent=11 // pred_region
          _
        $region64: #{autoencoder_forward.1} parent=11 // pred_fallthru
          _
        // Predicated region
        $region65: #{autoencoder_forward.1} parent=11 // pred_check
          %p589 = pneg %p361
        $region66: #{autoencoder_forward.1} parent=11 // pred_check_branch
          %591 = sbr.rel (%p589) target = $region68
        $region67: #{autoencoder_forward.1} parent=11 // pred_region
          _
        $region68: #{autoencoder_forward.1} parent=11 // pred_fallthru
          _
        // Predicated region
        $region69: #{autoencoder_forward.1} parent=11 // pred_check
          %p592 = pneg %p382
        $region70: #{autoencoder_forward.1} parent=11 // pred_check_branch
          %594 = sbr.rel (%p592) target = $region72
        $region71: #{autoencoder_forward.1} parent=11 // pred_region
          _
        $region72: #{autoencoder_forward.1} parent=11 // pred_fallthru
          _
        // Predicated region
        $region73: #{autoencoder_forward.1} parent=11 // pred_check
          %p595 = pneg %p403
        $region74: #{autoencoder_forward.1} parent=11 // pred_check_branch
          %597 = sbr.rel (%p595) target = $region76
        $region75: #{autoencoder_forward.1} parent=11 // pred_region
          _
        $region76: #{autoencoder_forward.1} parent=11 // pred_fallthru
          _
        // Predicated region
        $region77: #{autoencoder_forward.1} parent=11 // pred_check
          %p598 = pneg %p424
        $region78: #{autoencoder_forward.1} parent=11 // pred_check_branch
          %600 = sbr.rel (%p598) target = $region80
        $region79: #{autoencoder_forward.1} parent=11 // pred_region
          %602 = vsyncadd [#allocation12], 0
          %s603 = sshll.u32 %s17, 4
          %s604 = int_to_ptr.hbm [resolvable:$true] %s603
          %s605 = sshll.u32 [#allocation11], 4
          %s606 = int_to_ptr.vmem [resolvable:$true] %s605
          %611 = dma.hbm_to_vmem [thread:$0]  %s604, 2048, %s606, [#allocation12], 512, 512, 32
        $region80: #{autoencoder_forward.1} parent=11 // pred_fallthru
          _
        // Predicated region
        $region81: #{autoencoder_forward.1} parent=11 // pred_check
          %p612 = pneg %p445
        $region82: #{autoencoder_forward.1} parent=11 // pred_check_branch
          %614 = sbr.rel (%p612) target = $region84
        $region83: #{autoencoder_forward.1} parent=11 // pred_region
          _
        $region84: #{autoencoder_forward.1} parent=11 // pred_fallthru
          _
        // Predicated region
        $region85: #{autoencoder_forward.1} parent=11 // pred_check
          %p615 = pneg %p466
        $region86: #{autoencoder_forward.1} parent=11 // pred_check_branch
          %617 = sbr.rel (%p615) target = $region88
        $region87: #{autoencoder_forward.1} parent=11 // pred_region
          _
        $region88: #{autoencoder_forward.1} parent=11 // pred_fallthru
          _
        // Predicated region
        $region89: #{autoencoder_forward.1} parent=11 // pred_check
          %p618 = pneg %p487
        $region90: #{autoencoder_forward.1} parent=11 // pred_check_branch
          %620 = sbr.rel (%p618) target = $region92
        $region91: #{autoencoder_forward.1} parent=11 // pred_region
          _
        $region92: #{autoencoder_forward.1} parent=11 // pred_fallthru
          _
      $region12: #{autoencoder_forward.1} parent=5 // pred_fallthru
        _
      %p621 = scmp.lt.s32.totalorder %s41, 2
      // Predicated region
      $region93: #{autoencoder_forward.1} parent=5 // pred_check
        %p622 = pneg %p621
      $region94: #{autoencoder_forward.1} parent=5 // pred_check_branch
        %624 = sbr.rel (%p622) target = $region96
      $region95: #{autoencoder_forward.1} parent=5 // pred_region
        // Predicated region
        $region97: #{autoencoder_forward.1} parent=95 // pred_check
          %p625 = pneg %p61
        $region98: #{autoencoder_forward.1} parent=95 // pred_check_branch
          %627 = sbr.rel (%p625) target = $region100
        $region99: #{autoencoder_forward.1} parent=95 // pred_region
          %s628 = sand.u32 %s51, 1
          %s629 = scalar_lea.sflag [#allocation6], %s628
          %s630 = sand.u32 %s51, 1
          %s631 = scalar_lea.vmem [#allocation5], %s630
          %633 = vsyncadd %s629, 0
          %s634 = scalar_lea.hbm %s0, %s41
          %s636 = sshll.u32 %s634, 4
          %s637 = int_to_ptr.hbm [resolvable:$true] %s636
          %s638 = sshll.u32 %s631, 4
          %s639 = int_to_ptr.vmem [resolvable:$true] %s638
          %641 = dma.hbm_to_vmem [thread:$0]  %s637, 16, %s639, %s629
        $region100: #{autoencoder_forward.1} parent=95 // pred_fallthru
          _
      $region96: #{autoencoder_forward.1} parent=5 // pred_fallthru
        _
      %p642 = scmp.le.s32.totalorder 1, %s41
      %p643 = scmp.lt.s32.totalorder %s41, 3
      %p644 = pnand %p642, %p643
      %p645 = pneg %p644
      // Predicated region
      $region101: #{autoencoder_forward.1} parent=5 // pred_check
        _
      $region102: #{autoencoder_forward.1} parent=5 // pred_check_branch
        %647 = sbr.rel (%p644) target = $region104
      $region103: #{autoencoder_forward.1} parent=5 // pred_region
        %s648 = ssub.s32 %s41, 1
        %s649 = sand.u32 %s54, 1
        %s650 = scalar_lea.sflag [#allocation6], %s649
        %s651 = sand.u32 %s54, 1
        %s652 = scalar_lea.vmem [#allocation5], %s651
        // Predicated region
        $region105: #{autoencoder_forward.1} parent=103 // pred_check
          %p653 = pneg %p67
        $region106: #{autoencoder_forward.1} parent=103 // pred_check_branch
          %655 = sbr.rel (%p653) target = $region108
        $region107: #{autoencoder_forward.1} parent=103 // pred_region
          %657 = dma.done %s650, 16
        $region108: #{autoencoder_forward.1} parent=103 // pred_fallthru
          _
        // Predicated region
        $region109: #{autoencoder_forward.1} parent=103 // pred_check
          %p658 = pneg %p130
        $region110: #{autoencoder_forward.1} parent=103 // pred_check_branch
          %660 = sbr.rel (%p658) target = $region112
        $region111: #{autoencoder_forward.1} parent=103 // pred_region
          %662 = dma.done [#allocation9], 2048
        $region112: #{autoencoder_forward.1} parent=103 // pred_fallthru
          _
        // Predicated region
        $region113: #{autoencoder_forward.1} parent=103 // pred_check
          %p663 = pneg %p214
        $region114: #{autoencoder_forward.1} parent=103 // pred_check_branch
          %665 = sbr.rel (%p663) target = $region116
        $region115: #{autoencoder_forward.1} parent=103 // pred_region
          %667 = dma.done [#allocation9], 256
        $region116: #{autoencoder_forward.1} parent=103 // pred_fallthru
          _
        // Predicated region
        $region117: #{autoencoder_forward.1} parent=103 // pred_check
          %p668 = pneg %p424
        $region118: #{autoencoder_forward.1} parent=103 // pred_check_branch
          %670 = sbr.rel (%p668) target = $region120
        $region119: #{autoencoder_forward.1} parent=103 // pred_region
          %672 = dma.done [#allocation12], 2048
        $region120: #{autoencoder_forward.1} parent=103 // pred_fallthru
          _
        %s673 = sand.u32 %s54, 1
        %s674 = scalar_lea.sflag [#allocation6], %s673
        %s675 = sand.u32 %s54, 1
        %s676 = scalar_lea.vmem [#allocation5], %s675
        %p677 = pneg %p67
        %p678 = pneg %p64
        %p679 = pneg %p88
        %p680 = pneg %p85
        %p681 = pneg %p109
        %p682 = pneg %p106
        %p683 = pneg %p130
        %p684 = pneg %p127
        %p685 = pneg %p151
        %p686 = pneg %p148
        %p687 = pneg %p172
        %p688 = pneg %p169
        %p689 = pneg %p193
        %p690 = pneg %p190
        %p691 = pneg %p214
        %p692 = pneg %p211
        %p693 = pneg %p235
        %p694 = pneg %p232
        %p695 = pneg %p256
        %p696 = pneg %p253
        %p697 = pneg %p277
        %p698 = pneg %p274
        %p699 = pneg %p298
        %p700 = pneg %p295
        %p701 = pneg %p319
        %p702 = pneg %p316
        %p703 = pneg %p340
        %p704 = pneg %p337
        %p705 = pneg %p361
        %p706 = pneg %p358
        %p707 = pneg %p382
        %p708 = pneg %p379
        %p709 = pneg %p403
        %p710 = pneg %p400
        %p711 = pneg %p424
        %p712 = pneg %p421
        %p713 = pneg %p445
        %p714 = pneg %p442
        %p715 = pneg %p466
        %p716 = pneg %p463
        %p717 = pneg %p487
        %p718 = pneg %p484
        %p719 = pneg %p513
        %p720 = pneg %p510
        %s721 = sand.u32 %s500, 1
        %s722 = scalar_lea.sflag [#allocation7], %s721
        %s723 = sand.u32 %s500, 1
        %s724 = smul.addr %s723, 32
        %s725 = scalar_lea.vmem [#allocation13], %s724
        %v726 = vld [vmem:[%s652] sm:$0x1]
        %v727 = vld [vmem:[%s1] sm:$0xff]
        %v728 = vld [vmem:[%s1 + $0x8] sm:$0xff]
        %v729 = vld [vmem:[%s1 + $0x10] sm:$0xff]
        %v730 = vld [vmem:[%s1 + $0x18] sm:$0xff]
        %v731 = vld [vmem:[%s2] sm:$0xff]
        %v732 = vld [vmem:[%s2 + $0x8] sm:$0xff]
        %v733 = vld [vmem:[%s2 + $0x10] sm:$0xff]
        %v734 = vld [vmem:[%s2 + $0x18] sm:$0xff]
        %736 = vset.pattern.permute.xlu0 0
        %737 = vperm.xlu0 %736, %v727
        %v738 = vpop.permute.xlu0 %737
        %741 = vset.pattern.permute.xlu0 0
        %742 = vperm.xlu0 %741, %v728
        %v743 = vpop.permute.xlu0 %742
        %746 = vset.pattern.permute.xlu0 0
        %747 = vperm.xlu0 %746, %v729
        %v748 = vpop.permute.xlu0 %747
        %751 = vset.pattern.permute.xlu0 0
        %752 = vperm.xlu0 %751, %v730
        %v753 = vpop.permute.xlu0 %752
        %v756 = vperm.slane %v726, 0
        %v758 = vmul.f32 %v738, %v756
        %v759 = vmul.f32 %v743, %v756
        %v760 = vmul.f32 %v748, %v756
        %v761 = vmul.f32 %v753, %v756
        %v762 = vadd.f32 %v758, 0.0
        %v763 = vadd.f32 %v759, 0.0
        %v764 = vadd.f32 %v760, 0.0
        %v765 = vadd.f32 %v761, 0.0
        %766 = vset.pattern.permute.xlu0 1
        %767 = vperm.xlu0 %766, %v727
        %v768 = vpop.permute.xlu0 %767
        %770 = vset.pattern.permute.xlu0 1
        %771 = vperm.xlu0 %770, %v728
        %v772 = vpop.permute.xlu0 %771
        %774 = vset.pattern.permute.xlu0 1
        %775 = vperm.xlu0 %774, %v729
        %v776 = vpop.permute.xlu0 %775
        %778 = vset.pattern.permute.xlu0 1
        %779 = vperm.xlu0 %778, %v730
        %v780 = vpop.permute.xlu0 %779
        %v782 = vmul.f32 %v768, %v756
        %v783 = vmul.f32 %v772, %v756
        %v784 = vmul.f32 %v776, %v756
        %v785 = vmul.f32 %v780, %v756
        %790 = vrot.lane.b32.xlu0 %v782, 127
        %v791 = vpop.permute.xlu0 %790
        %792 = vrot.lane.b32.xlu0 %v783, 127
        %v793 = vpop.permute.xlu0 %792
        %794 = vrot.lane.b32.xlu0 %v784, 127
        %v795 = vpop.permute.xlu0 %794
        %796 = vrot.lane.b32.xlu0 %v785, 127
        %v797 = vpop.permute.xlu0 %796
        %v802 = vadd.f32 %v762, %v791
        %v803 = vadd.f32 %v763, %v793
        %v804 = vadd.f32 %v764, %v795
        %v805 = vadd.f32 %v765, %v797
        %806 = vset.pattern.permute.xlu0 2
        %807 = vperm.xlu0 %806, %v727
        %v808 = vpop.permute.xlu0 %807
        %810 = vset.pattern.permute.xlu0 2
        %811 = vperm.xlu0 %810, %v728
        %v812 = vpop.permute.xlu0 %811
        %814 = vset.pattern.permute.xlu0 2
        %815 = vperm.xlu0 %814, %v729
        %v816 = vpop.permute.xlu0 %815
        %818 = vset.pattern.permute.xlu0 2
        %819 = vperm.xlu0 %818, %v730
        %v820 = vpop.permute.xlu0 %819
        %v822 = vmul.f32 %v808, %v756
        %v823 = vmul.f32 %v812, %v756
        %v824 = vmul.f32 %v816, %v756
        %v825 = vmul.f32 %v820, %v756
        %830 = vrot.lane.b32.xlu0 %v822, 126
        %v831 = vpop.permute.xlu0 %830
        %832 = vrot.lane.b32.xlu0 %v823, 126
        %v833 = vpop.permute.xlu0 %832
        %834 = vrot.lane.b32.xlu0 %v824, 126
        %v835 = vpop.permute.xlu0 %834
        %836 = vrot.lane.b32.xlu0 %v825, 126
        %v837 = vpop.permute.xlu0 %836
        %v842 = vadd.f32 %v802, %v831
        %v843 = vadd.f32 %v803, %v833
        %v844 = vadd.f32 %v804, %v835
        %v845 = vadd.f32 %v805, %v837
        %846 = vset.pattern.permute.xlu0 3
        %847 = vperm.xlu0 %846, %v727
        %v848 = vpop.permute.xlu0 %847
        %850 = vset.pattern.permute.xlu0 3
        %851 = vperm.xlu0 %850, %v728
        %v852 = vpop.permute.xlu0 %851
        %854 = vset.pattern.permute.xlu0 3
        %855 = vperm.xlu0 %854, %v729
        %v856 = vpop.permute.xlu0 %855
        %858 = vset.pattern.permute.xlu0 3
        %859 = vperm.xlu0 %858, %v730
        %v860 = vpop.permute.xlu0 %859
        %v862 = vmul.f32 %v848, %v756
        %v863 = vmul.f32 %v852, %v756
        %v864 = vmul.f32 %v856, %v756
        %v865 = vmul.f32 %v860, %v756
        %870 = vrot.lane.b32.xlu0 %v862, 125
        %v871 = vpop.permute.xlu0 %870
        %872 = vrot.lane.b32.xlu0 %v863, 125
        %v873 = vpop.permute.xlu0 %872
        %874 = vrot.lane.b32.xlu0 %v864, 125
        %v875 = vpop.permute.xlu0 %874
        %876 = vrot.lane.b32.xlu0 %v865, 125
        %v877 = vpop.permute.xlu0 %876
        %v882 = vadd.f32 %v842, %v871
        %v883 = vadd.f32 %v843, %v873
        %v884 = vadd.f32 %v844, %v875
        %v885 = vadd.f32 %v845, %v877
        %886 = vset.pattern.permute.xlu0 4
        %887 = vperm.xlu0 %886, %v727
        %v888 = vpop.permute.xlu0 %887
        %890 = vset.pattern.permute.xlu0 4
        %891 = vperm.xlu0 %890, %v728
        %v892 = vpop.permute.xlu0 %891
        %894 = vset.pattern.permute.xlu0 4
        %895 = vperm.xlu0 %894, %v729
        %v896 = vpop.permute.xlu0 %895
        %898 = vset.pattern.permute.xlu0 4
        %899 = vperm.xlu0 %898, %v730
        %v900 = vpop.permute.xlu0 %899
        %v902 = vmul.f32 %v888, %v756
        %v903 = vmul.f32 %v892, %v756
        %v904 = vmul.f32 %v896, %v756
        %v905 = vmul.f32 %v900, %v756
        %910 = vrot.lane.b32.xlu0 %v902, 124
        %v911 = vpop.permute.xlu0 %910
        %912 = vrot.lane.b32.xlu0 %v903, 124
        %v913 = vpop.permute.xlu0 %912
        %914 = vrot.lane.b32.xlu0 %v904, 124
        %v915 = vpop.permute.xlu0 %914
        %916 = vrot.lane.b32.xlu0 %v905, 124
        %v917 = vpop.permute.xlu0 %916
        %v922 = vadd.f32 %v882, %v911
        %v923 = vadd.f32 %v883, %v913
        %v924 = vadd.f32 %v884, %v915
        %v925 = vadd.f32 %v885, %v917
        %926 = vset.pattern.permute.xlu0 5
        %927 = vperm.xlu0 %926, %v727
        %v928 = vpop.permute.xlu0 %927
        %930 = vset.pattern.permute.xlu0 5
        %931 = vperm.xlu0 %930, %v728
        %v932 = vpop.permute.xlu0 %931
        %934 = vset.pattern.permute.xlu0 5
        %935 = vperm.xlu0 %934, %v729
        %v936 = vpop.permute.xlu0 %935
        %938 = vset.pattern.permute.xlu0 5
        %939 = vperm.xlu0 %938, %v730
        %v940 = vpop.permute.xlu0 %939
        %v942 = vmul.f32 %v928, %v756
        %v943 = vmul.f32 %v932, %v756
        %v944 = vmul.f32 %v936, %v756
        %v945 = vmul.f32 %v940, %v756
        %950 = vrot.lane.b32.xlu0 %v942, 123
        %v951 = vpop.permute.xlu0 %950
        %952 = vrot.lane.b32.xlu0 %v943, 123
        %v953 = vpop.permute.xlu0 %952
        %954 = vrot.lane.b32.xlu0 %v944, 123
        %v955 = vpop.permute.xlu0 %954
        %956 = vrot.lane.b32.xlu0 %v945, 123
        %v957 = vpop.permute.xlu0 %956
        %v962 = vadd.f32 %v922, %v951
        %v963 = vadd.f32 %v923, %v953
        %v964 = vadd.f32 %v924, %v955
        %v965 = vadd.f32 %v925, %v957
        %966 = vset.pattern.permute.xlu0 6
        %967 = vperm.xlu0 %966, %v727
        %v968 = vpop.permute.xlu0 %967
        %970 = vset.pattern.permute.xlu0 6
        %971 = vperm.xlu0 %970, %v728
        %v972 = vpop.permute.xlu0 %971
        %974 = vset.pattern.permute.xlu0 6
        %975 = vperm.xlu0 %974, %v729
        %v976 = vpop.permute.xlu0 %975
        %978 = vset.pattern.permute.xlu0 6
        %979 = vperm.xlu0 %978, %v730
        %v980 = vpop.permute.xlu0 %979
        %v982 = vmul.f32 %v968, %v756
        %v983 = vmul.f32 %v972, %v756
        %v984 = vmul.f32 %v976, %v756
        %v985 = vmul.f32 %v980, %v756
        %990 = vrot.lane.b32.xlu0 %v982, 122
        %v991 = vpop.permute.xlu0 %990
        %992 = vrot.lane.b32.xlu0 %v983, 122
        %v993 = vpop.permute.xlu0 %992
        %994 = vrot.lane.b32.xlu0 %v984, 122
        %v995 = vpop.permute.xlu0 %994
        %996 = vrot.lane.b32.xlu0 %v985, 122
        %v997 = vpop.permute.xlu0 %996
        %v1002 = vadd.f32 %v962, %v991
        %v1003 = vadd.f32 %v963, %v993
        %v1004 = vadd.f32 %v964, %v995
        %v1005 = vadd.f32 %v965, %v997
        %1007 = vset.pattern.permute.xlu0 0
        %1008 = vperm.xlu0 %1007, %v731
        %v1009 = vpop.permute.xlu0 %1008
        %1012 = vset.pattern.permute.xlu0 0
        %1013 = vperm.xlu0 %1012, %v732
        %v1014 = vpop.permute.xlu0 %1013
        %1017 = vset.pattern.permute.xlu0 0
        %1018 = vperm.xlu0 %1017, %v733
        %v1019 = vpop.permute.xlu0 %1018
        %1022 = vset.pattern.permute.xlu0 0
        %1023 = vperm.xlu0 %1022, %v734
        %v1024 = vpop.permute.xlu0 %1023
        %v1026 = vadd.f32 %v1002, %v1009
        %v1027 = vadd.f32 %v1003, %v1014
        %v1028 = vadd.f32 %v1004, %v1019
        %v1029 = vadd.f32 %v1005, %v1024
        %v1030 = vtanh.pop %v1026
        %v1031 = vtanh.pop %v1027
        %v1032 = vtanh.pop %v1028
        %v1033 = vtanh.pop %v1029
        %v1034 = vlaneseq
        %v1035 = vshrl.u32 %v1034, 7
        %v1036 = vadd.s32 %v1035, 8
        %v1037 = vadd.s32 %v1035, 16
        %v1038 = vadd.s32 %v1035, 24
        %v1039 = vadd.s32 %v1035, 32
        %v1040 = vadd.s32 %v1035, 40
        %v1041 = vadd.s32 %v1035, 48
        %v1042 = vadd.s32 %v1035, 56
        %v1043 = vadd.s32 %v1035, 64
        %v1044 = vadd.s32 %v1035, 72
        %v1045 = vadd.s32 %v1035, 80
        %v1046 = vadd.s32 %v1035, 88
        %v1047 = vadd.s32 %v1035, 96
        %v1048 = vadd.s32 %v1035, 104
        %v1049 = vadd.s32 %v1035, 112
        %v1050 = vadd.s32 %v1035, 120
        %v1051 = vlaneseq
        %v1052 = vand.u32 %v1051, 127
        %v1053 = vmul.u32 %v1052, 2
        %vm1054 = vcmp.eq.s32.totalorder %v1035, %v1053
        %vm1055 = vcmp.eq.s32.totalorder %v1036, %v1053
        %vm1056 = vcmp.eq.s32.totalorder %v1037, %v1053
        %vm1057 = vcmp.eq.s32.totalorder %v1038, %v1053
        %vm1058 = vcmp.eq.s32.totalorder %v1039, %v1053
        %vm1059 = vcmp.eq.s32.totalorder %v1040, %v1053
        %vm1060 = vcmp.eq.s32.totalorder %v1041, %v1053
        %vm1061 = vcmp.eq.s32.totalorder %v1042, %v1053
        %vm1062 = vcmp.eq.s32.totalorder %v1043, %v1053
        %vm1063 = vcmp.eq.s32.totalorder %v1044, %v1053
        %vm1064 = vcmp.eq.s32.totalorder %v1045, %v1053
        %vm1065 = vcmp.eq.s32.totalorder %v1046, %v1053
        %vm1066 = vcmp.eq.s32.totalorder %v1047, %v1053
        %vm1067 = vcmp.eq.s32.totalorder %v1048, %v1053
        %vm1068 = vcmp.eq.s32.totalorder %v1049, %v1053
        %vm1069 = vcmp.eq.s32.totalorder %v1050, %v1053
        %v1070 = vadd.s32 %v1053, 1
        %vm1071 = vcmp.eq.s32.totalorder %v1035, %v1070
        %vm1072 = vcmp.eq.s32.totalorder %v1036, %v1070
        %vm1073 = vcmp.eq.s32.totalorder %v1037, %v1070
        %vm1074 = vcmp.eq.s32.totalorder %v1038, %v1070
        %vm1075 = vcmp.eq.s32.totalorder %v1039, %v1070
        %vm1076 = vcmp.eq.s32.totalorder %v1040, %v1070
        %vm1077 = vcmp.eq.s32.totalorder %v1041, %v1070
        %vm1078 = vcmp.eq.s32.totalorder %v1042, %v1070
        %vm1079 = vcmp.eq.s32.totalorder %v1043, %v1070
        %vm1080 = vcmp.eq.s32.totalorder %v1044, %v1070
        %vm1081 = vcmp.eq.s32.totalorder %v1045, %v1070
        %vm1082 = vcmp.eq.s32.totalorder %v1046, %v1070
        %vm1083 = vcmp.eq.s32.totalorder %v1047, %v1070
        %vm1084 = vcmp.eq.s32.totalorder %v1048, %v1070
        %vm1085 = vcmp.eq.s32.totalorder %v1049, %v1070
        %vm1086 = vcmp.eq.s32.totalorder %v1050, %v1070
        %vm1087 = vmor %vm1054, %vm1071
        %vm1088 = vmor %vm1055, %vm1072
        %vm1089 = vmor %vm1056, %vm1073
        %vm1090 = vmor %vm1057, %vm1074
        %vm1091 = vmor %vm1058, %vm1075
        %vm1092 = vmor %vm1059, %vm1076
        %vm1093 = vmor %vm1060, %vm1077
        %vm1094 = vmor %vm1061, %vm1078
        %vm1095 = vmor %vm1062, %vm1079
        %vm1096 = vmor %vm1063, %vm1080
        %vm1097 = vmor %vm1064, %vm1081
        %vm1098 = vmor %vm1065, %vm1082
        %vm1099 = vmor %vm1066, %vm1083
        %vm1100 = vmor %vm1067, %vm1084
        %vm1101 = vmor %vm1068, %vm1085
        %vm1102 = vmor %vm1069, %vm1086
        %v1103 = vsel %vm1087, 0.5, 0.0
        %v1104 = vsel %vm1088, 0.5, 0.0
        %v1105 = vsel %vm1089, 0.5, 0.0
        %v1106 = vsel %vm1090, 0.5, 0.0
        %v1107 = vsel %vm1091, 0.5, 0.0
        %v1108 = vsel %vm1092, 0.5, 0.0
        %v1109 = vsel %vm1093, 0.5, 0.0
        %v1110 = vsel %vm1094, 0.5, 0.0
        %v1111 = vsel %vm1095, 0.5, 0.0
        %v1112 = vsel %vm1096, 0.5, 0.0
        %v1113 = vsel %vm1097, 0.5, 0.0
        %v1114 = vsel %vm1098, 0.5, 0.0
        %v1115 = vsel %vm1099, 0.5, 0.0
        %v1116 = vsel %vm1100, 0.5, 0.0
        %v1117 = vsel %vm1101, 0.5, 0.0
        %v1118 = vsel %vm1102, 0.5, 0.0
        %vm1119 = vcmask 998400
        %v1121 = vsel %vm1119, %v1030, 0
        %v1124 = vsel %vm1119, %v1031, 0
        %v1127 = vsel %vm1119, %v1032, 0
        %v1130 = vsel %vm1119, %v1033, 0
        %vm1132 = vcmask 1041408
        %v1134 = vsel %vm1132, %v1118, 0
        %1136 = vmatpush.msra.mxu0 %v1134
        %1137 = vmatpush.msra.mxu0 %v1117
        %1138 = vmatpush.msra.mxu0 %v1116
        %1139 = vmatpush.msra.mxu0 %v1115
        %1140 = vmatpush.msra.mxu0 %v1114
        %1141 = vmatpush.msra.mxu0 %v1113
        %1142 = vmatpush.msra.mxu0 %v1112
        %1143 = vmatpush.msra.mxu0 %v1111
        %1144 = vmatpush.msra.mxu0 %v1110
        %1145 = vmatpush.msra.mxu0 %v1109
        %1146 = vmatpush.msra.mxu0 %v1108
        %1147 = vmatpush.msra.mxu0 %v1107
        %1148 = vmatpush.msra.mxu0 %v1106
        %1149 = vmatpush.msra.mxu0 %v1105
        %1150 = vmatpush.msra.mxu0 %v1104
        %1151 = vmatpush.msra.mxu0 %v1103
        %1152 = vmatmul.f32.gmra.mxu0 %v1121
        %v1153 = vpop.f32.mrf.mxu0
        %v1154 = vadd.f32 0.0, %v1153
        %1155 = vmatmul.f32.gmra.mxu0 %v1124
        %v1156 = vpop.f32.mrf.mxu0
        %v1157 = vadd.f32 0.0, %v1156
        %1158 = vmatmul.f32.gmra.mxu0 %v1127
        %v1159 = vpop.f32.mrf.mxu0
        %v1160 = vadd.f32 0.0, %v1159
        %1161 = vmatmul.f32.gmra.mxu0 %v1130
        %v1162 = vpop.f32.mrf.mxu0
        %v1163 = vadd.f32 0.0, %v1162
        %1164 = vdwg.mxu0
        %v1165 = vld [vmem:[#allocation8] sm:$0xff]
        %v1166 = vld [vmem:[#allocation8 + $0x8] sm:$0xff]
        %v1167 = vld [vmem:[#allocation8 + $0x10] sm:$0xff]
        %v1168 = vld [vmem:[#allocation8 + $0x18] sm:$0xff]
        %v1169 = vld [vmem:[#allocation8 + $0x20] sm:$0xff]
        %v1170 = vld [vmem:[#allocation8 + $0x28] sm:$0xff]
        %v1171 = vld [vmem:[#allocation8 + $0x30] sm:$0xff]
        %v1172 = vld [vmem:[#allocation8 + $0x38] sm:$0xff]
        %v1173 = vld [vmem:[#allocation8 + $0x40] sm:$0xff]
        %v1174 = vld [vmem:[#allocation8 + $0x48] sm:$0xff]
        %v1175 = vld [vmem:[#allocation8 + $0x50] sm:$0xff]
        %v1176 = vld [vmem:[#allocation8 + $0x58] sm:$0xff]
        %v1177 = vld [vmem:[#allocation8 + $0x60] sm:$0xff]
        %v1178 = vld [vmem:[#allocation8 + $0x68] sm:$0xff]
        %v1179 = vld [vmem:[#allocation8 + $0x70] sm:$0xff]
        %v1180 = vld [vmem:[#allocation8 + $0x78] sm:$0xff]
        %v1181 = vld [vmem:[%s4] sm:$0xff]
        %v1182 = vld [vmem:[%s4 + $0x8] sm:$0xff]
        %v1183 = vld [vmem:[%s4 + $0x10] sm:$0xff]
        %v1184 = vld [vmem:[%s4 + $0x18] sm:$0xff]
        %v1185 = vld [vmem:[%s4 + $0x20] sm:$0xff]
        %v1186 = vld [vmem:[%s4 + $0x28] sm:$0xff]
        %v1187 = vld [vmem:[%s4 + $0x30] sm:$0xff]
        %v1188 = vld [vmem:[%s4 + $0x38] sm:$0xff]
        %1193 = vrot.lane.b32.xlu0 %v1154, 127
        %v1194 = vpop.permute.xlu0 %1193
        %1195 = vrot.lane.b32.xlu0 %v1157, 127
        %v1196 = vpop.permute.xlu0 %1195
        %1197 = vrot.lane.b32.xlu0 %v1160, 127
        %v1198 = vpop.permute.xlu0 %1197
        %1199 = vrot.lane.b32.xlu0 %v1163, 127
        %v1200 = vpop.permute.xlu0 %1199
        %1205 = vrot.lane.b32.xlu0 %v1154, 126
        %v1206 = vpop.permute.xlu0 %1205
        %1207 = vrot.lane.b32.xlu0 %v1157, 126
        %v1208 = vpop.permute.xlu0 %1207
        %1209 = vrot.lane.b32.xlu0 %v1160, 126
        %v1210 = vpop.permute.xlu0 %1209
        %1211 = vrot.lane.b32.xlu0 %v1163, 126
        %v1212 = vpop.permute.xlu0 %1211
        %1217 = vrot.lane.b32.xlu0 %v1154, 125
        %v1218 = vpop.permute.xlu0 %1217
        %1219 = vrot.lane.b32.xlu0 %v1157, 125
        %v1220 = vpop.permute.xlu0 %1219
        %1221 = vrot.lane.b32.xlu0 %v1160, 125
        %v1222 = vpop.permute.xlu0 %1221
        %1223 = vrot.lane.b32.xlu0 %v1163, 125
        %v1224 = vpop.permute.xlu0 %1223
        %1229 = vrot.lane.b32.xlu0 %v1154, 124
        %v1230 = vpop.permute.xlu0 %1229
        %1231 = vrot.lane.b32.xlu0 %v1157, 124
        %v1232 = vpop.permute.xlu0 %1231
        %1233 = vrot.lane.b32.xlu0 %v1160, 124
        %v1234 = vpop.permute.xlu0 %1233
        %1235 = vrot.lane.b32.xlu0 %v1163, 124
        %v1236 = vpop.permute.xlu0 %1235
        %1241 = vrot.lane.b32.xlu0 %v1154, 123
        %v1242 = vpop.permute.xlu0 %1241
        %1243 = vrot.lane.b32.xlu0 %v1157, 123
        %v1244 = vpop.permute.xlu0 %1243
        %1245 = vrot.lane.b32.xlu0 %v1160, 123
        %v1246 = vpop.permute.xlu0 %1245
        %1247 = vrot.lane.b32.xlu0 %v1163, 123
        %v1248 = vpop.permute.xlu0 %1247
        %1253 = vrot.lane.b32.xlu0 %v1154, 122
        %v1254 = vpop.permute.xlu0 %1253
        %1255 = vrot.lane.b32.xlu0 %v1157, 122
        %v1256 = vpop.permute.xlu0 %1255
        %1257 = vrot.lane.b32.xlu0 %v1160, 122
        %v1258 = vpop.permute.xlu0 %1257
        %1259 = vrot.lane.b32.xlu0 %v1163, 122
        %v1260 = vpop.permute.xlu0 %1259
        %1266 = vset.pattern.permute.xlu0 0
        %1267 = vperm.xlu0 %1266, %v1181
        %v1268 = vpop.permute.xlu0 %1267
        %1271 = vset.pattern.permute.xlu0 0
        %1272 = vperm.xlu0 %1271, %v1182
        %v1273 = vpop.permute.xlu0 %1272
        %1276 = vset.pattern.permute.xlu0 0
        %1277 = vperm.xlu0 %1276, %v1183
        %v1278 = vpop.permute.xlu0 %1277
        %1281 = vset.pattern.permute.xlu0 0
        %1282 = vperm.xlu0 %1281, %v1184
        %v1283 = vpop.permute.xlu0 %1282
        %1286 = vset.pattern.permute.xlu0 0
        %1287 = vperm.xlu0 %1286, %v1185
        %v1288 = vpop.permute.xlu0 %1287
        %1291 = vset.pattern.permute.xlu0 0
        %1292 = vperm.xlu0 %1291, %v1186
        %v1293 = vpop.permute.xlu0 %1292
        %1296 = vset.pattern.permute.xlu0 0
        %1297 = vperm.xlu0 %1296, %v1187
        %v1298 = vpop.permute.xlu0 %1297
        %1301 = vset.pattern.permute.xlu0 0
        %1302 = vperm.xlu0 %1301, %v1188
        %v1303 = vpop.permute.xlu0 %1302
        %vm1305 = vcmask 785408
        %v1307 = vsel %vm1305, %v1166, 0
        %v1310 = vsel %vm1305, %v1168, 0
        %v1313 = vsel %vm1305, %v1170, 0
        %v1316 = vsel %vm1305, %v1172, 0
        %v1319 = vsel %vm1305, %v1174, 0
        %v1322 = vsel %vm1305, %v1176, 0
        %v1325 = vsel %vm1305, %v1178, 0
        %v1328 = vsel %vm1305, %v1180, 0
        %1330 = vmatpush.msra.mxu0 %v1224
        %1331 = vmatpush.msra.mxu0 %v1222
        %1332 = vmatpush.msra.mxu0 %v1220
        %1333 = vmatpush.msra.mxu0 %v1218
        %1334 = vmatpush.msra.mxu0 %v1212
        %1335 = vmatpush.msra.mxu0 %v1210
        %1336 = vmatpush.msra.mxu0 %v1208
        %1337 = vmatpush.msra.mxu0 %v1206
        %1338 = vmatpush.msra.mxu0 %v1200
        %1339 = vmatpush.msra.mxu0 %v1198
        %1340 = vmatpush.msra.mxu0 %v1196
        %1341 = vmatpush.msra.mxu0 %v1194
        %1342 = vmatpush.msra.mxu0 %v1163
        %1343 = vmatpush.msra.mxu0 %v1160
        %1344 = vmatpush.msra.mxu0 %v1157
        %1345 = vmatpush.msra.mxu0 %v1154
        %1346 = vmatmul.f32.gmra.mxu0 %v1165
        %v1347 = vpop.f32.mrf.mxu0
        %v1348 = vadd.f32 %v1268, %v1347
        %1349 = vmatmul.f32.gmra.mxu0 %v1167
        %v1350 = vpop.f32.mrf.mxu0
        %v1351 = vadd.f32 %v1273, %v1350
        %1352 = vmatmul.f32.gmra.mxu0 %v1169
        %v1353 = vpop.f32.mrf.mxu0
        %v1354 = vadd.f32 %v1278, %v1353
        %1355 = vmatmul.f32.gmra.mxu0 %v1171
        %v1356 = vpop.f32.mrf.mxu0
        %v1357 = vadd.f32 %v1283, %v1356
        %1358 = vmatmul.f32.gmra.mxu0 %v1173
        %v1359 = vpop.f32.mrf.mxu0
        %v1360 = vadd.f32 %v1288, %v1359
        %1361 = vmatmul.f32.gmra.mxu0 %v1175
        %v1362 = vpop.f32.mrf.mxu0
        %v1363 = vadd.f32 %v1293, %v1362
        %1364 = vmatmul.f32.gmra.mxu0 %v1177
        %v1365 = vpop.f32.mrf.mxu0
        %v1366 = vadd.f32 %v1298, %v1365
        %1367 = vmatmul.f32.gmra.mxu0 %v1179
        %v1368 = vpop.f32.mrf.mxu0
        %v1369 = vadd.f32 %v1303, %v1368
        %1370 = vdwg.mxu0
        %1371 = vmatpush.msra.mxu0 0.0
        %1372 = vmatpush.msra.mxu0 0.0
        %1373 = vmatpush.msra.mxu0 0.0
        %1374 = vmatpush.msra.mxu0 0.0
        %1375 = vmatpush.msra.mxu0 %v1260
        %1376 = vmatpush.msra.mxu0 %v1258
        %1377 = vmatpush.msra.mxu0 %v1256
        %1378 = vmatpush.msra.mxu0 %v1254
        %1379 = vmatpush.msra.mxu0 %v1248
        %1380 = vmatpush.msra.mxu0 %v1246
        %1381 = vmatpush.msra.mxu0 %v1244
        %1382 = vmatpush.msra.mxu0 %v1242
        %1383 = vmatpush.msra.mxu0 %v1236
        %1384 = vmatpush.msra.mxu0 %v1234
        %1385 = vmatpush.msra.mxu0 %v1232
        %1386 = vmatpush.msra.mxu0 %v1230
        %1387 = vmatmul.f32.gmra.mxu0 %v1307
        %v1388 = vpop.f32.mrf.mxu0
        %v1389 = vadd.f32 %v1348, %v1388
        %1390 = vmatmul.f32.gmra.mxu0 %v1310
        %v1391 = vpop.f32.mrf.mxu0
        %v1392 = vadd.f32 %v1351, %v1391
        %1393 = vmatmul.f32.gmra.mxu0 %v1313
        %v1394 = vpop.f32.mrf.mxu0
        %v1395 = vadd.f32 %v1354, %v1394
        %1396 = vmatmul.f32.gmra.mxu0 %v1316
        %v1397 = vpop.f32.mrf.mxu0
        %v1398 = vadd.f32 %v1357, %v1397
        %1399 = vmatmul.f32.gmra.mxu0 %v1319
        %v1400 = vpop.f32.mrf.mxu0
        %v1401 = vadd.f32 %v1360, %v1400
        %1402 = vmatmul.f32.gmra.mxu0 %v1322
        %v1403 = vpop.f32.mrf.mxu0
        %v1404 = vadd.f32 %v1363, %v1403
        %1405 = vmatmul.f32.gmra.mxu0 %v1325
        %v1406 = vpop.f32.mrf.mxu0
        %v1407 = vadd.f32 %v1366, %v1406
        %1408 = vmatmul.f32.gmra.mxu0 %v1328
        %v1409 = vpop.f32.mrf.mxu0
        %v1410 = vadd.f32 %v1369, %v1409
        %1411 = vdwg.mxu0
        %v1412 = vtanh.pop %v1389
        %v1413 = vtanh.pop %v1392
        %v1414 = vtanh.pop %v1395
        %v1415 = vtanh.pop %v1398
        %v1416 = vtanh.pop %v1401
        %v1417 = vtanh.pop %v1404
        %v1418 = vtanh.pop %v1407
        %v1419 = vtanh.pop %v1410
        %vm1420 = vcmask 449536
        %v1422 = vsel %vm1420, %v1412, 0
        %v1425 = vsel %vm1420, %v1413, 0
        %v1428 = vsel %vm1420, %v1414, 0
        %v1431 = vsel %vm1420, %v1415, 0
        %v1434 = vsel %vm1420, %v1416, 0
        %v1437 = vsel %vm1420, %v1417, 0
        %v1440 = vsel %vm1420, %v1418, 0
        %v1443 = vsel %vm1420, %v1419, 0
        %vm1445 = vcmask 1046528
        %v1447 = vsel %vm1445, %v1109, 0
        %1449 = vmatpush.msra.mxu0 0.0
        %1450 = vmatpush.msra.mxu0 0.0
        %1451 = vmatpush.msra.mxu0 0.0
        %1452 = vmatpush.msra.mxu0 0.0
        %1453 = vmatpush.msra.mxu0 0.0
        %1454 = vmatpush.msra.mxu0 0.0
        %1455 = vmatpush.msra.mxu0 0.0
        %1456 = vmatpush.msra.mxu0 0.0
        %1457 = vmatpush.msra.mxu0 0.0
        %1458 = vmatpush.msra.mxu0 %v1447
        %1459 = vmatpush.msra.mxu0 %v1108
        %1460 = vmatpush.msra.mxu0 %v1107
        %1461 = vmatpush.msra.mxu0 %v1106
        %1462 = vmatpush.msra.mxu0 %v1105
        %1463 = vmatpush.msra.mxu0 %v1104
        %1464 = vmatpush.msra.mxu0 %v1103
        %1465 = vmatmul.f32.gmra.mxu0 %v1422
        %v1466 = vpop.f32.mrf.mxu0
        %v1467 = vadd.f32 0.0, %v1466
        %1468 = vmatmul.f32.gmra.mxu0 %v1425
        %v1469 = vpop.f32.mrf.mxu0
        %v1470 = vadd.f32 0.0, %v1469
        %1471 = vmatmul.f32.gmra.mxu0 %v1428
        %v1472 = vpop.f32.mrf.mxu0
        %v1473 = vadd.f32 0.0, %v1472
        %1474 = vmatmul.f32.gmra.mxu0 %v1431
        %v1475 = vpop.f32.mrf.mxu0
        %v1476 = vadd.f32 0.0, %v1475
        %1477 = vmatmul.f32.gmra.mxu0 %v1434
        %v1478 = vpop.f32.mrf.mxu0
        %v1479 = vadd.f32 0.0, %v1478
        %1480 = vmatmul.f32.gmra.mxu0 %v1437
        %v1481 = vpop.f32.mrf.mxu0
        %v1482 = vadd.f32 0.0, %v1481
        %1483 = vmatmul.f32.gmra.mxu0 %v1440
        %v1484 = vpop.f32.mrf.mxu0
        %v1485 = vadd.f32 0.0, %v1484
        %1486 = vmatmul.f32.gmra.mxu0 %v1443
        %v1487 = vpop.f32.mrf.mxu0
        %v1488 = vadd.f32 0.0, %v1487
        %1489 = vdwg.mxu0
        %v1490 = vld [vmem:[%s5] sm:$0xff]
        %v1491 = vld [vmem:[%s5 + $0x8] sm:$0xff]
        %v1492 = vld [vmem:[%s5 + $0x10] sm:$0xff]
        %v1493 = vld [vmem:[%s5 + $0x18] sm:$0xff]
        %v1494 = vld [vmem:[%s5 + $0x20] sm:$0xff]
        %v1495 = vld [vmem:[%s5 + $0x28] sm:$0xff]
        %v1496 = vld [vmem:[%s5 + $0x30] sm:$0xff]
        %v1497 = vld [vmem:[%s5 + $0x38] sm:$0xff]
        %v1498 = vld [vmem:[%s5 + $0x40] sm:$0xff]
        %v1499 = vld [vmem:[%s5 + $0x48] sm:$0xff]
        %v1500 = vld [vmem:[%s5 + $0x50] sm:$0xff]
        %v1501 = vld [vmem:[%s5 + $0x58] sm:$0xff]
        %v1502 = vld [vmem:[%s5 + $0x60] sm:$0xff]
        %v1503 = vld [vmem:[%s5 + $0x68] sm:$0xff]
        %v1504 = vld [vmem:[%s5 + $0x70] sm:$0xff]
        %v1505 = vld [vmem:[%s5 + $0x78] sm:$0xff]
        %v1506 = vld [vmem:[%s5 + $0x80] sm:$0xff]
        %v1507 = vld [vmem:[%s5 + $0x88] sm:$0xff]
        %v1508 = vld [vmem:[%s5 + $0x90] sm:$0xff]
        %v1509 = vld [vmem:[%s5 + $0x98] sm:$0xff]
        %v1510 = vld [vmem:[%s5 + $0xa0] sm:$0xff]
        %v1511 = vld [vmem:[%s5 + $0xa8] sm:$0xff]
        %v1512 = vld [vmem:[%s5 + $0xb0] sm:$0xff]
        %v1513 = vld [vmem:[%s5 + $0xb8] sm:$0xff]
        %v1514 = vld [vmem:[%s5 + $0xc0] sm:$0xff]
        %v1515 = vld [vmem:[%s5 + $0xc8] sm:$0xff]
        %v1516 = vld [vmem:[%s5 + $0xd0] sm:$0xff]
        %v1517 = vld [vmem:[%s5 + $0xd8] sm:$0xff]
        %v1518 = vld [vmem:[%s5 + $0xe0] sm:$0xff]
        %v1519 = vld [vmem:[%s5 + $0xe8] sm:$0xff]
        %v1520 = vld [vmem:[%s5 + $0xf0] sm:$0xff]
        %v1521 = vld [vmem:[%s5 + $0xf8] sm:$0xff]
        %v1522 = vld [vmem:[%s5 + $0x100] sm:$0xff]
        %v1523 = vld [vmem:[%s5 + $0x108] sm:$0xff]
        %v1524 = vld [vmem:[%s5 + $0x110] sm:$0xff]
        %v1525 = vld [vmem:[%s5 + $0x118] sm:$0xff]
        %v1526 = vld [vmem:[%s5 + $0x120] sm:$0xff]
        %v1527 = vld [vmem:[%s5 + $0x128] sm:$0xff]
        %v1528 = vld [vmem:[%s5 + $0x130] sm:$0xff]
        %v1529 = vld [vmem:[%s5 + $0x138] sm:$0xff]
        %v1530 = vld [vmem:[%s5 + $0x140] sm:$0xff]
        %v1531 = vld [vmem:[%s5 + $0x148] sm:$0xff]
        %v1532 = vld [vmem:[%s5 + $0x150] sm:$0xff]
        %v1533 = vld [vmem:[%s5 + $0x158] sm:$0xff]
        %v1534 = vld [vmem:[%s5 + $0x160] sm:$0xff]
        %v1535 = vld [vmem:[%s5 + $0x168] sm:$0xff]
        %v1536 = vld [vmem:[%s5 + $0x170] sm:$0xff]
        %v1537 = vld [vmem:[%s5 + $0x178] sm:$0xff]
        %v1538 = vld [vmem:[%s6] sm:$0xff]
        %v1539 = vld [vmem:[%s6 + $0x8] sm:$0xff]
        %v1540 = vld [vmem:[%s6 + $0x10] sm:$0xff]
        %v1541 = vld [vmem:[%s6 + $0x18] sm:$0xff]
        %v1542 = vld [vmem:[%s6 + $0x20] sm:$0xff]
        %v1543 = vld [vmem:[%s6 + $0x28] sm:$0xff]
        %v1544 = vld [vmem:[%s6 + $0x30] sm:$0xff]
        %v1545 = vld [vmem:[%s6 + $0x38] sm:$0xff]
        %v1546 = vld [vmem:[%s6 + $0x40] sm:$0xff]
        %v1547 = vld [vmem:[%s6 + $0x48] sm:$0xff]
        %v1548 = vld [vmem:[%s6 + $0x50] sm:$0xff]
        %v1549 = vld [vmem:[%s6 + $0x58] sm:$0xff]
        %1558 = vrot.lane.b32.xlu0 %v1467, 127
        %v1559 = vpop.permute.xlu0 %1558
        %1560 = vrot.lane.b32.xlu0 %v1470, 127
        %v1561 = vpop.permute.xlu0 %1560
        %1562 = vrot.lane.b32.xlu0 %v1473, 127
        %v1563 = vpop.permute.xlu0 %1562
        %1564 = vrot.lane.b32.xlu0 %v1476, 127
        %v1565 = vpop.permute.xlu0 %1564
        %1566 = vrot.lane.b32.xlu0 %v1479, 127
        %v1567 = vpop.permute.xlu0 %1566
        %1568 = vrot.lane.b32.xlu0 %v1482, 127
        %v1569 = vpop.permute.xlu0 %1568
        %1570 = vrot.lane.b32.xlu0 %v1485, 127
        %v1571 = vpop.permute.xlu0 %1570
        %1572 = vrot.lane.b32.xlu0 %v1488, 127
        %v1573 = vpop.permute.xlu0 %1572
        %1582 = vrot.lane.b32.xlu0 %v1467, 126
        %v1583 = vpop.permute.xlu0 %1582
        %1584 = vrot.lane.b32.xlu0 %v1470, 126
        %v1585 = vpop.permute.xlu0 %1584
        %1586 = vrot.lane.b32.xlu0 %v1473, 126
        %v1587 = vpop.permute.xlu0 %1586
        %1588 = vrot.lane.b32.xlu0 %v1476, 126
        %v1589 = vpop.permute.xlu0 %1588
        %1590 = vrot.lane.b32.xlu0 %v1479, 126
        %v1591 = vpop.permute.xlu0 %1590
        %1592 = vrot.lane.b32.xlu0 %v1482, 126
        %v1593 = vpop.permute.xlu0 %1592
        %1594 = vrot.lane.b32.xlu0 %v1485, 126
        %v1595 = vpop.permute.xlu0 %1594
        %1596 = vrot.lane.b32.xlu0 %v1488, 126
        %v1597 = vpop.permute.xlu0 %1596
        %1606 = vrot.lane.b32.xlu0 %v1467, 125
        %v1607 = vpop.permute.xlu0 %1606
        %1608 = vrot.lane.b32.xlu0 %v1470, 125
        %v1609 = vpop.permute.xlu0 %1608
        %1610 = vrot.lane.b32.xlu0 %v1473, 125
        %v1611 = vpop.permute.xlu0 %1610
        %1612 = vrot.lane.b32.xlu0 %v1476, 125
        %v1613 = vpop.permute.xlu0 %1612
        %1614 = vrot.lane.b32.xlu0 %v1479, 125
        %v1615 = vpop.permute.xlu0 %1614
        %1616 = vrot.lane.b32.xlu0 %v1482, 125
        %v1617 = vpop.permute.xlu0 %1616
        %1618 = vrot.lane.b32.xlu0 %v1485, 125
        %v1619 = vpop.permute.xlu0 %1618
        %1620 = vrot.lane.b32.xlu0 %v1488, 125
        %v1621 = vpop.permute.xlu0 %1620
        %1630 = vrot.lane.b32.xlu0 %v1467, 124
        %v1631 = vpop.permute.xlu0 %1630
        %1632 = vrot.lane.b32.xlu0 %v1470, 124
        %v1633 = vpop.permute.xlu0 %1632
        %1634 = vrot.lane.b32.xlu0 %v1473, 124
        %v1635 = vpop.permute.xlu0 %1634
        %1636 = vrot.lane.b32.xlu0 %v1476, 124
        %v1637 = vpop.permute.xlu0 %1636
        %1638 = vrot.lane.b32.xlu0 %v1479, 124
        %v1639 = vpop.permute.xlu0 %1638
        %1640 = vrot.lane.b32.xlu0 %v1482, 124
        %v1641 = vpop.permute.xlu0 %1640
        %1642 = vrot.lane.b32.xlu0 %v1485, 124
        %v1643 = vpop.permute.xlu0 %1642
        %1644 = vrot.lane.b32.xlu0 %v1488, 124
        %v1645 = vpop.permute.xlu0 %1644
        %1654 = vrot.lane.b32.xlu0 %v1467, 123
        %v1655 = vpop.permute.xlu0 %1654
        %1656 = vrot.lane.b32.xlu0 %v1470, 123
        %v1657 = vpop.permute.xlu0 %1656
        %1658 = vrot.lane.b32.xlu0 %v1473, 123
        %v1659 = vpop.permute.xlu0 %1658
        %1660 = vrot.lane.b32.xlu0 %v1476, 123
        %v1661 = vpop.permute.xlu0 %1660
        %1662 = vrot.lane.b32.xlu0 %v1479, 123
        %v1663 = vpop.permute.xlu0 %1662
        %1664 = vrot.lane.b32.xlu0 %v1482, 123
        %v1665 = vpop.permute.xlu0 %1664
        %1666 = vrot.lane.b32.xlu0 %v1485, 123
        %v1667 = vpop.permute.xlu0 %1666
        %1668 = vrot.lane.b32.xlu0 %v1488, 123
        %v1669 = vpop.permute.xlu0 %1668
        %1678 = vrot.lane.b32.xlu0 %v1467, 122
        %v1679 = vpop.permute.xlu0 %1678
        %1680 = vrot.lane.b32.xlu0 %v1470, 122
        %v1681 = vpop.permute.xlu0 %1680
        %1682 = vrot.lane.b32.xlu0 %v1473, 122
        %v1683 = vpop.permute.xlu0 %1682
        %1684 = vrot.lane.b32.xlu0 %v1476, 122
        %v1685 = vpop.permute.xlu0 %1684
        %1686 = vrot.lane.b32.xlu0 %v1479, 122
        %v1687 = vpop.permute.xlu0 %1686
        %1688 = vrot.lane.b32.xlu0 %v1482, 122
        %v1689 = vpop.permute.xlu0 %1688
        %1690 = vrot.lane.b32.xlu0 %v1485, 122
        %v1691 = vpop.permute.xlu0 %1690
        %1692 = vrot.lane.b32.xlu0 %v1488, 122
        %v1693 = vpop.permute.xlu0 %1692
        %1703 = vset.pattern.permute.xlu0 0
        %1704 = vperm.xlu0 %1703, %v1538
        %v1705 = vpop.permute.xlu0 %1704
        %1708 = vset.pattern.permute.xlu0 0
        %1709 = vperm.xlu0 %1708, %v1539
        %v1710 = vpop.permute.xlu0 %1709
        %1713 = vset.pattern.permute.xlu0 0
        %1714 = vperm.xlu0 %1713, %v1540
        %v1715 = vpop.permute.xlu0 %1714
        %1718 = vset.pattern.permute.xlu0 0
        %1719 = vperm.xlu0 %1718, %v1541
        %v1720 = vpop.permute.xlu0 %1719
        %1723 = vset.pattern.permute.xlu0 0
        %1724 = vperm.xlu0 %1723, %v1542
        %v1725 = vpop.permute.xlu0 %1724
        %1728 = vset.pattern.permute.xlu0 0
        %1729 = vperm.xlu0 %1728, %v1543
        %v1730 = vpop.permute.xlu0 %1729
        %1733 = vset.pattern.permute.xlu0 0
        %1734 = vperm.xlu0 %1733, %v1544
        %v1735 = vpop.permute.xlu0 %1734
        %1738 = vset.pattern.permute.xlu0 0
        %1739 = vperm.xlu0 %1738, %v1545
        %v1740 = vpop.permute.xlu0 %1739
        %1743 = vset.pattern.permute.xlu0 0
        %1744 = vperm.xlu0 %1743, %v1546
        %v1745 = vpop.permute.xlu0 %1744
        %1748 = vset.pattern.permute.xlu0 0
        %1749 = vperm.xlu0 %1748, %v1547
        %v1750 = vpop.permute.xlu0 %1749
        %1753 = vset.pattern.permute.xlu0 0
        %1754 = vperm.xlu0 %1753, %v1548
        %v1755 = vpop.permute.xlu0 %1754
        %1758 = vset.pattern.permute.xlu0 0
        %1759 = vperm.xlu0 %1758, %v1549
        %v1760 = vpop.permute.xlu0 %1759
        %vm1762 = vcmask 523264
        %v1764 = vsel %vm1762, %v1493, 0
        %v1767 = vsel %vm1762, %v1497, 0
        %v1770 = vsel %vm1762, %v1501, 0
        %v1773 = vsel %vm1762, %v1505, 0
        %v1776 = vsel %vm1762, %v1509, 0
        %v1779 = vsel %vm1762, %v1513, 0
        %v1782 = vsel %vm1762, %v1517, 0
        %v1785 = vsel %vm1762, %v1521, 0
        %v1788 = vsel %vm1762, %v1525, 0
        %v1791 = vsel %vm1762, %v1529, 0
        %v1794 = vsel %vm1762, %v1533, 0
        %v1797 = vsel %vm1762, %v1537, 0
        %1799 = vmatpush.msra.mxu0 %v1573
        %1800 = vmatpush.msra.mxu0 %v1571
        %1801 = vmatpush.msra.mxu0 %v1569
        %1802 = vmatpush.msra.mxu0 %v1567
        %1803 = vmatpush.msra.mxu0 %v1565
        %1804 = vmatpush.msra.mxu0 %v1563
        %1805 = vmatpush.msra.mxu0 %v1561
        %1806 = vmatpush.msra.mxu0 %v1559
        %1807 = vmatpush.msra.mxu0 %v1488
        %1808 = vmatpush.msra.mxu0 %v1485
        %1809 = vmatpush.msra.mxu0 %v1482
        %1810 = vmatpush.msra.mxu0 %v1479
        %1811 = vmatpush.msra.mxu0 %v1476
        %1812 = vmatpush.msra.mxu0 %v1473
        %1813 = vmatpush.msra.mxu0 %v1470
        %1814 = vmatpush.msra.mxu0 %v1467
        %1815 = vmatmul.f32.gmra.mxu0 %v1490
        %v1816 = vpop.f32.mrf.mxu0
        %v1817 = vadd.f32 %v1705, %v1816
        %1818 = vmatmul.f32.gmra.mxu0 %v1494
        %v1819 = vpop.f32.mrf.mxu0
        %v1820 = vadd.f32 %v1710, %v1819
        %1821 = vmatmul.f32.gmra.mxu0 %v1498
        %v1822 = vpop.f32.mrf.mxu0
        %v1823 = vadd.f32 %v1715, %v1822
        %1824 = vmatmul.f32.gmra.mxu0 %v1502
        %v1825 = vpop.f32.mrf.mxu0
        %v1826 = vadd.f32 %v1720, %v1825
        %1827 = vmatmul.f32.gmra.mxu0 %v1506
        %v1828 = vpop.f32.mrf.mxu0
        %v1829 = vadd.f32 %v1725, %v1828
        %1830 = vmatmul.f32.gmra.mxu0 %v1510
        %v1831 = vpop.f32.mrf.mxu0
        %v1832 = vadd.f32 %v1730, %v1831
        %1833 = vmatmul.f32.gmra.mxu0 %v1514
        %v1834 = vpop.f32.mrf.mxu0
        %v1835 = vadd.f32 %v1735, %v1834
        %1836 = vmatmul.f32.gmra.mxu0 %v1518
        %v1837 = vpop.f32.mrf.mxu0
        %v1838 = vadd.f32 %v1740, %v1837
        %1839 = vmatmul.f32.gmra.mxu0 %v1522
        %v1840 = vpop.f32.mrf.mxu0
        %v1841 = vadd.f32 %v1745, %v1840
        %1842 = vmatmul.f32.gmra.mxu0 %v1526
        %v1843 = vpop.f32.mrf.mxu0
        %v1844 = vadd.f32 %v1750, %v1843
        %1845 = vmatmul.f32.gmra.mxu0 %v1530
        %v1846 = vpop.f32.mrf.mxu0
        %v1847 = vadd.f32 %v1755, %v1846
        %1848 = vmatmul.f32.gmra.mxu0 %v1534
        %v1849 = vpop.f32.mrf.mxu0
        %v1850 = vadd.f32 %v1760, %v1849
        %1851 = vdwg.mxu0
        %1852 = vmatpush.msra.mxu0 %v1621
        %1853 = vmatpush.msra.mxu0 %v1619
        %1854 = vmatpush.msra.mxu0 %v1617
        %1855 = vmatpush.msra.mxu0 %v1615
        %1856 = vmatpush.msra.mxu0 %v1613
        %1857 = vmatpush.msra.mxu0 %v1611
        %1858 = vmatpush.msra.mxu0 %v1609
        %1859 = vmatpush.msra.mxu0 %v1607
        %1860 = vmatpush.msra.mxu0 %v1597
        %1861 = vmatpush.msra.mxu0 %v1595
        %1862 = vmatpush.msra.mxu0 %v1593
        %1863 = vmatpush.msra.mxu0 %v1591
        %1864 = vmatpush.msra.mxu0 %v1589
        %1865 = vmatpush.msra.mxu0 %v1587
        %1866 = vmatpush.msra.mxu0 %v1585
        %1867 = vmatpush.msra.mxu0 %v1583
        %1868 = vmatmul.f32.gmra.mxu0 %v1491
        %v1869 = vpop.f32.mrf.mxu0
        %v1870 = vadd.f32 %v1817, %v1869
        %1871 = vmatmul.f32.gmra.mxu0 %v1495
        %v1872 = vpop.f32.mrf.mxu0
        %v1873 = vadd.f32 %v1820, %v1872
        %1874 = vmatmul.f32.gmra.mxu0 %v1499
        %v1875 = vpop.f32.mrf.mxu0
        %v1876 = vadd.f32 %v1823, %v1875
        %1877 = vmatmul.f32.gmra.mxu0 %v1503
        %v1878 = vpop.f32.mrf.mxu0
        %v1879 = vadd.f32 %v1826, %v1878
        %1880 = vmatmul.f32.gmra.mxu0 %v1507
        %v1881 = vpop.f32.mrf.mxu0
        %v1882 = vadd.f32 %v1829, %v1881
        %1883 = vmatmul.f32.gmra.mxu0 %v1511
        %v1884 = vpop.f32.mrf.mxu0
        %v1885 = vadd.f32 %v1832, %v1884
        %1886 = vmatmul.f32.gmra.mxu0 %v1515
        %v1887 = vpop.f32.mrf.mxu0
        %v1888 = vadd.f32 %v1835, %v1887
        %1889 = vmatmul.f32.gmra.mxu0 %v1519
        %v1890 = vpop.f32.mrf.mxu0
        %v1891 = vadd.f32 %v1838, %v1890
        %1892 = vmatmul.f32.gmra.mxu0 %v1523
        %v1893 = vpop.f32.mrf.mxu0
        %v1894 = vadd.f32 %v1841, %v1893
        %1895 = vmatmul.f32.gmra.mxu0 %v1527
        %v1896 = vpop.f32.mrf.mxu0
        %v1897 = vadd.f32 %v1844, %v1896
        %1898 = vmatmul.f32.gmra.mxu0 %v1531
        %v1899 = vpop.f32.mrf.mxu0
        %v1900 = vadd.f32 %v1847, %v1899
        %1901 = vmatmul.f32.gmra.mxu0 %v1535
        %v1902 = vpop.f32.mrf.mxu0
        %v1903 = vadd.f32 %v1850, %v1902
        %1904 = vdwg.mxu0
        %1905 = vmatpush.msra.mxu0 %v1669
        %1906 = vmatpush.msra.mxu0 %v1667
        %1907 = vmatpush.msra.mxu0 %v1665
        %1908 = vmatpush.msra.mxu0 %v1663
        %1909 = vmatpush.msra.mxu0 %v1661
        %1910 = vmatpush.msra.mxu0 %v1659
        %1911 = vmatpush.msra.mxu0 %v1657
        %1912 = vmatpush.msra.mxu0 %v1655
        %1913 = vmatpush.msra.mxu0 %v1645
        %1914 = vmatpush.msra.mxu0 %v1643
        %1915 = vmatpush.msra.mxu0 %v1641
        %1916 = vmatpush.msra.mxu0 %v1639
        %1917 = vmatpush.msra.mxu0 %v1637
        %1918 = vmatpush.msra.mxu0 %v1635
        %1919 = vmatpush.msra.mxu0 %v1633
        %1920 = vmatpush.msra.mxu0 %v1631
        %1921 = vmatmul.f32.gmra.mxu0 %v1492
        %v1922 = vpop.f32.mrf.mxu0
        %v1923 = vadd.f32 %v1870, %v1922
        %1924 = vmatmul.f32.gmra.mxu0 %v1496
        %v1925 = vpop.f32.mrf.mxu0
        %v1926 = vadd.f32 %v1873, %v1925
        %1927 = vmatmul.f32.gmra.mxu0 %v1500
        %v1928 = vpop.f32.mrf.mxu0
        %v1929 = vadd.f32 %v1876, %v1928
        %1930 = vmatmul.f32.gmra.mxu0 %v1504
        %v1931 = vpop.f32.mrf.mxu0
        %v1932 = vadd.f32 %v1879, %v1931
        %1933 = vmatmul.f32.gmra.mxu0 %v1508
        %v1934 = vpop.f32.mrf.mxu0
        %v1935 = vadd.f32 %v1882, %v1934
        %1936 = vmatmul.f32.gmra.mxu0 %v1512
        %v1937 = vpop.f32.mrf.mxu0
        %v1938 = vadd.f32 %v1885, %v1937
        %1939 = vmatmul.f32.gmra.mxu0 %v1516
        %v1940 = vpop.f32.mrf.mxu0
        %v1941 = vadd.f32 %v1888, %v1940
        %1942 = vmatmul.f32.gmra.mxu0 %v1520
        %v1943 = vpop.f32.mrf.mxu0
        %v1944 = vadd.f32 %v1891, %v1943
        %1945 = vmatmul.f32.gmra.mxu0 %v1524
        %v1946 = vpop.f32.mrf.mxu0
        %v1947 = vadd.f32 %v1894, %v1946
        %1948 = vmatmul.f32.gmra.mxu0 %v1528
        %v1949 = vpop.f32.mrf.mxu0
        %v1950 = vadd.f32 %v1897, %v1949
        %1951 = vmatmul.f32.gmra.mxu0 %v1532
        %v1952 = vpop.f32.mrf.mxu0
        %v1953 = vadd.f32 %v1900, %v1952
        %1954 = vmatmul.f32.gmra.mxu0 %v1536
        %v1955 = vpop.f32.mrf.mxu0
        %v1956 = vadd.f32 %v1903, %v1955
        %1957 = vdwg.mxu0
        %1958 = vmatpush.msra.mxu0 0.0
        %1959 = vmatpush.msra.mxu0 0.0
        %1960 = vmatpush.msra.mxu0 0.0
        %1961 = vmatpush.msra.mxu0 0.0
        %1962 = vmatpush.msra.mxu0 0.0
        %1963 = vmatpush.msra.mxu0 0.0
        %1964 = vmatpush.msra.mxu0 0.0
        %1965 = vmatpush.msra.mxu0 0.0
        %1966 = vmatpush.msra.mxu0 %v1693
        %1967 = vmatpush.msra.mxu0 %v1691
        %1968 = vmatpush.msra.mxu0 %v1689
        %1969 = vmatpush.msra.mxu0 %v1687
        %1970 = vmatpush.msra.mxu0 %v1685
        %1971 = vmatpush.msra.mxu0 %v1683
        %1972 = vmatpush.msra.mxu0 %v1681
        %1973 = vmatpush.msra.mxu0 %v1679
        %1974 = vmatmul.f32.gmra.mxu0 %v1764
        %v1975 = vpop.f32.mrf.mxu0
        %v1976 = vadd.f32 %v1923, %v1975
        %1977 = vmatmul.f32.gmra.mxu0 %v1767
        %v1978 = vpop.f32.mrf.mxu0
        %v1979 = vadd.f32 %v1926, %v1978
        %1980 = vmatmul.f32.gmra.mxu0 %v1770
        %v1981 = vpop.f32.mrf.mxu0
        %v1982 = vadd.f32 %v1929, %v1981
        %1983 = vmatmul.f32.gmra.mxu0 %v1773
        %v1984 = vpop.f32.mrf.mxu0
        %v1985 = vadd.f32 %v1932, %v1984
        %1986 = vmatmul.f32.gmra.mxu0 %v1776
        %v1987 = vpop.f32.mrf.mxu0
        %v1988 = vadd.f32 %v1935, %v1987
        %1989 = vmatmul.f32.gmra.mxu0 %v1779
        %v1990 = vpop.f32.mrf.mxu0
        %v1991 = vadd.f32 %v1938, %v1990
        %1992 = vmatmul.f32.gmra.mxu0 %v1782
        %v1993 = vpop.f32.mrf.mxu0
        %v1994 = vadd.f32 %v1941, %v1993
        %1995 = vmatmul.f32.gmra.mxu0 %v1785
        %v1996 = vpop.f32.mrf.mxu0
        %v1997 = vadd.f32 %v1944, %v1996
        %1998 = vmatmul.f32.gmra.mxu0 %v1788
        %v1999 = vpop.f32.mrf.mxu0
        %v2000 = vadd.f32 %v1947, %v1999
        %2001 = vmatmul.f32.gmra.mxu0 %v1791
        %v2002 = vpop.f32.mrf.mxu0
        %v2003 = vadd.f32 %v1950, %v2002
        %2004 = vmatmul.f32.gmra.mxu0 %v1794
        %v2005 = vpop.f32.mrf.mxu0
        %v2006 = vadd.f32 %v1953, %v2005
        %2007 = vmatmul.f32.gmra.mxu0 %v1797
        %v2008 = vpop.f32.mrf.mxu0
        %v2009 = vadd.f32 %v1956, %v2008
        %2010 = vdwg.mxu0
        %v2011 = vtanh.pop %v1976
        %v2012 = vtanh.pop %v1979
        %v2013 = vtanh.pop %v1982
        %v2014 = vtanh.pop %v1985
        %v2015 = vtanh.pop %v1988
        %v2016 = vtanh.pop %v1991
        %v2017 = vtanh.pop %v1994
        %v2018 = vtanh.pop %v1997
        %v2019 = vtanh.pop %v2000
        %v2020 = vtanh.pop %v2003
        %v2021 = vtanh.pop %v2006
        %v2022 = vtanh.pop %v2009
        %vm2023 = vcmask 171008
        %v2024 = vsel %vm2023, %v2011, 0.0
        %2025 = vadd.xlane.f32.xlu0 %v2024
        %v2026 = vpop.xlane.xlu0 %2025
        %v2027 = vsel %vm2023, %v2012, 0.0
        %2028 = vadd.xlane.f32.xlu0 %v2027
        %v2029 = vpop.xlane.xlu0 %2028
        %v2030 = vsel %vm2023, %v2013, 0.0
        %2031 = vadd.xlane.f32.xlu0 %v2030
        %v2032 = vpop.xlane.xlu0 %2031
        %v2033 = vsel %vm2023, %v2014, 0.0
        %2034 = vadd.xlane.f32.xlu0 %v2033
        %v2035 = vpop.xlane.xlu0 %2034
        %v2036 = vsel %vm2023, %v2015, 0.0
        %2037 = vadd.xlane.f32.xlu0 %v2036
        %v2038 = vpop.xlane.xlu0 %2037
        %v2039 = vsel %vm2023, %v2016, 0.0
        %2040 = vadd.xlane.f32.xlu0 %v2039
        %v2041 = vpop.xlane.xlu0 %2040
        %v2042 = vsel %vm2023, %v2017, 0.0
        %2043 = vadd.xlane.f32.xlu0 %v2042
        %v2044 = vpop.xlane.xlu0 %2043
        %v2045 = vsel %vm2023, %v2018, 0.0
        %2046 = vadd.xlane.f32.xlu0 %v2045
        %v2047 = vpop.xlane.xlu0 %2046
        %v2048 = vsel %vm2023, %v2019, 0.0
        %2049 = vadd.xlane.f32.xlu0 %v2048
        %v2050 = vpop.xlane.xlu0 %2049
        %v2051 = vsel %vm2023, %v2020, 0.0
        %2052 = vadd.xlane.f32.xlu0 %v2051
        %v2053 = vpop.xlane.xlu0 %2052
        %v2054 = vsel %vm2023, %v2021, 0.0
        %2055 = vadd.xlane.f32.xlu0 %v2054
        %v2056 = vpop.xlane.xlu0 %2055
        %v2057 = vsel %vm2023, %v2022, 0.0
        %2058 = vadd.xlane.f32.xlu0 %v2057
        %v2059 = vpop.xlane.xlu0 %2058
        %v2060 = vmul.f32 %v2026, 0.04761905
        %v2061 = vmul.f32 %v2029, 0.04761905
        %v2062 = vmul.f32 %v2032, 0.04761905
        %v2063 = vmul.f32 %v2035, 0.04761905
        %v2064 = vmul.f32 %v2038, 0.04761905
        %v2065 = vmul.f32 %v2041, 0.04761905
        %v2066 = vmul.f32 %v2044, 0.04761905
        %v2067 = vmul.f32 %v2047, 0.04761905
        %v2068 = vmul.f32 %v2050, 0.04761905
        %v2069 = vmul.f32 %v2053, 0.04761905
        %v2070 = vmul.f32 %v2056, 0.04761905
        %v2071 = vmul.f32 %v2059, 0.04761905
        %v2072 = vld [vmem:[#allocation10] sm:$0xff]
        %v2073 = vld [vmem:[#allocation10 + $0x8] sm:$0xf]
        %v2074 = vld [vmem:[%s8] sm:$0xff]
        %v2075 = vld [vmem:[%s8 + $0x8] sm:$0xf]
        %v2077 = vsel %vm1305, %v2072, 0
        %v2080 = vsel %vm1305, %v2073, 0
        %2082 = vmatpush.msra.mxu0 0.0
        %2083 = vmatpush.msra.mxu0 0.0
        %2084 = vmatpush.msra.mxu0 0.0
        %2085 = vmatpush.msra.mxu0 0.0
        %2086 = vmatpush.msra.mxu0 %v2071
        %2087 = vmatpush.msra.mxu0 %v2070
        %2088 = vmatpush.msra.mxu0 %v2069
        %2089 = vmatpush.msra.mxu0 %v2068
        %2090 = vmatpush.msra.mxu0 %v2067
        %2091 = vmatpush.msra.mxu0 %v2066
        %2092 = vmatpush.msra.mxu0 %v2065
        %2093 = vmatpush.msra.mxu0 %v2064
        %2094 = vmatpush.msra.mxu0 %v2063
        %2095 = vmatpush.msra.mxu0 %v2062
        %2096 = vmatpush.msra.mxu0 %v2061
        %2097 = vmatpush.msra.mxu0 %v2060
        %2098 = vmatmul.f32.gmra.mxu0 %v2077
        %v2099 = vpop.f32.mrf.mxu0
        %v2100 = vadd.f32 %v2074, %v2099
        %2101 = vmatmul.f32.gmra.mxu0 %v2080
        %v2102 = vpop.f32.mrf.mxu0
        %v2103 = vadd.f32 %v2075, %v2102
        %2104 = vdwg.mxu0
        %v2105 = vmax.f32 %v2100, 0.0
        %v2106 = vmax.f32 %v2103, 0.0
        %v2107 = vld [vmem:[%s9] sm:$0xff]
        %v2108 = vld [vmem:[%s9 + $0x8] sm:$0xff]
        %v2109 = vld [vmem:[%s9 + $0x10] sm:$0xff]
        %v2110 = vld [vmem:[%s9 + $0x18] sm:$0xff]
        %v2111 = vld [vmem:[%s9 + $0x20] sm:$0xff]
        %v2112 = vld [vmem:[%s9 + $0x28] sm:$0xff]
        %v2113 = vld [vmem:[%s9 + $0x30] sm:$0xff]
        %v2114 = vld [vmem:[%s9 + $0x38] sm:$0xff]
        %v2115 = vld [vmem:[%s9 + $0x40] sm:$0xff]
        %v2116 = vld [vmem:[%s9 + $0x48] sm:$0xff]
        %v2117 = vld [vmem:[%s9 + $0x50] sm:$0xff]
        %v2118 = vld [vmem:[%s9 + $0x58] sm:$0xff]
        %v2119 = vld [vmem:[%s10] sm:$0xff]
        %v2120 = vld [vmem:[%s10 + $0x8] sm:$0xff]
        %v2121 = vld [vmem:[%s10 + $0x10] sm:$0xff]
        %v2122 = vld [vmem:[%s10 + $0x18] sm:$0xff]
        %v2123 = vld [vmem:[%s10 + $0x20] sm:$0xff]
        %v2124 = vld [vmem:[%s10 + $0x28] sm:$0xff]
        %v2125 = vld [vmem:[%s10 + $0x30] sm:$0xff]
        %v2126 = vld [vmem:[%s10 + $0x38] sm:$0xff]
        %v2127 = vld [vmem:[%s10 + $0x40] sm:$0xff]
        %v2128 = vld [vmem:[%s10 + $0x48] sm:$0xff]
        %v2129 = vld [vmem:[%s10 + $0x50] sm:$0xff]
        %v2130 = vld [vmem:[%s10 + $0x58] sm:$0xff]
        %vm2131 = vcmask 97280
        %v2133 = vsel %vm2131, %v2107, 0
        %v2136 = vsel %vm2131, %v2108, 0
        %v2139 = vsel %vm2131, %v2109, 0
        %v2142 = vsel %vm2131, %v2110, 0
        %v2145 = vsel %vm2131, %v2111, 0
        %v2148 = vsel %vm2131, %v2112, 0
        %v2151 = vsel %vm2131, %v2113, 0
        %v2154 = vsel %vm2131, %v2114, 0
        %v2157 = vsel %vm2131, %v2115, 0
        %v2160 = vsel %vm2131, %v2116, 0
        %v2163 = vsel %vm2131, %v2117, 0
        %v2166 = vsel %vm2131, %v2118, 0
        %vm2168 = vcmask 1043456
        %v2170 = vsel %vm2168, %v2106, 0
        %2172 = vmatpush.msra.mxu0 0.0
        %2173 = vmatpush.msra.mxu0 0.0
        %2174 = vmatpush.msra.mxu0 0.0
        %2175 = vmatpush.msra.mxu0 0.0
        %2176 = vmatpush.msra.mxu0 0.0
        %2177 = vmatpush.msra.mxu0 0.0
        %2178 = vmatpush.msra.mxu0 0.0
        %2179 = vmatpush.msra.mxu0 0.0
        %2180 = vmatpush.msra.mxu0 0.0
        %2181 = vmatpush.msra.mxu0 0.0
        %2182 = vmatpush.msra.mxu0 0.0
        %2183 = vmatpush.msra.mxu0 0.0
        %2184 = vmatpush.msra.mxu0 0.0
        %2185 = vmatpush.msra.mxu0 0.0
        %2186 = vmatpush.msra.mxu0 %v2170
        %2187 = vmatpush.msra.mxu0 %v2105
        %2188 = vmatmul.f32.gmra.mxu0 %v2133
        %v2189 = vpop.f32.mrf.mxu0
        %v2190 = vadd.f32 %v2119, %v2189
        %2191 = vmatmul.f32.gmra.mxu0 %v2136
        %v2192 = vpop.f32.mrf.mxu0
        %v2193 = vadd.f32 %v2120, %v2192
        %2194 = vmatmul.f32.gmra.mxu0 %v2139
        %v2195 = vpop.f32.mrf.mxu0
        %v2196 = vadd.f32 %v2121, %v2195
        %2197 = vmatmul.f32.gmra.mxu0 %v2142
        %v2198 = vpop.f32.mrf.mxu0
        %v2199 = vadd.f32 %v2122, %v2198
        %2200 = vmatmul.f32.gmra.mxu0 %v2145
        %v2201 = vpop.f32.mrf.mxu0
        %v2202 = vadd.f32 %v2123, %v2201
        %2203 = vmatmul.f32.gmra.mxu0 %v2148
        %v2204 = vpop.f32.mrf.mxu0
        %v2205 = vadd.f32 %v2124, %v2204
        %2206 = vmatmul.f32.gmra.mxu0 %v2151
        %v2207 = vpop.f32.mrf.mxu0
        %v2208 = vadd.f32 %v2125, %v2207
        %2209 = vmatmul.f32.gmra.mxu0 %v2154
        %v2210 = vpop.f32.mrf.mxu0
        %v2211 = vadd.f32 %v2126, %v2210
        %2212 = vmatmul.f32.gmra.mxu0 %v2157
        %v2213 = vpop.f32.mrf.mxu0
        %v2214 = vadd.f32 %v2127, %v2213
        %2215 = vmatmul.f32.gmra.mxu0 %v2160
        %v2216 = vpop.f32.mrf.mxu0
        %v2217 = vadd.f32 %v2128, %v2216
        %2218 = vmatmul.f32.gmra.mxu0 %v2163
        %v2219 = vpop.f32.mrf.mxu0
        %v2220 = vadd.f32 %v2129, %v2219
        %2221 = vmatmul.f32.gmra.mxu0 %v2166
        %v2222 = vpop.f32.mrf.mxu0
        %v2223 = vadd.f32 %v2130, %v2222
        %2224 = vdwg.mxu0
        %v2225 = vxor.u32 %v2190, 2147483648
        %v2226 = vxor.u32 %v2193, 2147483648
        %v2227 = vxor.u32 %v2196, 2147483648
        %v2228 = vxor.u32 %v2199, 2147483648
        %v2229 = vxor.u32 %v2202, 2147483648
        %v2230 = vxor.u32 %v2205, 2147483648
        %v2231 = vxor.u32 %v2208, 2147483648
        %v2232 = vxor.u32 %v2211, 2147483648
        %v2233 = vxor.u32 %v2214, 2147483648
        %v2234 = vxor.u32 %v2217, 2147483648
        %v2235 = vxor.u32 %v2220, 2147483648
        %v2236 = vxor.u32 %v2223, 2147483648
        %v2237 = vmul.f32 %v2225, 1.442695
        %v2238 = vpow.pop %v2237
        %v2239 = vmul.f32 %v2226, 1.442695
        %v2240 = vpow.pop %v2239
        %v2241 = vmul.f32 %v2227, 1.442695
        %v2242 = vpow.pop %v2241
        %v2243 = vmul.f32 %v2228, 1.442695
        %v2244 = vpow.pop %v2243
        %v2245 = vmul.f32 %v2229, 1.442695
        %v2246 = vpow.pop %v2245
        %v2247 = vmul.f32 %v2230, 1.442695
        %v2248 = vpow.pop %v2247
        %v2249 = vmul.f32 %v2231, 1.442695
        %v2250 = vpow.pop %v2249
        %v2251 = vmul.f32 %v2232, 1.442695
        %v2252 = vpow.pop %v2251
        %v2253 = vmul.f32 %v2233, 1.442695
        %v2254 = vpow.pop %v2253
        %v2255 = vmul.f32 %v2234, 1.442695
        %v2256 = vpow.pop %v2255
        %v2257 = vmul.f32 %v2235, 1.442695
        %v2258 = vpow.pop %v2257
        %v2259 = vmul.f32 %v2236, 1.442695
        %v2260 = vpow.pop %v2259
        %v2261 = vadd.f32 %v2238, 1.0
        %v2262 = vadd.f32 %v2240, 1.0
        %v2263 = vadd.f32 %v2242, 1.0
        %v2264 = vadd.f32 %v2244, 1.0
        %v2265 = vadd.f32 %v2246, 1.0
        %v2266 = vadd.f32 %v2248, 1.0
        %v2267 = vadd.f32 %v2250, 1.0
        %v2268 = vadd.f32 %v2252, 1.0
        %v2269 = vadd.f32 %v2254, 1.0
        %v2270 = vadd.f32 %v2256, 1.0
        %v2271 = vadd.f32 %v2258, 1.0
        %v2272 = vadd.f32 %v2260, 1.0
        %v2273 = vrcp.pop %v2261
        %v2274 = vmul.f32 %v2261, %v2273
        %v2275 = vsub.f32 1.0, %v2274
        %v2276 = vmul.f32 %v2273, %v2275
        %v2277 = vadd.f32 %v2273, %v2276
        %vm2278 = vweird.f32 %v2261
        %vm2279 = vweird.f32 %v2273
        %vm2280 = vmor %vm2278, %vm2279
        %v2281 = vsel %vm2280, %v2273, %v2277
        %v2282 = vand.u32 2147483647, %v2261
        %vm2283 = vcmp.eq.f32.partialorder %v2282, 8.507059e+37
        %v2284 = vand.u32 %v2261, 2147483648
        %v2285 = vor.u32 1.1754944e-38, %v2284
        %v2286 = vsel %vm2283, %v2285, %v2281
        %v2287 = vmul.f32 1.0, %v2286
        %v2288 = vrcp.pop %v2262
        %v2289 = vmul.f32 %v2262, %v2288
        %v2290 = vsub.f32 1.0, %v2289
        %v2291 = vmul.f32 %v2288, %v2290
        %v2292 = vadd.f32 %v2288, %v2291
        %vm2293 = vweird.f32 %v2262
        %vm2294 = vweird.f32 %v2288
        %vm2295 = vmor %vm2293, %vm2294
        %v2296 = vsel %vm2295, %v2288, %v2292
        %v2297 = vand.u32 2147483647, %v2262
        %vm2298 = vcmp.eq.f32.partialorder %v2297, 8.507059e+37
        %v2299 = vand.u32 %v2262, 2147483648
        %v2300 = vor.u32 1.1754944e-38, %v2299
        %v2301 = vsel %vm2298, %v2300, %v2296
        %v2302 = vmul.f32 1.0, %v2301
        %v2303 = vrcp.pop %v2263
        %v2304 = vmul.f32 %v2263, %v2303
        %v2305 = vsub.f32 1.0, %v2304
        %v2306 = vmul.f32 %v2303, %v2305
        %v2307 = vadd.f32 %v2303, %v2306
        %vm2308 = vweird.f32 %v2263
        %vm2309 = vweird.f32 %v2303
        %vm2310 = vmor %vm2308, %vm2309
        %v2311 = vsel %vm2310, %v2303, %v2307
        %v2312 = vand.u32 2147483647, %v2263
        %vm2313 = vcmp.eq.f32.partialorder %v2312, 8.507059e+37
        %v2314 = vand.u32 %v2263, 2147483648
        %v2315 = vor.u32 1.1754944e-38, %v2314
        %v2316 = vsel %vm2313, %v2315, %v2311
        %v2317 = vmul.f32 1.0, %v2316
        %v2318 = vrcp.pop %v2264
        %v2319 = vmul.f32 %v2264, %v2318
        %v2320 = vsub.f32 1.0, %v2319
        %v2321 = vmul.f32 %v2318, %v2320
        %v2322 = vadd.f32 %v2318, %v2321
        %vm2323 = vweird.f32 %v2264
        %vm2324 = vweird.f32 %v2318
        %vm2325 = vmor %vm2323, %vm2324
        %v2326 = vsel %vm2325, %v2318, %v2322
        %v2327 = vand.u32 2147483647, %v2264
        %vm2328 = vcmp.eq.f32.partialorder %v2327, 8.507059e+37
        %v2329 = vand.u32 %v2264, 2147483648
        %v2330 = vor.u32 1.1754944e-38, %v2329
        %v2331 = vsel %vm2328, %v2330, %v2326
        %v2332 = vmul.f32 1.0, %v2331
        %v2333 = vrcp.pop %v2265
        %v2334 = vmul.f32 %v2265, %v2333
        %v2335 = vsub.f32 1.0, %v2334
        %v2336 = vmul.f32 %v2333, %v2335
        %v2337 = vadd.f32 %v2333, %v2336
        %vm2338 = vweird.f32 %v2265
        %vm2339 = vweird.f32 %v2333
        %vm2340 = vmor %vm2338, %vm2339
        %v2341 = vsel %vm2340, %v2333, %v2337
        %v2342 = vand.u32 2147483647, %v2265
        %vm2343 = vcmp.eq.f32.partialorder %v2342, 8.507059e+37
        %v2344 = vand.u32 %v2265, 2147483648
        %v2345 = vor.u32 1.1754944e-38, %v2344
        %v2346 = vsel %vm2343, %v2345, %v2341
        %v2347 = vmul.f32 1.0, %v2346
        %v2348 = vrcp.pop %v2266
        %v2349 = vmul.f32 %v2266, %v2348
        %v2350 = vsub.f32 1.0, %v2349
        %v2351 = vmul.f32 %v2348, %v2350
        %v2352 = vadd.f32 %v2348, %v2351
        %vm2353 = vweird.f32 %v2266
        %vm2354 = vweird.f32 %v2348
        %vm2355 = vmor %vm2353, %vm2354
        %v2356 = vsel %vm2355, %v2348, %v2352
        %v2357 = vand.u32 2147483647, %v2266
        %vm2358 = vcmp.eq.f32.partialorder %v2357, 8.507059e+37
        %v2359 = vand.u32 %v2266, 2147483648
        %v2360 = vor.u32 1.1754944e-38, %v2359
        %v2361 = vsel %vm2358, %v2360, %v2356
        %v2362 = vmul.f32 1.0, %v2361
        %v2363 = vrcp.pop %v2267
        %v2364 = vmul.f32 %v2267, %v2363
        %v2365 = vsub.f32 1.0, %v2364
        %v2366 = vmul.f32 %v2363, %v2365
        %v2367 = vadd.f32 %v2363, %v2366
        %vm2368 = vweird.f32 %v2267
        %vm2369 = vweird.f32 %v2363
        %vm2370 = vmor %vm2368, %vm2369
        %v2371 = vsel %vm2370, %v2363, %v2367
        %v2372 = vand.u32 2147483647, %v2267
        %vm2373 = vcmp.eq.f32.partialorder %v2372, 8.507059e+37
        %v2374 = vand.u32 %v2267, 2147483648
        %v2375 = vor.u32 1.1754944e-38, %v2374
        %v2376 = vsel %vm2373, %v2375, %v2371
        %v2377 = vmul.f32 1.0, %v2376
        %v2378 = vrcp.pop %v2268
        %v2379 = vmul.f32 %v2268, %v2378
        %v2380 = vsub.f32 1.0, %v2379
        %v2381 = vmul.f32 %v2378, %v2380
        %v2382 = vadd.f32 %v2378, %v2381
        %vm2383 = vweird.f32 %v2268
        %vm2384 = vweird.f32 %v2378
        %vm2385 = vmor %vm2383, %vm2384
        %v2386 = vsel %vm2385, %v2378, %v2382
        %v2387 = vand.u32 2147483647, %v2268
        %vm2388 = vcmp.eq.f32.partialorder %v2387, 8.507059e+37
        %v2389 = vand.u32 %v2268, 2147483648
        %v2390 = vor.u32 1.1754944e-38, %v2389
        %v2391 = vsel %vm2388, %v2390, %v2386
        %v2392 = vmul.f32 1.0, %v2391
        %v2393 = vrcp.pop %v2269
        %v2394 = vmul.f32 %v2269, %v2393
        %v2395 = vsub.f32 1.0, %v2394
        %v2396 = vmul.f32 %v2393, %v2395
        %v2397 = vadd.f32 %v2393, %v2396
        %vm2398 = vweird.f32 %v2269
        %vm2399 = vweird.f32 %v2393
        %vm2400 = vmor %vm2398, %vm2399
        %v2401 = vsel %vm2400, %v2393, %v2397
        %v2402 = vand.u32 2147483647, %v2269
        %vm2403 = vcmp.eq.f32.partialorder %v2402, 8.507059e+37
        %v2404 = vand.u32 %v2269, 2147483648
        %v2405 = vor.u32 1.1754944e-38, %v2404
        %v2406 = vsel %vm2403, %v2405, %v2401
        %v2407 = vmul.f32 1.0, %v2406
        %v2408 = vrcp.pop %v2270
        %v2409 = vmul.f32 %v2270, %v2408
        %v2410 = vsub.f32 1.0, %v2409
        %v2411 = vmul.f32 %v2408, %v2410
        %v2412 = vadd.f32 %v2408, %v2411
        %vm2413 = vweird.f32 %v2270
        %vm2414 = vweird.f32 %v2408
        %vm2415 = vmor %vm2413, %vm2414
        %v2416 = vsel %vm2415, %v2408, %v2412
        %v2417 = vand.u32 2147483647, %v2270
        %vm2418 = vcmp.eq.f32.partialorder %v2417, 8.507059e+37
        %v2419 = vand.u32 %v2270, 2147483648
        %v2420 = vor.u32 1.1754944e-38, %v2419
        %v2421 = vsel %vm2418, %v2420, %v2416
        %v2422 = vmul.f32 1.0, %v2421
        %v2423 = vrcp.pop %v2271
        %v2424 = vmul.f32 %v2271, %v2423
        %v2425 = vsub.f32 1.0, %v2424
        %v2426 = vmul.f32 %v2423, %v2425
        %v2427 = vadd.f32 %v2423, %v2426
        %vm2428 = vweird.f32 %v2271
        %vm2429 = vweird.f32 %v2423
        %vm2430 = vmor %vm2428, %vm2429
        %v2431 = vsel %vm2430, %v2423, %v2427
        %v2432 = vand.u32 2147483647, %v2271
        %vm2433 = vcmp.eq.f32.partialorder %v2432, 8.507059e+37
        %v2434 = vand.u32 %v2271, 2147483648
        %v2435 = vor.u32 1.1754944e-38, %v2434
        %v2436 = vsel %vm2433, %v2435, %v2431
        %v2437 = vmul.f32 1.0, %v2436
        %v2438 = vrcp.pop %v2272
        %v2439 = vmul.f32 %v2272, %v2438
        %v2440 = vsub.f32 1.0, %v2439
        %v2441 = vmul.f32 %v2438, %v2440
        %v2442 = vadd.f32 %v2438, %v2441
        %vm2443 = vweird.f32 %v2272
        %vm2444 = vweird.f32 %v2438
        %vm2445 = vmor %vm2443, %vm2444
        %v2446 = vsel %vm2445, %v2438, %v2442
        %v2447 = vand.u32 2147483647, %v2272
        %vm2448 = vcmp.eq.f32.partialorder %v2447, 8.507059e+37
        %v2449 = vand.u32 %v2272, 2147483648
        %v2450 = vor.u32 1.1754944e-38, %v2449
        %v2451 = vsel %vm2448, %v2450, %v2446
        %v2452 = vmul.f32 1.0, %v2451
        %2454 = vset.pattern.permute.xlu0 0
        %2455 = vperm.xlu0 %2454, %v2287
        %v2456 = vpop.permute.xlu0 %2455
        %2459 = vset.pattern.permute.xlu0 0
        %2460 = vperm.xlu0 %2459, %v2302
        %v2461 = vpop.permute.xlu0 %2460
        %2464 = vset.pattern.permute.xlu0 0
        %2465 = vperm.xlu0 %2464, %v2317
        %v2466 = vpop.permute.xlu0 %2465
        %2469 = vset.pattern.permute.xlu0 0
        %2470 = vperm.xlu0 %2469, %v2332
        %v2471 = vpop.permute.xlu0 %2470
        %2474 = vset.pattern.permute.xlu0 0
        %2475 = vperm.xlu0 %2474, %v2347
        %v2476 = vpop.permute.xlu0 %2475
        %2479 = vset.pattern.permute.xlu0 0
        %2480 = vperm.xlu0 %2479, %v2362
        %v2481 = vpop.permute.xlu0 %2480
        %2484 = vset.pattern.permute.xlu0 0
        %2485 = vperm.xlu0 %2484, %v2377
        %v2486 = vpop.permute.xlu0 %2485
        %2489 = vset.pattern.permute.xlu0 0
        %2490 = vperm.xlu0 %2489, %v2392
        %v2491 = vpop.permute.xlu0 %2490
        %2494 = vset.pattern.permute.xlu0 0
        %2495 = vperm.xlu0 %2494, %v2407
        %v2496 = vpop.permute.xlu0 %2495
        %2499 = vset.pattern.permute.xlu0 0
        %2500 = vperm.xlu0 %2499, %v2422
        %v2501 = vpop.permute.xlu0 %2500
        %2504 = vset.pattern.permute.xlu0 0
        %2505 = vperm.xlu0 %2504, %v2437
        %v2506 = vpop.permute.xlu0 %2505
        %2509 = vset.pattern.permute.xlu0 0
        %2510 = vperm.xlu0 %2509, %v2452
        %v2511 = vpop.permute.xlu0 %2510
        %v2513 = vmul.f32 %v2011, %v2456
        %v2514 = vmul.f32 %v2012, %v2461
        %v2515 = vmul.f32 %v2013, %v2466
        %v2516 = vmul.f32 %v2014, %v2471
        %v2517 = vmul.f32 %v2015, %v2476
        %v2518 = vmul.f32 %v2016, %v2481
        %v2519 = vmul.f32 %v2017, %v2486
        %v2520 = vmul.f32 %v2018, %v2491
        %v2521 = vmul.f32 %v2019, %v2496
        %v2522 = vmul.f32 %v2020, %v2501
        %v2523 = vmul.f32 %v2021, %v2506
        %v2524 = vmul.f32 %v2022, %v2511
        %v2526 = vsel %vm2023, %v2513, 0
        %v2529 = vsel %vm2023, %v2514, 0
        %v2532 = vsel %vm2023, %v2515, 0
        %v2535 = vsel %vm2023, %v2516, 0
        %v2538 = vsel %vm2023, %v2517, 0
        %v2541 = vsel %vm2023, %v2518, 0
        %v2544 = vsel %vm2023, %v2519, 0
        %v2547 = vsel %vm2023, %v2520, 0
        %v2550 = vsel %vm2023, %v2521, 0
        %v2553 = vsel %vm2023, %v2522, 0
        %v2556 = vsel %vm2023, %v2523, 0
        %v2559 = vsel %vm2023, %v2524, 0
        %vm2561 = vcmask 1044480
        %v2563 = vsel %vm2561, %v1105, 0
        %2565 = vmatpush.msra.mxu0 0.0
        %2566 = vmatpush.msra.mxu0 0.0
        %2567 = vmatpush.msra.mxu0 0.0
        %2568 = vmatpush.msra.mxu0 0.0
        %2569 = vmatpush.msra.mxu0 0.0
        %2570 = vmatpush.msra.mxu0 0.0
        %2571 = vmatpush.msra.mxu0 0.0
        %2572 = vmatpush.msra.mxu0 0.0
        %2573 = vmatpush.msra.mxu0 0.0
        %2574 = vmatpush.msra.mxu0 0.0
        %2575 = vmatpush.msra.mxu0 0.0
        %2576 = vmatpush.msra.mxu0 0.0
        %2577 = vmatpush.msra.mxu0 0.0
        %2578 = vmatpush.msra.mxu0 %v2563
        %2579 = vmatpush.msra.mxu0 %v1104
        %2580 = vmatpush.msra.mxu0 %v1103
        %2581 = vmatmul.f32.gmra.mxu0 %v2526
        %v2582 = vpop.f32.mrf.mxu0
        %v2583 = vadd.f32 0.0, %v2582
        %2584 = vmatmul.f32.gmra.mxu0 %v2529
        %v2585 = vpop.f32.mrf.mxu0
        %v2586 = vadd.f32 0.0, %v2585
        %2587 = vmatmul.f32.gmra.mxu0 %v2532
        %v2588 = vpop.f32.mrf.mxu0
        %v2589 = vadd.f32 0.0, %v2588
        %2590 = vmatmul.f32.gmra.mxu0 %v2535
        %v2591 = vpop.f32.mrf.mxu0
        %v2592 = vadd.f32 0.0, %v2591
        %2593 = vmatmul.f32.gmra.mxu0 %v2538
        %v2594 = vpop.f32.mrf.mxu0
        %v2595 = vadd.f32 0.0, %v2594
        %2596 = vmatmul.f32.gmra.mxu0 %v2541
        %v2597 = vpop.f32.mrf.mxu0
        %v2598 = vadd.f32 0.0, %v2597
        %2599 = vmatmul.f32.gmra.mxu0 %v2544
        %v2600 = vpop.f32.mrf.mxu0
        %v2601 = vadd.f32 0.0, %v2600
        %2602 = vmatmul.f32.gmra.mxu0 %v2547
        %v2603 = vpop.f32.mrf.mxu0
        %v2604 = vadd.f32 0.0, %v2603
        %2605 = vmatmul.f32.gmra.mxu0 %v2550
        %v2606 = vpop.f32.mrf.mxu0
        %v2607 = vadd.f32 0.0, %v2606
        %2608 = vmatmul.f32.gmra.mxu0 %v2553
        %v2609 = vpop.f32.mrf.mxu0
        %v2610 = vadd.f32 0.0, %v2609
        %2611 = vmatmul.f32.gmra.mxu0 %v2556
        %v2612 = vpop.f32.mrf.mxu0
        %v2613 = vadd.f32 0.0, %v2612
        %2614 = vmatmul.f32.gmra.mxu0 %v2559
        %v2615 = vpop.f32.mrf.mxu0
        %v2616 = vadd.f32 0.0, %v2615
        %2617 = vdwg.mxu0
        %v2618 = vld [vmem:[%s11] sm:$0x1]
        %v2619 = vld [vmem:[#allocation2] sm:$0x1]
        %2621 = vset.pattern.permute.xlu0 0
        %2622 = vperm.xlu0 %2621, %v2619
        %v2623 = vpop.permute.xlu0 %2622
        %v2625 = vperm.slane %v2623, 0
        %v2627 = vsel %vm1305, %v2618, 0
        %2629 = vmatpush.msra.mxu0 0.0
        %2630 = vmatpush.msra.mxu0 0.0
        %2631 = vmatpush.msra.mxu0 0.0
        %2632 = vmatpush.msra.mxu0 0.0
        %2633 = vmatpush.msra.mxu0 %v2616
        %2634 = vmatpush.msra.mxu0 %v2613
        %2635 = vmatpush.msra.mxu0 %v2610
        %2636 = vmatpush.msra.mxu0 %v2607
        %2637 = vmatpush.msra.mxu0 %v2604
        %2638 = vmatpush.msra.mxu0 %v2601
        %2639 = vmatpush.msra.mxu0 %v2598
        %2640 = vmatpush.msra.mxu0 %v2595
        %2641 = vmatpush.msra.mxu0 %v2592
        %2642 = vmatpush.msra.mxu0 %v2589
        %2643 = vmatpush.msra.mxu0 %v2586
        %2644 = vmatpush.msra.mxu0 %v2583
        %2645 = vmatmul.f32.gmra.mxu0 %v2627
        %v2646 = vpop.f32.mrf.mxu0
        %v2647 = vadd.f32 %v2625, %v2646
        %2648 = vdwg.mxu0
        %v2649 = vtanh.pop %v2647
        %v2650 = vmul.u32 %v1035, 2
        %v2651 = vmul.u32 %v1036, 2
        %v2652 = vadd.s32 %v2650, 6
        %v2653 = vadd.s32 %v2651, 6
        %vm2654 = vcmp.eq.s32.totalorder %v1052, %v2652
        %vm2655 = vcmp.eq.s32.totalorder %v1052, %v2653
        %v2656 = vsel %vm2654, 1.0, 0.0
        %v2657 = vsel %vm2655, 1.0, 0.0
        %vm2658 = vcmask 80896
        %v2660 = vsel %vm2658, %v2649, 0
        %v2663 = vsel %vm1132, %v2657, 0
        %2665 = vmatpush.msra.mxu0 0.0
        %2666 = vmatpush.msra.mxu0 0.0
        %2667 = vmatpush.msra.mxu0 0.0
        %2668 = vmatpush.msra.mxu0 0.0
        %2669 = vmatpush.msra.mxu0 0.0
        %2670 = vmatpush.msra.mxu0 0.0
        %2671 = vmatpush.msra.mxu0 0.0
        %2672 = vmatpush.msra.mxu0 0.0
        %2673 = vmatpush.msra.mxu0 0.0
        %2674 = vmatpush.msra.mxu0 0.0
        %2675 = vmatpush.msra.mxu0 0.0
        %2676 = vmatpush.msra.mxu0 0.0
        %2677 = vmatpush.msra.mxu0 0.0
        %2678 = vmatpush.msra.mxu0 0.0
        %2679 = vmatpush.msra.mxu0 %v2663
        %2680 = vmatpush.msra.mxu0 %v2656
        %2681 = vmatmul.f32.gmra.mxu0 %v2660
        %v2682 = vpop.f32.mrf.mxu0
        %v2683 = vadd.f32 0.0, %v2682
        %2684 = vdwg.mxu0
        %v2685 = vld [vmem:[%s13] sm:$0xff]
        %v2686 = vld [vmem:[%s13 + $0x8] sm:$0xff]
        %v2687 = vld [vmem:[%s13 + $0x10] sm:$0xff]
        %v2688 = vld [vmem:[%s13 + $0x18] sm:$0xff]
        %v2689 = vld [vmem:[%s13 + $0x20] sm:$0xff]
        %v2690 = vld [vmem:[%s13 + $0x28] sm:$0xff]
        %v2691 = vld [vmem:[%s13 + $0x30] sm:$0xff]
        %v2692 = vld [vmem:[%s13 + $0x38] sm:$0xff]
        %v2693 = vld [vmem:[%s13 + $0x40] sm:$0xff]
        %v2694 = vld [vmem:[%s13 + $0x48] sm:$0xff]
        %v2695 = vld [vmem:[%s13 + $0x50] sm:$0xff]
        %v2696 = vld [vmem:[%s13 + $0x58] sm:$0xff]
        %v2697 = vld [vmem:[%s14] sm:$0xff]
        %v2698 = vld [vmem:[%s14 + $0x8] sm:$0xff]
        %v2699 = vld [vmem:[%s14 + $0x10] sm:$0xff]
        %v2700 = vld [vmem:[%s14 + $0x18] sm:$0xff]
        %v2701 = vld [vmem:[%s14 + $0x20] sm:$0xff]
        %v2702 = vld [vmem:[%s14 + $0x28] sm:$0xff]
        %v2703 = vld [vmem:[%s14 + $0x30] sm:$0xff]
        %v2704 = vld [vmem:[%s14 + $0x38] sm:$0xff]
        %v2705 = vld [vmem:[%s14 + $0x40] sm:$0xff]
        %v2706 = vld [vmem:[%s14 + $0x48] sm:$0xff]
        %v2707 = vld [vmem:[%s14 + $0x50] sm:$0xff]
        %v2708 = vld [vmem:[%s14 + $0x58] sm:$0xff]
        %2710 = vset.pattern.permute.xlu0 0
        %2711 = vperm.xlu0 %2710, %v2685
        %v2712 = vpop.permute.xlu0 %2711
        %2715 = vset.pattern.permute.xlu0 0
        %2716 = vperm.xlu0 %2715, %v2686
        %v2717 = vpop.permute.xlu0 %2716
        %2720 = vset.pattern.permute.xlu0 0
        %2721 = vperm.xlu0 %2720, %v2687
        %v2722 = vpop.permute.xlu0 %2721
        %2725 = vset.pattern.permute.xlu0 0
        %2726 = vperm.xlu0 %2725, %v2688
        %v2727 = vpop.permute.xlu0 %2726
        %2730 = vset.pattern.permute.xlu0 0
        %2731 = vperm.xlu0 %2730, %v2689
        %v2732 = vpop.permute.xlu0 %2731
        %2735 = vset.pattern.permute.xlu0 0
        %2736 = vperm.xlu0 %2735, %v2690
        %v2737 = vpop.permute.xlu0 %2736
        %2740 = vset.pattern.permute.xlu0 0
        %2741 = vperm.xlu0 %2740, %v2691
        %v2742 = vpop.permute.xlu0 %2741
        %2745 = vset.pattern.permute.xlu0 0
        %2746 = vperm.xlu0 %2745, %v2692
        %v2747 = vpop.permute.xlu0 %2746
        %2750 = vset.pattern.permute.xlu0 0
        %2751 = vperm.xlu0 %2750, %v2693
        %v2752 = vpop.permute.xlu0 %2751
        %2755 = vset.pattern.permute.xlu0 0
        %2756 = vperm.xlu0 %2755, %v2694
        %v2757 = vpop.permute.xlu0 %2756
        %2760 = vset.pattern.permute.xlu0 0
        %2761 = vperm.xlu0 %2760, %v2695
        %v2762 = vpop.permute.xlu0 %2761
        %2765 = vset.pattern.permute.xlu0 0
        %2766 = vperm.xlu0 %2765, %v2696
        %v2767 = vpop.permute.xlu0 %2766
        %v2769 = vperm.slane %v2683, 0
        %v2770 = vmul.f32 %v2712, %v2769
        %v2771 = vmul.f32 %v2717, %v2769
        %v2772 = vmul.f32 %v2722, %v2769
        %v2773 = vmul.f32 %v2727, %v2769
        %v2774 = vmul.f32 %v2732, %v2769
        %v2775 = vmul.f32 %v2737, %v2769
        %v2776 = vmul.f32 %v2742, %v2769
        %v2777 = vmul.f32 %v2747, %v2769
        %v2778 = vmul.f32 %v2752, %v2769
        %v2779 = vmul.f32 %v2757, %v2769
        %v2780 = vmul.f32 %v2762, %v2769
        %v2781 = vmul.f32 %v2767, %v2769
        %v2782 = vadd.f32 %v2770, 0.0
        %v2783 = vadd.f32 %v2771, 0.0
        %v2784 = vadd.f32 %v2772, 0.0
        %v2785 = vadd.f32 %v2773, 0.0
        %v2786 = vadd.f32 %v2774, 0.0
        %v2787 = vadd.f32 %v2775, 0.0
        %v2788 = vadd.f32 %v2776, 0.0
        %v2789 = vadd.f32 %v2777, 0.0
        %v2790 = vadd.f32 %v2778, 0.0
        %v2791 = vadd.f32 %v2779, 0.0
        %v2792 = vadd.f32 %v2780, 0.0
        %v2793 = vadd.f32 %v2781, 0.0
        %2794 = vset.pattern.permute.xlu0 1
        %2795 = vperm.xlu0 %2794, %v2685
        %v2796 = vpop.permute.xlu0 %2795
        %2798 = vset.pattern.permute.xlu0 1
        %2799 = vperm.xlu0 %2798, %v2686
        %v2800 = vpop.permute.xlu0 %2799
        %2802 = vset.pattern.permute.xlu0 1
        %2803 = vperm.xlu0 %2802, %v2687
        %v2804 = vpop.permute.xlu0 %2803
        %2806 = vset.pattern.permute.xlu0 1
        %2807 = vperm.xlu0 %2806, %v2688
        %v2808 = vpop.permute.xlu0 %2807
        %2810 = vset.pattern.permute.xlu0 1
        %2811 = vperm.xlu0 %2810, %v2689
        %v2812 = vpop.permute.xlu0 %2811
        %2814 = vset.pattern.permute.xlu0 1
        %2815 = vperm.xlu0 %2814, %v2690
        %v2816 = vpop.permute.xlu0 %2815
        %2818 = vset.pattern.permute.xlu0 1
        %2819 = vperm.xlu0 %2818, %v2691
        %v2820 = vpop.permute.xlu0 %2819
        %2822 = vset.pattern.permute.xlu0 1
        %2823 = vperm.xlu0 %2822, %v2692
        %v2824 = vpop.permute.xlu0 %2823
        %2826 = vset.pattern.permute.xlu0 1
        %2827 = vperm.xlu0 %2826, %v2693
        %v2828 = vpop.permute.xlu0 %2827
        %2830 = vset.pattern.permute.xlu0 1
        %2831 = vperm.xlu0 %2830, %v2694
        %v2832 = vpop.permute.xlu0 %2831
        %2834 = vset.pattern.permute.xlu0 1
        %2835 = vperm.xlu0 %2834, %v2695
        %v2836 = vpop.permute.xlu0 %2835
        %2838 = vset.pattern.permute.xlu0 1
        %2839 = vperm.xlu0 %2838, %v2696
        %v2840 = vpop.permute.xlu0 %2839
        %v2842 = vmul.f32 %v2796, %v2769
        %v2843 = vmul.f32 %v2800, %v2769
        %v2844 = vmul.f32 %v2804, %v2769
        %v2845 = vmul.f32 %v2808, %v2769
        %v2846 = vmul.f32 %v2812, %v2769
        %v2847 = vmul.f32 %v2816, %v2769
        %v2848 = vmul.f32 %v2820, %v2769
        %v2849 = vmul.f32 %v2824, %v2769
        %v2850 = vmul.f32 %v2828, %v2769
        %v2851 = vmul.f32 %v2832, %v2769
        %v2852 = vmul.f32 %v2836, %v2769
        %v2853 = vmul.f32 %v2840, %v2769
        %2866 = vrot.lane.b32.xlu0 %v2842, 127
        %v2867 = vpop.permute.xlu0 %2866
        %2868 = vrot.lane.b32.xlu0 %v2843, 127
        %v2869 = vpop.permute.xlu0 %2868
        %2870 = vrot.lane.b32.xlu0 %v2844, 127
        %v2871 = vpop.permute.xlu0 %2870
        %2872 = vrot.lane.b32.xlu0 %v2845, 127
        %v2873 = vpop.permute.xlu0 %2872
        %2874 = vrot.lane.b32.xlu0 %v2846, 127
        %v2875 = vpop.permute.xlu0 %2874
        %2876 = vrot.lane.b32.xlu0 %v2847, 127
        %v2877 = vpop.permute.xlu0 %2876
        %2878 = vrot.lane.b32.xlu0 %v2848, 127
        %v2879 = vpop.permute.xlu0 %2878
        %2880 = vrot.lane.b32.xlu0 %v2849, 127
        %v2881 = vpop.permute.xlu0 %2880
        %2882 = vrot.lane.b32.xlu0 %v2850, 127
        %v2883 = vpop.permute.xlu0 %2882
        %2884 = vrot.lane.b32.xlu0 %v2851, 127
        %v2885 = vpop.permute.xlu0 %2884
        %2886 = vrot.lane.b32.xlu0 %v2852, 127
        %v2887 = vpop.permute.xlu0 %2886
        %2888 = vrot.lane.b32.xlu0 %v2853, 127
        %v2889 = vpop.permute.xlu0 %2888
        %v2902 = vadd.f32 %v2782, %v2867
        %v2903 = vadd.f32 %v2783, %v2869
        %v2904 = vadd.f32 %v2784, %v2871
        %v2905 = vadd.f32 %v2785, %v2873
        %v2906 = vadd.f32 %v2786, %v2875
        %v2907 = vadd.f32 %v2787, %v2877
        %v2908 = vadd.f32 %v2788, %v2879
        %v2909 = vadd.f32 %v2789, %v2881
        %v2910 = vadd.f32 %v2790, %v2883
        %v2911 = vadd.f32 %v2791, %v2885
        %v2912 = vadd.f32 %v2792, %v2887
        %v2913 = vadd.f32 %v2793, %v2889
        %2914 = vset.pattern.permute.xlu0 2
        %2915 = vperm.xlu0 %2914, %v2685
        %v2916 = vpop.permute.xlu0 %2915
        %2918 = vset.pattern.permute.xlu0 2
        %2919 = vperm.xlu0 %2918, %v2686
        %v2920 = vpop.permute.xlu0 %2919
        %2922 = vset.pattern.permute.xlu0 2
        %2923 = vperm.xlu0 %2922, %v2687
        %v2924 = vpop.permute.xlu0 %2923
        %2926 = vset.pattern.permute.xlu0 2
        %2927 = vperm.xlu0 %2926, %v2688
        %v2928 = vpop.permute.xlu0 %2927
        %2930 = vset.pattern.permute.xlu0 2
        %2931 = vperm.xlu0 %2930, %v2689
        %v2932 = vpop.permute.xlu0 %2931
        %2934 = vset.pattern.permute.xlu0 2
        %2935 = vperm.xlu0 %2934, %v2690
        %v2936 = vpop.permute.xlu0 %2935
        %2938 = vset.pattern.permute.xlu0 2
        %2939 = vperm.xlu0 %2938, %v2691
        %v2940 = vpop.permute.xlu0 %2939
        %2942 = vset.pattern.permute.xlu0 2
        %2943 = vperm.xlu0 %2942, %v2692
        %v2944 = vpop.permute.xlu0 %2943
        %2946 = vset.pattern.permute.xlu0 2
        %2947 = vperm.xlu0 %2946, %v2693
        %v2948 = vpop.permute.xlu0 %2947
        %2950 = vset.pattern.permute.xlu0 2
        %2951 = vperm.xlu0 %2950, %v2694
        %v2952 = vpop.permute.xlu0 %2951
        %2954 = vset.pattern.permute.xlu0 2
        %2955 = vperm.xlu0 %2954, %v2695
        %v2956 = vpop.permute.xlu0 %2955
        %2958 = vset.pattern.permute.xlu0 2
        %2959 = vperm.xlu0 %2958, %v2696
        %v2960 = vpop.permute.xlu0 %2959
        %v2962 = vmul.f32 %v2916, %v2769
        %v2963 = vmul.f32 %v2920, %v2769
        %v2964 = vmul.f32 %v2924, %v2769
        %v2965 = vmul.f32 %v2928, %v2769
        %v2966 = vmul.f32 %v2932, %v2769
        %v2967 = vmul.f32 %v2936, %v2769
        %v2968 = vmul.f32 %v2940, %v2769
        %v2969 = vmul.f32 %v2944, %v2769
        %v2970 = vmul.f32 %v2948, %v2769
        %v2971 = vmul.f32 %v2952, %v2769
        %v2972 = vmul.f32 %v2956, %v2769
        %v2973 = vmul.f32 %v2960, %v2769
        %2986 = vrot.lane.b32.xlu0 %v2962, 126
        %v2987 = vpop.permute.xlu0 %2986
        %2988 = vrot.lane.b32.xlu0 %v2963, 126
        %v2989 = vpop.permute.xlu0 %2988
        %2990 = vrot.lane.b32.xlu0 %v2964, 126
        %v2991 = vpop.permute.xlu0 %2990
        %2992 = vrot.lane.b32.xlu0 %v2965, 126
        %v2993 = vpop.permute.xlu0 %2992
        %2994 = vrot.lane.b32.xlu0 %v2966, 126
        %v2995 = vpop.permute.xlu0 %2994
        %2996 = vrot.lane.b32.xlu0 %v2967, 126
        %v2997 = vpop.permute.xlu0 %2996
        %2998 = vrot.lane.b32.xlu0 %v2968, 126
        %v2999 = vpop.permute.xlu0 %2998
        %3000 = vrot.lane.b32.xlu0 %v2969, 126
        %v3001 = vpop.permute.xlu0 %3000
        %3002 = vrot.lane.b32.xlu0 %v2970, 126
        %v3003 = vpop.permute.xlu0 %3002
        %3004 = vrot.lane.b32.xlu0 %v2971, 126
        %v3005 = vpop.permute.xlu0 %3004
        %3006 = vrot.lane.b32.xlu0 %v2972, 126
        %v3007 = vpop.permute.xlu0 %3006
        %3008 = vrot.lane.b32.xlu0 %v2973, 126
        %v3009 = vpop.permute.xlu0 %3008
        %v3022 = vadd.f32 %v2902, %v2987
        %v3023 = vadd.f32 %v2903, %v2989
        %v3024 = vadd.f32 %v2904, %v2991
        %v3025 = vadd.f32 %v2905, %v2993
        %v3026 = vadd.f32 %v2906, %v2995
        %v3027 = vadd.f32 %v2907, %v2997
        %v3028 = vadd.f32 %v2908, %v2999
        %v3029 = vadd.f32 %v2909, %v3001
        %v3030 = vadd.f32 %v2910, %v3003
        %v3031 = vadd.f32 %v2911, %v3005
        %v3032 = vadd.f32 %v2912, %v3007
        %v3033 = vadd.f32 %v2913, %v3009
        %3034 = vset.pattern.permute.xlu0 3
        %3035 = vperm.xlu0 %3034, %v2685
        %v3036 = vpop.permute.xlu0 %3035
        %3038 = vset.pattern.permute.xlu0 3
        %3039 = vperm.xlu0 %3038, %v2686
        %v3040 = vpop.permute.xlu0 %3039
        %3042 = vset.pattern.permute.xlu0 3
        %3043 = vperm.xlu0 %3042, %v2687
        %v3044 = vpop.permute.xlu0 %3043
        %3046 = vset.pattern.permute.xlu0 3
        %3047 = vperm.xlu0 %3046, %v2688
        %v3048 = vpop.permute.xlu0 %3047
        %3050 = vset.pattern.permute.xlu0 3
        %3051 = vperm.xlu0 %3050, %v2689
        %v3052 = vpop.permute.xlu0 %3051
        %3054 = vset.pattern.permute.xlu0 3
        %3055 = vperm.xlu0 %3054, %v2690
        %v3056 = vpop.permute.xlu0 %3055
        %3058 = vset.pattern.permute.xlu0 3
        %3059 = vperm.xlu0 %3058, %v2691
        %v3060 = vpop.permute.xlu0 %3059
        %3062 = vset.pattern.permute.xlu0 3
        %3063 = vperm.xlu0 %3062, %v2692
        %v3064 = vpop.permute.xlu0 %3063
        %3066 = vset.pattern.permute.xlu0 3
        %3067 = vperm.xlu0 %3066, %v2693
        %v3068 = vpop.permute.xlu0 %3067
        %3070 = vset.pattern.permute.xlu0 3
        %3071 = vperm.xlu0 %3070, %v2694
        %v3072 = vpop.permute.xlu0 %3071
        %3074 = vset.pattern.permute.xlu0 3
        %3075 = vperm.xlu0 %3074, %v2695
        %v3076 = vpop.permute.xlu0 %3075
        %3078 = vset.pattern.permute.xlu0 3
        %3079 = vperm.xlu0 %3078, %v2696
        %v3080 = vpop.permute.xlu0 %3079
        %v3082 = vmul.f32 %v3036, %v2769
        %v3083 = vmul.f32 %v3040, %v2769
        %v3084 = vmul.f32 %v3044, %v2769
        %v3085 = vmul.f32 %v3048, %v2769
        %v3086 = vmul.f32 %v3052, %v2769
        %v3087 = vmul.f32 %v3056, %v2769
        %v3088 = vmul.f32 %v3060, %v2769
        %v3089 = vmul.f32 %v3064, %v2769
        %v3090 = vmul.f32 %v3068, %v2769
        %v3091 = vmul.f32 %v3072, %v2769
        %v3092 = vmul.f32 %v3076, %v2769
        %v3093 = vmul.f32 %v3080, %v2769
        %3106 = vrot.lane.b32.xlu0 %v3082, 125
        %v3107 = vpop.permute.xlu0 %3106
        %3108 = vrot.lane.b32.xlu0 %v3083, 125
        %v3109 = vpop.permute.xlu0 %3108
        %3110 = vrot.lane.b32.xlu0 %v3084, 125
        %v3111 = vpop.permute.xlu0 %3110
        %3112 = vrot.lane.b32.xlu0 %v3085, 125
        %v3113 = vpop.permute.xlu0 %3112
        %3114 = vrot.lane.b32.xlu0 %v3086, 125
        %v3115 = vpop.permute.xlu0 %3114
        %3116 = vrot.lane.b32.xlu0 %v3087, 125
        %v3117 = vpop.permute.xlu0 %3116
        %3118 = vrot.lane.b32.xlu0 %v3088, 125
        %v3119 = vpop.permute.xlu0 %3118
        %3120 = vrot.lane.b32.xlu0 %v3089, 125
        %v3121 = vpop.permute.xlu0 %3120
        %3122 = vrot.lane.b32.xlu0 %v3090, 125
        %v3123 = vpop.permute.xlu0 %3122
        %3124 = vrot.lane.b32.xlu0 %v3091, 125
        %v3125 = vpop.permute.xlu0 %3124
        %3126 = vrot.lane.b32.xlu0 %v3092, 125
        %v3127 = vpop.permute.xlu0 %3126
        %3128 = vrot.lane.b32.xlu0 %v3093, 125
        %v3129 = vpop.permute.xlu0 %3128
        %v3142 = vadd.f32 %v3022, %v3107
        %v3143 = vadd.f32 %v3023, %v3109
        %v3144 = vadd.f32 %v3024, %v3111
        %v3145 = vadd.f32 %v3025, %v3113
        %v3146 = vadd.f32 %v3026, %v3115
        %v3147 = vadd.f32 %v3027, %v3117
        %v3148 = vadd.f32 %v3028, %v3119
        %v3149 = vadd.f32 %v3029, %v3121
        %v3150 = vadd.f32 %v3030, %v3123
        %v3151 = vadd.f32 %v3031, %v3125
        %v3152 = vadd.f32 %v3032, %v3127
        %v3153 = vadd.f32 %v3033, %v3129
        %3154 = vset.pattern.permute.xlu0 4
        %3155 = vperm.xlu0 %3154, %v2685
        %v3156 = vpop.permute.xlu0 %3155
        %3158 = vset.pattern.permute.xlu0 4
        %3159 = vperm.xlu0 %3158, %v2686
        %v3160 = vpop.permute.xlu0 %3159
        %3162 = vset.pattern.permute.xlu0 4
        %3163 = vperm.xlu0 %3162, %v2687
        %v3164 = vpop.permute.xlu0 %3163
        %3166 = vset.pattern.permute.xlu0 4
        %3167 = vperm.xlu0 %3166, %v2688
        %v3168 = vpop.permute.xlu0 %3167
        %3170 = vset.pattern.permute.xlu0 4
        %3171 = vperm.xlu0 %3170, %v2689
        %v3172 = vpop.permute.xlu0 %3171
        %3174 = vset.pattern.permute.xlu0 4
        %3175 = vperm.xlu0 %3174, %v2690
        %v3176 = vpop.permute.xlu0 %3175
        %3178 = vset.pattern.permute.xlu0 4
        %3179 = vperm.xlu0 %3178, %v2691
        %v3180 = vpop.permute.xlu0 %3179
        %3182 = vset.pattern.permute.xlu0 4
        %3183 = vperm.xlu0 %3182, %v2692
        %v3184 = vpop.permute.xlu0 %3183
        %3186 = vset.pattern.permute.xlu0 4
        %3187 = vperm.xlu0 %3186, %v2693
        %v3188 = vpop.permute.xlu0 %3187
        %3190 = vset.pattern.permute.xlu0 4
        %3191 = vperm.xlu0 %3190, %v2694
        %v3192 = vpop.permute.xlu0 %3191
        %3194 = vset.pattern.permute.xlu0 4
        %3195 = vperm.xlu0 %3194, %v2695
        %v3196 = vpop.permute.xlu0 %3195
        %3198 = vset.pattern.permute.xlu0 4
        %3199 = vperm.xlu0 %3198, %v2696
        %v3200 = vpop.permute.xlu0 %3199
        %v3202 = vmul.f32 %v3156, %v2769
        %v3203 = vmul.f32 %v3160, %v2769
        %v3204 = vmul.f32 %v3164, %v2769
        %v3205 = vmul.f32 %v3168, %v2769
        %v3206 = vmul.f32 %v3172, %v2769
        %v3207 = vmul.f32 %v3176, %v2769
        %v3208 = vmul.f32 %v3180, %v2769
        %v3209 = vmul.f32 %v3184, %v2769
        %v3210 = vmul.f32 %v3188, %v2769
        %v3211 = vmul.f32 %v3192, %v2769
        %v3212 = vmul.f32 %v3196, %v2769
        %v3213 = vmul.f32 %v3200, %v2769
        %3226 = vrot.lane.b32.xlu0 %v3202, 124
        %v3227 = vpop.permute.xlu0 %3226
        %3228 = vrot.lane.b32.xlu0 %v3203, 124
        %v3229 = vpop.permute.xlu0 %3228
        %3230 = vrot.lane.b32.xlu0 %v3204, 124
        %v3231 = vpop.permute.xlu0 %3230
        %3232 = vrot.lane.b32.xlu0 %v3205, 124
        %v3233 = vpop.permute.xlu0 %3232
        %3234 = vrot.lane.b32.xlu0 %v3206, 124
        %v3235 = vpop.permute.xlu0 %3234
        %3236 = vrot.lane.b32.xlu0 %v3207, 124
        %v3237 = vpop.permute.xlu0 %3236
        %3238 = vrot.lane.b32.xlu0 %v3208, 124
        %v3239 = vpop.permute.xlu0 %3238
        %3240 = vrot.lane.b32.xlu0 %v3209, 124
        %v3241 = vpop.permute.xlu0 %3240
        %3242 = vrot.lane.b32.xlu0 %v3210, 124
        %v3243 = vpop.permute.xlu0 %3242
        %3244 = vrot.lane.b32.xlu0 %v3211, 124
        %v3245 = vpop.permute.xlu0 %3244
        %3246 = vrot.lane.b32.xlu0 %v3212, 124
        %v3247 = vpop.permute.xlu0 %3246
        %3248 = vrot.lane.b32.xlu0 %v3213, 124
        %v3249 = vpop.permute.xlu0 %3248
        %v3262 = vadd.f32 %v3142, %v3227
        %v3263 = vadd.f32 %v3143, %v3229
        %v3264 = vadd.f32 %v3144, %v3231
        %v3265 = vadd.f32 %v3145, %v3233
        %v3266 = vadd.f32 %v3146, %v3235
        %v3267 = vadd.f32 %v3147, %v3237
        %v3268 = vadd.f32 %v3148, %v3239
        %v3269 = vadd.f32 %v3149, %v3241
        %v3270 = vadd.f32 %v3150, %v3243
        %v3271 = vadd.f32 %v3151, %v3245
        %v3272 = vadd.f32 %v3152, %v3247
        %v3273 = vadd.f32 %v3153, %v3249
        %3274 = vset.pattern.permute.xlu0 5
        %3275 = vperm.xlu0 %3274, %v2685
        %v3276 = vpop.permute.xlu0 %3275
        %3278 = vset.pattern.permute.xlu0 5
        %3279 = vperm.xlu0 %3278, %v2686
        %v3280 = vpop.permute.xlu0 %3279
        %3282 = vset.pattern.permute.xlu0 5
        %3283 = vperm.xlu0 %3282, %v2687
        %v3284 = vpop.permute.xlu0 %3283
        %3286 = vset.pattern.permute.xlu0 5
        %3287 = vperm.xlu0 %3286, %v2688
        %v3288 = vpop.permute.xlu0 %3287
        %3290 = vset.pattern.permute.xlu0 5
        %3291 = vperm.xlu0 %3290, %v2689
        %v3292 = vpop.permute.xlu0 %3291
        %3294 = vset.pattern.permute.xlu0 5
        %3295 = vperm.xlu0 %3294, %v2690
        %v3296 = vpop.permute.xlu0 %3295
        %3298 = vset.pattern.permute.xlu0 5
        %3299 = vperm.xlu0 %3298, %v2691
        %v3300 = vpop.permute.xlu0 %3299
        %3302 = vset.pattern.permute.xlu0 5
        %3303 = vperm.xlu0 %3302, %v2692
        %v3304 = vpop.permute.xlu0 %3303
        %3306 = vset.pattern.permute.xlu0 5
        %3307 = vperm.xlu0 %3306, %v2693
        %v3308 = vpop.permute.xlu0 %3307
        %3310 = vset.pattern.permute.xlu0 5
        %3311 = vperm.xlu0 %3310, %v2694
        %v3312 = vpop.permute.xlu0 %3311
        %3314 = vset.pattern.permute.xlu0 5
        %3315 = vperm.xlu0 %3314, %v2695
        %v3316 = vpop.permute.xlu0 %3315
        %3318 = vset.pattern.permute.xlu0 5
        %3319 = vperm.xlu0 %3318, %v2696
        %v3320 = vpop.permute.xlu0 %3319
        %v3322 = vmul.f32 %v3276, %v2769
        %v3323 = vmul.f32 %v3280, %v2769
        %v3324 = vmul.f32 %v3284, %v2769
        %v3325 = vmul.f32 %v3288, %v2769
        %v3326 = vmul.f32 %v3292, %v2769
        %v3327 = vmul.f32 %v3296, %v2769
        %v3328 = vmul.f32 %v3300, %v2769
        %v3329 = vmul.f32 %v3304, %v2769
        %v3330 = vmul.f32 %v3308, %v2769
        %v3331 = vmul.f32 %v3312, %v2769
        %v3332 = vmul.f32 %v3316, %v2769
        %v3333 = vmul.f32 %v3320, %v2769
        %3346 = vrot.lane.b32.xlu0 %v3322, 123
        %v3347 = vpop.permute.xlu0 %3346
        %3348 = vrot.lane.b32.xlu0 %v3323, 123
        %v3349 = vpop.permute.xlu0 %3348
        %3350 = vrot.lane.b32.xlu0 %v3324, 123
        %v3351 = vpop.permute.xlu0 %3350
        %3352 = vrot.lane.b32.xlu0 %v3325, 123
        %v3353 = vpop.permute.xlu0 %3352
        %3354 = vrot.lane.b32.xlu0 %v3326, 123
        %v3355 = vpop.permute.xlu0 %3354
        %3356 = vrot.lane.b32.xlu0 %v3327, 123
        %v3357 = vpop.permute.xlu0 %3356
        %3358 = vrot.lane.b32.xlu0 %v3328, 123
        %v3359 = vpop.permute.xlu0 %3358
        %3360 = vrot.lane.b32.xlu0 %v3329, 123
        %v3361 = vpop.permute.xlu0 %3360
        %3362 = vrot.lane.b32.xlu0 %v3330, 123
        %v3363 = vpop.permute.xlu0 %3362
        %3364 = vrot.lane.b32.xlu0 %v3331, 123
        %v3365 = vpop.permute.xlu0 %3364
        %3366 = vrot.lane.b32.xlu0 %v3332, 123
        %v3367 = vpop.permute.xlu0 %3366
        %3368 = vrot.lane.b32.xlu0 %v3333, 123
        %v3369 = vpop.permute.xlu0 %3368
        %v3382 = vadd.f32 %v3262, %v3347
        %v3383 = vadd.f32 %v3263, %v3349
        %v3384 = vadd.f32 %v3264, %v3351
        %v3385 = vadd.f32 %v3265, %v3353
        %v3386 = vadd.f32 %v3266, %v3355
        %v3387 = vadd.f32 %v3267, %v3357
        %v3388 = vadd.f32 %v3268, %v3359
        %v3389 = vadd.f32 %v3269, %v3361
        %v3390 = vadd.f32 %v3270, %v3363
        %v3391 = vadd.f32 %v3271, %v3365
        %v3392 = vadd.f32 %v3272, %v3367
        %v3393 = vadd.f32 %v3273, %v3369
        %3394 = vset.pattern.permute.xlu0 6
        %3395 = vperm.xlu0 %3394, %v2685
        %v3396 = vpop.permute.xlu0 %3395
        %3398 = vset.pattern.permute.xlu0 6
        %3399 = vperm.xlu0 %3398, %v2686
        %v3400 = vpop.permute.xlu0 %3399
        %3402 = vset.pattern.permute.xlu0 6
        %3403 = vperm.xlu0 %3402, %v2687
        %v3404 = vpop.permute.xlu0 %3403
        %3406 = vset.pattern.permute.xlu0 6
        %3407 = vperm.xlu0 %3406, %v2688
        %v3408 = vpop.permute.xlu0 %3407
        %3410 = vset.pattern.permute.xlu0 6
        %3411 = vperm.xlu0 %3410, %v2689
        %v3412 = vpop.permute.xlu0 %3411
        %3414 = vset.pattern.permute.xlu0 6
        %3415 = vperm.xlu0 %3414, %v2690
        %v3416 = vpop.permute.xlu0 %3415
        %3418 = vset.pattern.permute.xlu0 6
        %3419 = vperm.xlu0 %3418, %v2691
        %v3420 = vpop.permute.xlu0 %3419
        %3422 = vset.pattern.permute.xlu0 6
        %3423 = vperm.xlu0 %3422, %v2692
        %v3424 = vpop.permute.xlu0 %3423
        %3426 = vset.pattern.permute.xlu0 6
        %3427 = vperm.xlu0 %3426, %v2693
        %v3428 = vpop.permute.xlu0 %3427
        %3430 = vset.pattern.permute.xlu0 6
        %3431 = vperm.xlu0 %3430, %v2694
        %v3432 = vpop.permute.xlu0 %3431
        %3434 = vset.pattern.permute.xlu0 6
        %3435 = vperm.xlu0 %3434, %v2695
        %v3436 = vpop.permute.xlu0 %3435
        %3438 = vset.pattern.permute.xlu0 6
        %3439 = vperm.xlu0 %3438, %v2696
        %v3440 = vpop.permute.xlu0 %3439
        %v3442 = vmul.f32 %v3396, %v2769
        %v3443 = vmul.f32 %v3400, %v2769
        %v3444 = vmul.f32 %v3404, %v2769
        %v3445 = vmul.f32 %v3408, %v2769
        %v3446 = vmul.f32 %v3412, %v2769
        %v3447 = vmul.f32 %v3416, %v2769
        %v3448 = vmul.f32 %v3420, %v2769
        %v3449 = vmul.f32 %v3424, %v2769
        %v3450 = vmul.f32 %v3428, %v2769
        %v3451 = vmul.f32 %v3432, %v2769
        %v3452 = vmul.f32 %v3436, %v2769
        %v3453 = vmul.f32 %v3440, %v2769
        %3466 = vrot.lane.b32.xlu0 %v3442, 122
        %v3467 = vpop.permute.xlu0 %3466
        %3468 = vrot.lane.b32.xlu0 %v3443, 122
        %v3469 = vpop.permute.xlu0 %3468
        %3470 = vrot.lane.b32.xlu0 %v3444, 122
        %v3471 = vpop.permute.xlu0 %3470
        %3472 = vrot.lane.b32.xlu0 %v3445, 122
        %v3473 = vpop.permute.xlu0 %3472
        %3474 = vrot.lane.b32.xlu0 %v3446, 122
        %v3475 = vpop.permute.xlu0 %3474
        %3476 = vrot.lane.b32.xlu0 %v3447, 122
        %v3477 = vpop.permute.xlu0 %3476
        %3478 = vrot.lane.b32.xlu0 %v3448, 122
        %v3479 = vpop.permute.xlu0 %3478
        %3480 = vrot.lane.b32.xlu0 %v3449, 122
        %v3481 = vpop.permute.xlu0 %3480
        %3482 = vrot.lane.b32.xlu0 %v3450, 122
        %v3483 = vpop.permute.xlu0 %3482
        %3484 = vrot.lane.b32.xlu0 %v3451, 122
        %v3485 = vpop.permute.xlu0 %3484
        %3486 = vrot.lane.b32.xlu0 %v3452, 122
        %v3487 = vpop.permute.xlu0 %3486
        %3488 = vrot.lane.b32.xlu0 %v3453, 122
        %v3489 = vpop.permute.xlu0 %3488
        %v3502 = vadd.f32 %v3382, %v3467
        %v3503 = vadd.f32 %v3383, %v3469
        %v3504 = vadd.f32 %v3384, %v3471
        %v3505 = vadd.f32 %v3385, %v3473
        %v3506 = vadd.f32 %v3386, %v3475
        %v3507 = vadd.f32 %v3387, %v3477
        %v3508 = vadd.f32 %v3388, %v3479
        %v3509 = vadd.f32 %v3389, %v3481
        %v3510 = vadd.f32 %v3390, %v3483
        %v3511 = vadd.f32 %v3391, %v3485
        %v3512 = vadd.f32 %v3392, %v3487
        %v3513 = vadd.f32 %v3393, %v3489
        %3515 = vset.pattern.permute.xlu0 0
        %3516 = vperm.xlu0 %3515, %v2697
        %v3517 = vpop.permute.xlu0 %3516
        %3520 = vset.pattern.permute.xlu0 0
        %3521 = vperm.xlu0 %3520, %v2698
        %v3522 = vpop.permute.xlu0 %3521
        %3525 = vset.pattern.permute.xlu0 0
        %3526 = vperm.xlu0 %3525, %v2699
        %v3527 = vpop.permute.xlu0 %3526
        %3530 = vset.pattern.permute.xlu0 0
        %3531 = vperm.xlu0 %3530, %v2700
        %v3532 = vpop.permute.xlu0 %3531
        %3535 = vset.pattern.permute.xlu0 0
        %3536 = vperm.xlu0 %3535, %v2701
        %v3537 = vpop.permute.xlu0 %3536
        %3540 = vset.pattern.permute.xlu0 0
        %3541 = vperm.xlu0 %3540, %v2702
        %v3542 = vpop.permute.xlu0 %3541
        %3545 = vset.pattern.permute.xlu0 0
        %3546 = vperm.xlu0 %3545, %v2703
        %v3547 = vpop.permute.xlu0 %3546
        %3550 = vset.pattern.permute.xlu0 0
        %3551 = vperm.xlu0 %3550, %v2704
        %v3552 = vpop.permute.xlu0 %3551
        %3555 = vset.pattern.permute.xlu0 0
        %3556 = vperm.xlu0 %3555, %v2705
        %v3557 = vpop.permute.xlu0 %3556
        %3560 = vset.pattern.permute.xlu0 0
        %3561 = vperm.xlu0 %3560, %v2706
        %v3562 = vpop.permute.xlu0 %3561
        %3565 = vset.pattern.permute.xlu0 0
        %3566 = vperm.xlu0 %3565, %v2707
        %v3567 = vpop.permute.xlu0 %3566
        %3570 = vset.pattern.permute.xlu0 0
        %3571 = vperm.xlu0 %3570, %v2708
        %v3572 = vpop.permute.xlu0 %3571
        %v3574 = vadd.f32 %v3502, %v3517
        %v3575 = vadd.f32 %v3503, %v3522
        %v3576 = vadd.f32 %v3504, %v3527
        %v3577 = vadd.f32 %v3505, %v3532
        %v3578 = vadd.f32 %v3506, %v3537
        %v3579 = vadd.f32 %v3507, %v3542
        %v3580 = vadd.f32 %v3508, %v3547
        %v3581 = vadd.f32 %v3509, %v3552
        %v3582 = vadd.f32 %v3510, %v3557
        %v3583 = vadd.f32 %v3511, %v3562
        %v3584 = vadd.f32 %v3512, %v3567
        %v3585 = vadd.f32 %v3513, %v3572
        %vm3586 = vcmask 211968
        %v3587 = vsel %vm3586, %v3574, 0.0
        %3588 = vadd.xlane.f32.xlu0 %v3587
        %v3589 = vpop.xlane.xlu0 %3588
        %v3590 = vsel %vm3586, %v3575, 0.0
        %3591 = vadd.xlane.f32.xlu0 %v3590
        %v3592 = vpop.xlane.xlu0 %3591
        %v3593 = vsel %vm3586, %v3576, 0.0
        %3594 = vadd.xlane.f32.xlu0 %v3593
        %v3595 = vpop.xlane.xlu0 %3594
        %v3596 = vsel %vm3586, %v3577, 0.0
        %3597 = vadd.xlane.f32.xlu0 %v3596
        %v3598 = vpop.xlane.xlu0 %3597
        %v3599 = vsel %vm3586, %v3578, 0.0
        %3600 = vadd.xlane.f32.xlu0 %v3599
        %v3601 = vpop.xlane.xlu0 %3600
        %v3602 = vsel %vm3586, %v3579, 0.0
        %3603 = vadd.xlane.f32.xlu0 %v3602
        %v3604 = vpop.xlane.xlu0 %3603
        %v3605 = vsel %vm3586, %v3580, 0.0
        %3606 = vadd.xlane.f32.xlu0 %v3605
        %v3607 = vpop.xlane.xlu0 %3606
        %v3608 = vsel %vm3586, %v3581, 0.0
        %3609 = vadd.xlane.f32.xlu0 %v3608
        %v3610 = vpop.xlane.xlu0 %3609
        %v3611 = vsel %vm3586, %v3582, 0.0
        %3612 = vadd.xlane.f32.xlu0 %v3611
        %v3613 = vpop.xlane.xlu0 %3612
        %v3614 = vsel %vm3586, %v3583, 0.0
        %3615 = vadd.xlane.f32.xlu0 %v3614
        %v3616 = vpop.xlane.xlu0 %3615
        %v3617 = vsel %vm3586, %v3584, 0.0
        %3618 = vadd.xlane.f32.xlu0 %v3617
        %v3619 = vpop.xlane.xlu0 %3618
        %v3620 = vsel %vm3586, %v3585, 0.0
        %3621 = vadd.xlane.f32.xlu0 %v3620
        %v3622 = vpop.xlane.xlu0 %3621
        %v3623 = vmul.f32 %v3589, 0.03846154
        %v3624 = vmul.f32 %v3592, 0.03846154
        %v3625 = vmul.f32 %v3595, 0.03846154
        %v3626 = vmul.f32 %v3598, 0.03846154
        %v3627 = vmul.f32 %v3601, 0.03846154
        %v3628 = vmul.f32 %v3604, 0.03846154
        %v3629 = vmul.f32 %v3607, 0.03846154
        %v3630 = vmul.f32 %v3610, 0.03846154
        %v3631 = vmul.f32 %v3613, 0.03846154
        %v3632 = vmul.f32 %v3616, 0.03846154
        %v3633 = vmul.f32 %v3619, 0.03846154
        %v3634 = vmul.f32 %v3622, 0.03846154
        %3635 = vmatpush.msra.mxu0 0.0
        %3636 = vmatpush.msra.mxu0 0.0
        %3637 = vmatpush.msra.mxu0 0.0
        %3638 = vmatpush.msra.mxu0 0.0
        %3639 = vmatpush.msra.mxu0 %v3634
        %3640 = vmatpush.msra.mxu0 %v3633
        %3641 = vmatpush.msra.mxu0 %v3632
        %3642 = vmatpush.msra.mxu0 %v3631
        %3643 = vmatpush.msra.mxu0 %v3630
        %3644 = vmatpush.msra.mxu0 %v3629
        %3645 = vmatpush.msra.mxu0 %v3628
        %3646 = vmatpush.msra.mxu0 %v3627
        %3647 = vmatpush.msra.mxu0 %v3626
        %3648 = vmatpush.msra.mxu0 %v3625
        %3649 = vmatpush.msra.mxu0 %v3624
        %3650 = vmatpush.msra.mxu0 %v3623
        %3651 = vmatmul.f32.gmra.mxu0 %v2077
        %v3652 = vpop.f32.mrf.mxu0
        %v3653 = vadd.f32 %v2074, %v3652
        %3654 = vmatmul.f32.gmra.mxu0 %v2080
        %v3655 = vpop.f32.mrf.mxu0
        %v3656 = vadd.f32 %v2075, %v3655
        %3657 = vdwg.mxu0
        %v3658 = vmax.f32 %v3653, 0.0
        %v3659 = vmax.f32 %v3656, 0.0
        %v3661 = vsel %vm2168, %v3659, 0
        %3663 = vmatpush.msra.mxu0 0.0
        %3664 = vmatpush.msra.mxu0 0.0
        %3665 = vmatpush.msra.mxu0 0.0
        %3666 = vmatpush.msra.mxu0 0.0
        %3667 = vmatpush.msra.mxu0 0.0
        %3668 = vmatpush.msra.mxu0 0.0
        %3669 = vmatpush.msra.mxu0 0.0
        %3670 = vmatpush.msra.mxu0 0.0
        %3671 = vmatpush.msra.mxu0 0.0
        %3672 = vmatpush.msra.mxu0 0.0
        %3673 = vmatpush.msra.mxu0 0.0
        %3674 = vmatpush.msra.mxu0 0.0
        %3675 = vmatpush.msra.mxu0 0.0
        %3676 = vmatpush.msra.mxu0 0.0
        %3677 = vmatpush.msra.mxu0 %v3661
        %3678 = vmatpush.msra.mxu0 %v3658
        %3679 = vmatmul.f32.gmra.mxu0 %v2133
        %v3680 = vpop.f32.mrf.mxu0
        %v3681 = vadd.f32 %v2119, %v3680
        %3682 = vmatmul.f32.gmra.mxu0 %v2136
        %v3683 = vpop.f32.mrf.mxu0
        %v3684 = vadd.f32 %v2120, %v3683
        %3685 = vmatmul.f32.gmra.mxu0 %v2139
        %v3686 = vpop.f32.mrf.mxu0
        %v3687 = vadd.f32 %v2121, %v3686
        %3688 = vmatmul.f32.gmra.mxu0 %v2142
        %v3689 = vpop.f32.mrf.mxu0
        %v3690 = vadd.f32 %v2122, %v3689
        %3691 = vmatmul.f32.gmra.mxu0 %v2145
        %v3692 = vpop.f32.mrf.mxu0
        %v3693 = vadd.f32 %v2123, %v3692
        %3694 = vmatmul.f32.gmra.mxu0 %v2148
        %v3695 = vpop.f32.mrf.mxu0
        %v3696 = vadd.f32 %v2124, %v3695
        %3697 = vmatmul.f32.gmra.mxu0 %v2151
        %v3698 = vpop.f32.mrf.mxu0
        %v3699 = vadd.f32 %v2125, %v3698
        %3700 = vmatmul.f32.gmra.mxu0 %v2154
        %v3701 = vpop.f32.mrf.mxu0
        %v3702 = vadd.f32 %v2126, %v3701
        %3703 = vmatmul.f32.gmra.mxu0 %v2157
        %v3704 = vpop.f32.mrf.mxu0
        %v3705 = vadd.f32 %v2127, %v3704
        %3706 = vmatmul.f32.gmra.mxu0 %v2160
        %v3707 = vpop.f32.mrf.mxu0
        %v3708 = vadd.f32 %v2128, %v3707
        %3709 = vmatmul.f32.gmra.mxu0 %v2163
        %v3710 = vpop.f32.mrf.mxu0
        %v3711 = vadd.f32 %v2129, %v3710
        %3712 = vmatmul.f32.gmra.mxu0 %v2166
        %v3713 = vpop.f32.mrf.mxu0
        %v3714 = vadd.f32 %v2130, %v3713
        %3715 = vdwg.mxu0
        %v3716 = vxor.u32 %v3681, 2147483648
        %v3717 = vxor.u32 %v3684, 2147483648
        %v3718 = vxor.u32 %v3687, 2147483648
        %v3719 = vxor.u32 %v3690, 2147483648
        %v3720 = vxor.u32 %v3693, 2147483648
        %v3721 = vxor.u32 %v3696, 2147483648
        %v3722 = vxor.u32 %v3699, 2147483648
        %v3723 = vxor.u32 %v3702, 2147483648
        %v3724 = vxor.u32 %v3705, 2147483648
        %v3725 = vxor.u32 %v3708, 2147483648
        %v3726 = vxor.u32 %v3711, 2147483648
        %v3727 = vxor.u32 %v3714, 2147483648
        %v3728 = vmul.f32 %v3716, 1.442695
        %v3729 = vpow.pop %v3728
        %v3730 = vmul.f32 %v3717, 1.442695
        %v3731 = vpow.pop %v3730
        %v3732 = vmul.f32 %v3718, 1.442695
        %v3733 = vpow.pop %v3732
        %v3734 = vmul.f32 %v3719, 1.442695
        %v3735 = vpow.pop %v3734
        %v3736 = vmul.f32 %v3720, 1.442695
        %v3737 = vpow.pop %v3736
        %v3738 = vmul.f32 %v3721, 1.442695
        %v3739 = vpow.pop %v3738
        %v3740 = vmul.f32 %v3722, 1.442695
        %v3741 = vpow.pop %v3740
        %v3742 = vmul.f32 %v3723, 1.442695
        %v3743 = vpow.pop %v3742
        %v3744 = vmul.f32 %v3724, 1.442695
        %v3745 = vpow.pop %v3744
        %v3746 = vmul.f32 %v3725, 1.442695
        %v3747 = vpow.pop %v3746
        %v3748 = vmul.f32 %v3726, 1.442695
        %v3749 = vpow.pop %v3748
        %v3750 = vmul.f32 %v3727, 1.442695
        %v3751 = vpow.pop %v3750
        %v3752 = vadd.f32 %v3729, 1.0
        %v3753 = vadd.f32 %v3731, 1.0
        %v3754 = vadd.f32 %v3733, 1.0
        %v3755 = vadd.f32 %v3735, 1.0
        %v3756 = vadd.f32 %v3737, 1.0
        %v3757 = vadd.f32 %v3739, 1.0
        %v3758 = vadd.f32 %v3741, 1.0
        %v3759 = vadd.f32 %v3743, 1.0
        %v3760 = vadd.f32 %v3745, 1.0
        %v3761 = vadd.f32 %v3747, 1.0
        %v3762 = vadd.f32 %v3749, 1.0
        %v3763 = vadd.f32 %v3751, 1.0
        %v3764 = vrcp.pop %v3752
        %v3765 = vmul.f32 %v3752, %v3764
        %v3766 = vsub.f32 1.0, %v3765
        %v3767 = vmul.f32 %v3764, %v3766
        %v3768 = vadd.f32 %v3764, %v3767
        %vm3769 = vweird.f32 %v3752
        %vm3770 = vweird.f32 %v3764
        %vm3771 = vmor %vm3769, %vm3770
        %v3772 = vsel %vm3771, %v3764, %v3768
        %v3773 = vand.u32 2147483647, %v3752
        %vm3774 = vcmp.eq.f32.partialorder %v3773, 8.507059e+37
        %v3775 = vand.u32 %v3752, 2147483648
        %v3776 = vor.u32 1.1754944e-38, %v3775
        %v3777 = vsel %vm3774, %v3776, %v3772
        %v3778 = vmul.f32 1.0, %v3777
        %v3779 = vrcp.pop %v3753
        %v3780 = vmul.f32 %v3753, %v3779
        %v3781 = vsub.f32 1.0, %v3780
        %v3782 = vmul.f32 %v3779, %v3781
        %v3783 = vadd.f32 %v3779, %v3782
        %vm3784 = vweird.f32 %v3753
        %vm3785 = vweird.f32 %v3779
        %vm3786 = vmor %vm3784, %vm3785
        %v3787 = vsel %vm3786, %v3779, %v3783
        %v3788 = vand.u32 2147483647, %v3753
        %vm3789 = vcmp.eq.f32.partialorder %v3788, 8.507059e+37
        %v3790 = vand.u32 %v3753, 2147483648
        %v3791 = vor.u32 1.1754944e-38, %v3790
        %v3792 = vsel %vm3789, %v3791, %v3787
        %v3793 = vmul.f32 1.0, %v3792
        %v3794 = vrcp.pop %v3754
        %v3795 = vmul.f32 %v3754, %v3794
        %v3796 = vsub.f32 1.0, %v3795
        %v3797 = vmul.f32 %v3794, %v3796
        %v3798 = vadd.f32 %v3794, %v3797
        %vm3799 = vweird.f32 %v3754
        %vm3800 = vweird.f32 %v3794
        %vm3801 = vmor %vm3799, %vm3800
        %v3802 = vsel %vm3801, %v3794, %v3798
        %v3803 = vand.u32 2147483647, %v3754
        %vm3804 = vcmp.eq.f32.partialorder %v3803, 8.507059e+37
        %v3805 = vand.u32 %v3754, 2147483648
        %v3806 = vor.u32 1.1754944e-38, %v3805
        %v3807 = vsel %vm3804, %v3806, %v3802
        %v3808 = vmul.f32 1.0, %v3807
        %v3809 = vrcp.pop %v3755
        %v3810 = vmul.f32 %v3755, %v3809
        %v3811 = vsub.f32 1.0, %v3810
        %v3812 = vmul.f32 %v3809, %v3811
        %v3813 = vadd.f32 %v3809, %v3812
        %vm3814 = vweird.f32 %v3755
        %vm3815 = vweird.f32 %v3809
        %vm3816 = vmor %vm3814, %vm3815
        %v3817 = vsel %vm3816, %v3809, %v3813
        %v3818 = vand.u32 2147483647, %v3755
        %vm3819 = vcmp.eq.f32.partialorder %v3818, 8.507059e+37
        %v3820 = vand.u32 %v3755, 2147483648
        %v3821 = vor.u32 1.1754944e-38, %v3820
        %v3822 = vsel %vm3819, %v3821, %v3817
        %v3823 = vmul.f32 1.0, %v3822
        %v3824 = vrcp.pop %v3756
        %v3825 = vmul.f32 %v3756, %v3824
        %v3826 = vsub.f32 1.0, %v3825
        %v3827 = vmul.f32 %v3824, %v3826
        %v3828 = vadd.f32 %v3824, %v3827
        %vm3829 = vweird.f32 %v3756
        %vm3830 = vweird.f32 %v3824
        %vm3831 = vmor %vm3829, %vm3830
        %v3832 = vsel %vm3831, %v3824, %v3828
        %v3833 = vand.u32 2147483647, %v3756
        %vm3834 = vcmp.eq.f32.partialorder %v3833, 8.507059e+37
        %v3835 = vand.u32 %v3756, 2147483648
        %v3836 = vor.u32 1.1754944e-38, %v3835
        %v3837 = vsel %vm3834, %v3836, %v3832
        %v3838 = vmul.f32 1.0, %v3837
        %v3839 = vrcp.pop %v3757
        %v3840 = vmul.f32 %v3757, %v3839
        %v3841 = vsub.f32 1.0, %v3840
        %v3842 = vmul.f32 %v3839, %v3841
        %v3843 = vadd.f32 %v3839, %v3842
        %vm3844 = vweird.f32 %v3757
        %vm3845 = vweird.f32 %v3839
        %vm3846 = vmor %vm3844, %vm3845
        %v3847 = vsel %vm3846, %v3839, %v3843
        %v3848 = vand.u32 2147483647, %v3757
        %vm3849 = vcmp.eq.f32.partialorder %v3848, 8.507059e+37
        %v3850 = vand.u32 %v3757, 2147483648
        %v3851 = vor.u32 1.1754944e-38, %v3850
        %v3852 = vsel %vm3849, %v3851, %v3847
        %v3853 = vmul.f32 1.0, %v3852
        %v3854 = vrcp.pop %v3758
        %v3855 = vmul.f32 %v3758, %v3854
        %v3856 = vsub.f32 1.0, %v3855
        %v3857 = vmul.f32 %v3854, %v3856
        %v3858 = vadd.f32 %v3854, %v3857
        %vm3859 = vweird.f32 %v3758
        %vm3860 = vweird.f32 %v3854
        %vm3861 = vmor %vm3859, %vm3860
        %v3862 = vsel %vm3861, %v3854, %v3858
        %v3863 = vand.u32 2147483647, %v3758
        %vm3864 = vcmp.eq.f32.partialorder %v3863, 8.507059e+37
        %v3865 = vand.u32 %v3758, 2147483648
        %v3866 = vor.u32 1.1754944e-38, %v3865
        %v3867 = vsel %vm3864, %v3866, %v3862
        %v3868 = vmul.f32 1.0, %v3867
        %v3869 = vrcp.pop %v3759
        %v3870 = vmul.f32 %v3759, %v3869
        %v3871 = vsub.f32 1.0, %v3870
        %v3872 = vmul.f32 %v3869, %v3871
        %v3873 = vadd.f32 %v3869, %v3872
        %vm3874 = vweird.f32 %v3759
        %vm3875 = vweird.f32 %v3869
        %vm3876 = vmor %vm3874, %vm3875
        %v3877 = vsel %vm3876, %v3869, %v3873
        %v3878 = vand.u32 2147483647, %v3759
        %vm3879 = vcmp.eq.f32.partialorder %v3878, 8.507059e+37
        %v3880 = vand.u32 %v3759, 2147483648
        %v3881 = vor.u32 1.1754944e-38, %v3880
        %v3882 = vsel %vm3879, %v3881, %v3877
        %v3883 = vmul.f32 1.0, %v3882
        %v3884 = vrcp.pop %v3760
        %v3885 = vmul.f32 %v3760, %v3884
        %v3886 = vsub.f32 1.0, %v3885
        %v3887 = vmul.f32 %v3884, %v3886
        %v3888 = vadd.f32 %v3884, %v3887
        %vm3889 = vweird.f32 %v3760
        %vm3890 = vweird.f32 %v3884
        %vm3891 = vmor %vm3889, %vm3890
        %v3892 = vsel %vm3891, %v3884, %v3888
        %v3893 = vand.u32 2147483647, %v3760
        %vm3894 = vcmp.eq.f32.partialorder %v3893, 8.507059e+37
        %v3895 = vand.u32 %v3760, 2147483648
        %v3896 = vor.u32 1.1754944e-38, %v3895
        %v3897 = vsel %vm3894, %v3896, %v3892
        %v3898 = vmul.f32 1.0, %v3897
        %v3899 = vrcp.pop %v3761
        %v3900 = vmul.f32 %v3761, %v3899
        %v3901 = vsub.f32 1.0, %v3900
        %v3902 = vmul.f32 %v3899, %v3901
        %v3903 = vadd.f32 %v3899, %v3902
        %vm3904 = vweird.f32 %v3761
        %vm3905 = vweird.f32 %v3899
        %vm3906 = vmor %vm3904, %vm3905
        %v3907 = vsel %vm3906, %v3899, %v3903
        %v3908 = vand.u32 2147483647, %v3761
        %vm3909 = vcmp.eq.f32.partialorder %v3908, 8.507059e+37
        %v3910 = vand.u32 %v3761, 2147483648
        %v3911 = vor.u32 1.1754944e-38, %v3910
        %v3912 = vsel %vm3909, %v3911, %v3907
        %v3913 = vmul.f32 1.0, %v3912
        %v3914 = vrcp.pop %v3762
        %v3915 = vmul.f32 %v3762, %v3914
        %v3916 = vsub.f32 1.0, %v3915
        %v3917 = vmul.f32 %v3914, %v3916
        %v3918 = vadd.f32 %v3914, %v3917
        %vm3919 = vweird.f32 %v3762
        %vm3920 = vweird.f32 %v3914
        %vm3921 = vmor %vm3919, %vm3920
        %v3922 = vsel %vm3921, %v3914, %v3918
        %v3923 = vand.u32 2147483647, %v3762
        %vm3924 = vcmp.eq.f32.partialorder %v3923, 8.507059e+37
        %v3925 = vand.u32 %v3762, 2147483648
        %v3926 = vor.u32 1.1754944e-38, %v3925
        %v3927 = vsel %vm3924, %v3926, %v3922
        %v3928 = vmul.f32 1.0, %v3927
        %v3929 = vrcp.pop %v3763
        %v3930 = vmul.f32 %v3763, %v3929
        %v3931 = vsub.f32 1.0, %v3930
        %v3932 = vmul.f32 %v3929, %v3931
        %v3933 = vadd.f32 %v3929, %v3932
        %vm3934 = vweird.f32 %v3763
        %vm3935 = vweird.f32 %v3929
        %vm3936 = vmor %vm3934, %vm3935
        %v3937 = vsel %vm3936, %v3929, %v3933
        %v3938 = vand.u32 2147483647, %v3763
        %vm3939 = vcmp.eq.f32.partialorder %v3938, 8.507059e+37
        %v3940 = vand.u32 %v3763, 2147483648
        %v3941 = vor.u32 1.1754944e-38, %v3940
        %v3942 = vsel %vm3939, %v3941, %v3937
        %v3943 = vmul.f32 1.0, %v3942
        %3945 = vset.pattern.permute.xlu0 0
        %3946 = vperm.xlu0 %3945, %v3778
        %v3947 = vpop.permute.xlu0 %3946
        %3950 = vset.pattern.permute.xlu0 0
        %3951 = vperm.xlu0 %3950, %v3793
        %v3952 = vpop.permute.xlu0 %3951
        %3955 = vset.pattern.permute.xlu0 0
        %3956 = vperm.xlu0 %3955, %v3808
        %v3957 = vpop.permute.xlu0 %3956
        %3960 = vset.pattern.permute.xlu0 0
        %3961 = vperm.xlu0 %3960, %v3823
        %v3962 = vpop.permute.xlu0 %3961
        %3965 = vset.pattern.permute.xlu0 0
        %3966 = vperm.xlu0 %3965, %v3838
        %v3967 = vpop.permute.xlu0 %3966
        %3970 = vset.pattern.permute.xlu0 0
        %3971 = vperm.xlu0 %3970, %v3853
        %v3972 = vpop.permute.xlu0 %3971
        %3975 = vset.pattern.permute.xlu0 0
        %3976 = vperm.xlu0 %3975, %v3868
        %v3977 = vpop.permute.xlu0 %3976
        %3980 = vset.pattern.permute.xlu0 0
        %3981 = vperm.xlu0 %3980, %v3883
        %v3982 = vpop.permute.xlu0 %3981
        %3985 = vset.pattern.permute.xlu0 0
        %3986 = vperm.xlu0 %3985, %v3898
        %v3987 = vpop.permute.xlu0 %3986
        %3990 = vset.pattern.permute.xlu0 0
        %3991 = vperm.xlu0 %3990, %v3913
        %v3992 = vpop.permute.xlu0 %3991
        %3995 = vset.pattern.permute.xlu0 0
        %3996 = vperm.xlu0 %3995, %v3928
        %v3997 = vpop.permute.xlu0 %3996
        %4000 = vset.pattern.permute.xlu0 0
        %4001 = vperm.xlu0 %4000, %v3943
        %v4002 = vpop.permute.xlu0 %4001
        %v4004 = vmul.f32 %v3574, %v3947
        %v4005 = vmul.f32 %v3575, %v3952
        %v4006 = vmul.f32 %v3576, %v3957
        %v4007 = vmul.f32 %v3577, %v3962
        %v4008 = vmul.f32 %v3578, %v3967
        %v4009 = vmul.f32 %v3579, %v3972
        %v4010 = vmul.f32 %v3580, %v3977
        %v4011 = vmul.f32 %v3581, %v3982
        %v4012 = vmul.f32 %v3582, %v3987
        %v4013 = vmul.f32 %v3583, %v3992
        %v4014 = vmul.f32 %v3584, %v3997
        %v4015 = vmul.f32 %v3585, %v4002
        %v4016 = vtanh.pop %v4004
        %v4017 = vtanh.pop %v4005
        %v4018 = vtanh.pop %v4006
        %v4019 = vtanh.pop %v4007
        %v4020 = vtanh.pop %v4008
        %v4021 = vtanh.pop %v4009
        %v4022 = vtanh.pop %v4010
        %v4023 = vtanh.pop %v4011
        %v4024 = vtanh.pop %v4012
        %v4025 = vtanh.pop %v4013
        %v4026 = vtanh.pop %v4014
        %v4027 = vtanh.pop %v4015
        %v4028 = vmul.u32 %v1037, 2
        %v4029 = vmul.u32 %v1038, 2
        %v4030 = vadd.s32 %v4028, 6
        %v4031 = vadd.s32 %v4029, 6
        %vm4032 = vcmp.eq.s32.totalorder %v1052, %v4030
        %vm4033 = vcmp.eq.s32.totalorder %v1052, %v4031
        %v4034 = vsel %vm4032, 1.0, 0.0
        %v4035 = vsel %vm4033, 1.0, 0.0
        %v4037 = vsel %vm3586, %v4016, 0
        %v4040 = vsel %vm3586, %v4017, 0
        %v4043 = vsel %vm3586, %v4018, 0
        %v4046 = vsel %vm3586, %v4019, 0
        %v4049 = vsel %vm3586, %v4020, 0
        %v4052 = vsel %vm3586, %v4021, 0
        %v4055 = vsel %vm3586, %v4022, 0
        %v4058 = vsel %vm3586, %v4023, 0
        %v4061 = vsel %vm3586, %v4024, 0
        %v4064 = vsel %vm3586, %v4025, 0
        %v4067 = vsel %vm3586, %v4026, 0
        %v4070 = vsel %vm3586, %v4027, 0
        %v4073 = vsel %vm1132, %v4035, 0
        %4075 = vmatpush.msra.mxu0 0.0
        %4076 = vmatpush.msra.mxu0 0.0
        %4077 = vmatpush.msra.mxu0 0.0
        %4078 = vmatpush.msra.mxu0 0.0
        %4079 = vmatpush.msra.mxu0 0.0
        %4080 = vmatpush.msra.mxu0 0.0
        %4081 = vmatpush.msra.mxu0 0.0
        %4082 = vmatpush.msra.mxu0 0.0
        %4083 = vmatpush.msra.mxu0 0.0
        %4084 = vmatpush.msra.mxu0 0.0
        %4085 = vmatpush.msra.mxu0 0.0
        %4086 = vmatpush.msra.mxu0 0.0
        %4087 = vmatpush.msra.mxu0 %v4073
        %4088 = vmatpush.msra.mxu0 %v4034
        %4089 = vmatpush.msra.mxu0 %v2657
        %4090 = vmatpush.msra.mxu0 %v2656
        %4091 = vmatmul.f32.gmra.mxu0 %v4037
        %v4092 = vpop.f32.mrf.mxu0
        %v4093 = vadd.f32 0.0, %v4092
        %4094 = vmatmul.f32.gmra.mxu0 %v4040
        %v4095 = vpop.f32.mrf.mxu0
        %v4096 = vadd.f32 0.0, %v4095
        %4097 = vmatmul.f32.gmra.mxu0 %v4043
        %v4098 = vpop.f32.mrf.mxu0
        %v4099 = vadd.f32 0.0, %v4098
        %4100 = vmatmul.f32.gmra.mxu0 %v4046
        %v4101 = vpop.f32.mrf.mxu0
        %v4102 = vadd.f32 0.0, %v4101
        %4103 = vmatmul.f32.gmra.mxu0 %v4049
        %v4104 = vpop.f32.mrf.mxu0
        %v4105 = vadd.f32 0.0, %v4104
        %4106 = vmatmul.f32.gmra.mxu0 %v4052
        %v4107 = vpop.f32.mrf.mxu0
        %v4108 = vadd.f32 0.0, %v4107
        %4109 = vmatmul.f32.gmra.mxu0 %v4055
        %v4110 = vpop.f32.mrf.mxu0
        %v4111 = vadd.f32 0.0, %v4110
        %4112 = vmatmul.f32.gmra.mxu0 %v4058
        %v4113 = vpop.f32.mrf.mxu0
        %v4114 = vadd.f32 0.0, %v4113
        %4115 = vmatmul.f32.gmra.mxu0 %v4061
        %v4116 = vpop.f32.mrf.mxu0
        %v4117 = vadd.f32 0.0, %v4116
        %4118 = vmatmul.f32.gmra.mxu0 %v4064
        %v4119 = vpop.f32.mrf.mxu0
        %v4120 = vadd.f32 0.0, %v4119
        %4121 = vmatmul.f32.gmra.mxu0 %v4067
        %v4122 = vpop.f32.mrf.mxu0
        %v4123 = vadd.f32 0.0, %v4122
        %4124 = vmatmul.f32.gmra.mxu0 %v4070
        %v4125 = vpop.f32.mrf.mxu0
        %v4126 = vadd.f32 0.0, %v4125
        %4127 = vdwg.mxu0
        %v4128 = vld [vmem:[%s15] sm:$0xff]
        %v4129 = vld [vmem:[%s15 + $0x8] sm:$0xff]
        %v4130 = vld [vmem:[%s15 + $0x10] sm:$0xff]
        %v4131 = vld [vmem:[%s15 + $0x18] sm:$0xff]
        %v4132 = vld [vmem:[%s15 + $0x20] sm:$0xff]
        %v4133 = vld [vmem:[%s15 + $0x28] sm:$0xff]
        %v4134 = vld [vmem:[%s15 + $0x30] sm:$0xff]
        %v4135 = vld [vmem:[%s15 + $0x38] sm:$0xff]
        %v4136 = vld [vmem:[%s15 + $0x40] sm:$0xff]
        %v4137 = vld [vmem:[%s15 + $0x48] sm:$0xff]
        %v4138 = vld [vmem:[%s15 + $0x50] sm:$0xff]
        %v4139 = vld [vmem:[%s15 + $0x58] sm:$0xff]
        %v4140 = vld [vmem:[%s15 + $0x60] sm:$0xff]
        %v4141 = vld [vmem:[%s15 + $0x68] sm:$0xff]
        %v4142 = vld [vmem:[%s15 + $0x70] sm:$0xff]
        %v4143 = vld [vmem:[%s15 + $0x78] sm:$0xff]
        %v4144 = vld [vmem:[%s15 + $0x80] sm:$0xff]
        %v4145 = vld [vmem:[%s15 + $0x88] sm:$0xff]
        %v4146 = vld [vmem:[%s15 + $0x90] sm:$0xff]
        %v4147 = vld [vmem:[%s15 + $0x98] sm:$0xff]
        %v4148 = vld [vmem:[%s15 + $0xa0] sm:$0xff]
        %v4149 = vld [vmem:[%s15 + $0xa8] sm:$0xff]
        %v4150 = vld [vmem:[%s15 + $0xb0] sm:$0xff]
        %v4151 = vld [vmem:[%s15 + $0xb8] sm:$0xff]
        %v4152 = vld [vmem:[%s15 + $0xc0] sm:$0xff]
        %v4153 = vld [vmem:[%s15 + $0xc8] sm:$0xff]
        %v4154 = vld [vmem:[%s15 + $0xd0] sm:$0xff]
        %v4155 = vld [vmem:[%s15 + $0xd8] sm:$0xff]
        %v4156 = vld [vmem:[%s15 + $0xe0] sm:$0xff]
        %v4157 = vld [vmem:[%s15 + $0xe8] sm:$0xff]
        %v4158 = vld [vmem:[%s15 + $0xf0] sm:$0xff]
        %v4159 = vld [vmem:[%s15 + $0xf8] sm:$0xff]
        %v4160 = vld [vmem:[%s15 + $0x100] sm:$0xff]
        %v4161 = vld [vmem:[%s15 + $0x108] sm:$0xff]
        %v4162 = vld [vmem:[%s15 + $0x110] sm:$0xff]
        %v4163 = vld [vmem:[%s15 + $0x118] sm:$0xff]
        %v4164 = vld [vmem:[%s15 + $0x120] sm:$0xff]
        %v4165 = vld [vmem:[%s15 + $0x128] sm:$0xff]
        %v4166 = vld [vmem:[%s15 + $0x130] sm:$0xff]
        %v4167 = vld [vmem:[%s15 + $0x138] sm:$0xff]
        %v4168 = vld [vmem:[%s15 + $0x140] sm:$0xff]
        %v4169 = vld [vmem:[%s15 + $0x148] sm:$0xff]
        %v4170 = vld [vmem:[%s15 + $0x150] sm:$0xff]
        %v4171 = vld [vmem:[%s15 + $0x158] sm:$0xff]
        %v4172 = vld [vmem:[%s15 + $0x160] sm:$0xff]
        %v4173 = vld [vmem:[%s15 + $0x168] sm:$0xff]
        %v4174 = vld [vmem:[%s15 + $0x170] sm:$0xff]
        %v4175 = vld [vmem:[%s15 + $0x178] sm:$0xff]
        %v4176 = vld [vmem:[%s16] sm:$0xff]
        %v4177 = vld [vmem:[%s16 + $0x8] sm:$0xff]
        %v4178 = vld [vmem:[%s16 + $0x10] sm:$0xff]
        %v4179 = vld [vmem:[%s16 + $0x18] sm:$0xff]
        %v4180 = vld [vmem:[%s16 + $0x20] sm:$0xff]
        %v4181 = vld [vmem:[%s16 + $0x28] sm:$0xff]
        %v4182 = vld [vmem:[%s16 + $0x30] sm:$0xff]
        %v4183 = vld [vmem:[%s16 + $0x38] sm:$0xff]
        %4196 = vrot.lane.b32.xlu0 %v4093, 127
        %v4197 = vpop.permute.xlu0 %4196
        %4198 = vrot.lane.b32.xlu0 %v4096, 127
        %v4199 = vpop.permute.xlu0 %4198
        %4200 = vrot.lane.b32.xlu0 %v4099, 127
        %v4201 = vpop.permute.xlu0 %4200
        %4202 = vrot.lane.b32.xlu0 %v4102, 127
        %v4203 = vpop.permute.xlu0 %4202
        %4204 = vrot.lane.b32.xlu0 %v4105, 127
        %v4205 = vpop.permute.xlu0 %4204
        %4206 = vrot.lane.b32.xlu0 %v4108, 127
        %v4207 = vpop.permute.xlu0 %4206
        %4208 = vrot.lane.b32.xlu0 %v4111, 127
        %v4209 = vpop.permute.xlu0 %4208
        %4210 = vrot.lane.b32.xlu0 %v4114, 127
        %v4211 = vpop.permute.xlu0 %4210
        %4212 = vrot.lane.b32.xlu0 %v4117, 127
        %v4213 = vpop.permute.xlu0 %4212
        %4214 = vrot.lane.b32.xlu0 %v4120, 127
        %v4215 = vpop.permute.xlu0 %4214
        %4216 = vrot.lane.b32.xlu0 %v4123, 127
        %v4217 = vpop.permute.xlu0 %4216
        %4218 = vrot.lane.b32.xlu0 %v4126, 127
        %v4219 = vpop.permute.xlu0 %4218
        %4232 = vrot.lane.b32.xlu0 %v4093, 126
        %v4233 = vpop.permute.xlu0 %4232
        %4234 = vrot.lane.b32.xlu0 %v4096, 126
        %v4235 = vpop.permute.xlu0 %4234
        %4236 = vrot.lane.b32.xlu0 %v4099, 126
        %v4237 = vpop.permute.xlu0 %4236
        %4238 = vrot.lane.b32.xlu0 %v4102, 126
        %v4239 = vpop.permute.xlu0 %4238
        %4240 = vrot.lane.b32.xlu0 %v4105, 126
        %v4241 = vpop.permute.xlu0 %4240
        %4242 = vrot.lane.b32.xlu0 %v4108, 126
        %v4243 = vpop.permute.xlu0 %4242
        %4244 = vrot.lane.b32.xlu0 %v4111, 126
        %v4245 = vpop.permute.xlu0 %4244
        %4246 = vrot.lane.b32.xlu0 %v4114, 126
        %v4247 = vpop.permute.xlu0 %4246
        %4248 = vrot.lane.b32.xlu0 %v4117, 126
        %v4249 = vpop.permute.xlu0 %4248
        %4250 = vrot.lane.b32.xlu0 %v4120, 126
        %v4251 = vpop.permute.xlu0 %4250
        %4252 = vrot.lane.b32.xlu0 %v4123, 126
        %v4253 = vpop.permute.xlu0 %4252
        %4254 = vrot.lane.b32.xlu0 %v4126, 126
        %v4255 = vpop.permute.xlu0 %4254
        %4268 = vrot.lane.b32.xlu0 %v4093, 125
        %v4269 = vpop.permute.xlu0 %4268
        %4270 = vrot.lane.b32.xlu0 %v4096, 125
        %v4271 = vpop.permute.xlu0 %4270
        %4272 = vrot.lane.b32.xlu0 %v4099, 125
        %v4273 = vpop.permute.xlu0 %4272
        %4274 = vrot.lane.b32.xlu0 %v4102, 125
        %v4275 = vpop.permute.xlu0 %4274
        %4276 = vrot.lane.b32.xlu0 %v4105, 125
        %v4277 = vpop.permute.xlu0 %4276
        %4278 = vrot.lane.b32.xlu0 %v4108, 125
        %v4279 = vpop.permute.xlu0 %4278
        %4280 = vrot.lane.b32.xlu0 %v4111, 125
        %v4281 = vpop.permute.xlu0 %4280
        %4282 = vrot.lane.b32.xlu0 %v4114, 125
        %v4283 = vpop.permute.xlu0 %4282
        %4284 = vrot.lane.b32.xlu0 %v4117, 125
        %v4285 = vpop.permute.xlu0 %4284
        %4286 = vrot.lane.b32.xlu0 %v4120, 125
        %v4287 = vpop.permute.xlu0 %4286
        %4288 = vrot.lane.b32.xlu0 %v4123, 125
        %v4289 = vpop.permute.xlu0 %4288
        %4290 = vrot.lane.b32.xlu0 %v4126, 125
        %v4291 = vpop.permute.xlu0 %4290
        %4304 = vrot.lane.b32.xlu0 %v4093, 124
        %v4305 = vpop.permute.xlu0 %4304
        %4306 = vrot.lane.b32.xlu0 %v4096, 124
        %v4307 = vpop.permute.xlu0 %4306
        %4308 = vrot.lane.b32.xlu0 %v4099, 124
        %v4309 = vpop.permute.xlu0 %4308
        %4310 = vrot.lane.b32.xlu0 %v4102, 124
        %v4311 = vpop.permute.xlu0 %4310
        %4312 = vrot.lane.b32.xlu0 %v4105, 124
        %v4313 = vpop.permute.xlu0 %4312
        %4314 = vrot.lane.b32.xlu0 %v4108, 124
        %v4315 = vpop.permute.xlu0 %4314
        %4316 = vrot.lane.b32.xlu0 %v4111, 124
        %v4317 = vpop.permute.xlu0 %4316
        %4318 = vrot.lane.b32.xlu0 %v4114, 124
        %v4319 = vpop.permute.xlu0 %4318
        %4320 = vrot.lane.b32.xlu0 %v4117, 124
        %v4321 = vpop.permute.xlu0 %4320
        %4322 = vrot.lane.b32.xlu0 %v4120, 124
        %v4323 = vpop.permute.xlu0 %4322
        %4324 = vrot.lane.b32.xlu0 %v4123, 124
        %v4325 = vpop.permute.xlu0 %4324
        %4326 = vrot.lane.b32.xlu0 %v4126, 124
        %v4327 = vpop.permute.xlu0 %4326
        %4340 = vrot.lane.b32.xlu0 %v4093, 123
        %v4341 = vpop.permute.xlu0 %4340
        %4342 = vrot.lane.b32.xlu0 %v4096, 123
        %v4343 = vpop.permute.xlu0 %4342
        %4344 = vrot.lane.b32.xlu0 %v4099, 123
        %v4345 = vpop.permute.xlu0 %4344
        %4346 = vrot.lane.b32.xlu0 %v4102, 123
        %v4347 = vpop.permute.xlu0 %4346
        %4348 = vrot.lane.b32.xlu0 %v4105, 123
        %v4349 = vpop.permute.xlu0 %4348
        %4350 = vrot.lane.b32.xlu0 %v4108, 123
        %v4351 = vpop.permute.xlu0 %4350
        %4352 = vrot.lane.b32.xlu0 %v4111, 123
        %v4353 = vpop.permute.xlu0 %4352
        %4354 = vrot.lane.b32.xlu0 %v4114, 123
        %v4355 = vpop.permute.xlu0 %4354
        %4356 = vrot.lane.b32.xlu0 %v4117, 123
        %v4357 = vpop.permute.xlu0 %4356
        %4358 = vrot.lane.b32.xlu0 %v4120, 123
        %v4359 = vpop.permute.xlu0 %4358
        %4360 = vrot.lane.b32.xlu0 %v4123, 123
        %v4361 = vpop.permute.xlu0 %4360
        %4362 = vrot.lane.b32.xlu0 %v4126, 123
        %v4363 = vpop.permute.xlu0 %4362
        %4376 = vrot.lane.b32.xlu0 %v4093, 122
        %v4377 = vpop.permute.xlu0 %4376
        %4378 = vrot.lane.b32.xlu0 %v4096, 122
        %v4379 = vpop.permute.xlu0 %4378
        %4380 = vrot.lane.b32.xlu0 %v4099, 122
        %v4381 = vpop.permute.xlu0 %4380
        %4382 = vrot.lane.b32.xlu0 %v4102, 122
        %v4383 = vpop.permute.xlu0 %4382
        %4384 = vrot.lane.b32.xlu0 %v4105, 122
        %v4385 = vpop.permute.xlu0 %4384
        %4386 = vrot.lane.b32.xlu0 %v4108, 122
        %v4387 = vpop.permute.xlu0 %4386
        %4388 = vrot.lane.b32.xlu0 %v4111, 122
        %v4389 = vpop.permute.xlu0 %4388
        %4390 = vrot.lane.b32.xlu0 %v4114, 122
        %v4391 = vpop.permute.xlu0 %4390
        %4392 = vrot.lane.b32.xlu0 %v4117, 122
        %v4393 = vpop.permute.xlu0 %4392
        %4394 = vrot.lane.b32.xlu0 %v4120, 122
        %v4395 = vpop.permute.xlu0 %4394
        %4396 = vrot.lane.b32.xlu0 %v4123, 122
        %v4397 = vpop.permute.xlu0 %4396
        %4398 = vrot.lane.b32.xlu0 %v4126, 122
        %v4399 = vpop.permute.xlu0 %4398
        %4413 = vset.pattern.permute.xlu0 0
        %4414 = vperm.xlu0 %4413, %v4176
        %v4415 = vpop.permute.xlu0 %4414
        %4418 = vset.pattern.permute.xlu0 0
        %4419 = vperm.xlu0 %4418, %v4177
        %v4420 = vpop.permute.xlu0 %4419
        %4423 = vset.pattern.permute.xlu0 0
        %4424 = vperm.xlu0 %4423, %v4178
        %v4425 = vpop.permute.xlu0 %4424
        %4428 = vset.pattern.permute.xlu0 0
        %4429 = vperm.xlu0 %4428, %v4179
        %v4430 = vpop.permute.xlu0 %4429
        %4433 = vset.pattern.permute.xlu0 0
        %4434 = vperm.xlu0 %4433, %v4180
        %v4435 = vpop.permute.xlu0 %4434
        %4438 = vset.pattern.permute.xlu0 0
        %4439 = vperm.xlu0 %4438, %v4181
        %v4440 = vpop.permute.xlu0 %4439
        %4443 = vset.pattern.permute.xlu0 0
        %4444 = vperm.xlu0 %4443, %v4182
        %v4445 = vpop.permute.xlu0 %4444
        %4448 = vset.pattern.permute.xlu0 0
        %4449 = vperm.xlu0 %4448, %v4183
        %v4450 = vpop.permute.xlu0 %4449
        %vm4452 = vcmask 261120
        %v4454 = vsel %vm4452, %v4133, 0
        %v4457 = vsel %vm4452, %v4139, 0
        %v4460 = vsel %vm4452, %v4145, 0
        %v4463 = vsel %vm4452, %v4151, 0
        %v4466 = vsel %vm4452, %v4157, 0
        %v4469 = vsel %vm4452, %v4163, 0
        %v4472 = vsel %vm4452, %v4169, 0
        %v4475 = vsel %vm4452, %v4175, 0
        %4477 = vmatpush.msra.mxu0 %v4203
        %4478 = vmatpush.msra.mxu0 %v4201
        %4479 = vmatpush.msra.mxu0 %v4199
        %4480 = vmatpush.msra.mxu0 %v4197
        %4481 = vmatpush.msra.mxu0 %v4126
        %4482 = vmatpush.msra.mxu0 %v4123
        %4483 = vmatpush.msra.mxu0 %v4120
        %4484 = vmatpush.msra.mxu0 %v4117
        %4485 = vmatpush.msra.mxu0 %v4114
        %4486 = vmatpush.msra.mxu0 %v4111
        %4487 = vmatpush.msra.mxu0 %v4108
        %4488 = vmatpush.msra.mxu0 %v4105
        %4489 = vmatpush.msra.mxu0 %v4102
        %4490 = vmatpush.msra.mxu0 %v4099
        %4491 = vmatpush.msra.mxu0 %v4096
        %4492 = vmatpush.msra.mxu0 %v4093
        %4493 = vmatmul.f32.gmra.mxu0 %v4128
        %v4494 = vpop.f32.mrf.mxu0
        %v4495 = vadd.f32 %v4415, %v4494
        %4496 = vmatmul.f32.gmra.mxu0 %v4134
        %v4497 = vpop.f32.mrf.mxu0
        %v4498 = vadd.f32 %v4420, %v4497
        %4499 = vmatmul.f32.gmra.mxu0 %v4140
        %v4500 = vpop.f32.mrf.mxu0
        %v4501 = vadd.f32 %v4425, %v4500
        %4502 = vmatmul.f32.gmra.mxu0 %v4146
        %v4503 = vpop.f32.mrf.mxu0
        %v4504 = vadd.f32 %v4430, %v4503
        %4505 = vmatmul.f32.gmra.mxu0 %v4152
        %v4506 = vpop.f32.mrf.mxu0
        %v4507 = vadd.f32 %v4435, %v4506
        %4508 = vmatmul.f32.gmra.mxu0 %v4158
        %v4509 = vpop.f32.mrf.mxu0
        %v4510 = vadd.f32 %v4440, %v4509
        %4511 = vmatmul.f32.gmra.mxu0 %v4164
        %v4512 = vpop.f32.mrf.mxu0
        %v4513 = vadd.f32 %v4445, %v4512
        %4514 = vmatmul.f32.gmra.mxu0 %v4170
        %v4515 = vpop.f32.mrf.mxu0
        %v4516 = vadd.f32 %v4450, %v4515
        %4517 = vdwg.mxu0
        %4518 = vmatpush.msra.mxu0 %v4247
        %4519 = vmatpush.msra.mxu0 %v4245
        %4520 = vmatpush.msra.mxu0 %v4243
        %4521 = vmatpush.msra.mxu0 %v4241
        %4522 = vmatpush.msra.mxu0 %v4239
        %4523 = vmatpush.msra.mxu0 %v4237
        %4524 = vmatpush.msra.mxu0 %v4235
        %4525 = vmatpush.msra.mxu0 %v4233
        %4526 = vmatpush.msra.mxu0 %v4219
        %4527 = vmatpush.msra.mxu0 %v4217
        %4528 = vmatpush.msra.mxu0 %v4215
        %4529 = vmatpush.msra.mxu0 %v4213
        %4530 = vmatpush.msra.mxu0 %v4211
        %4531 = vmatpush.msra.mxu0 %v4209
        %4532 = vmatpush.msra.mxu0 %v4207
        %4533 = vmatpush.msra.mxu0 %v4205
        %4534 = vmatmul.f32.gmra.mxu0 %v4129
        %v4535 = vpop.f32.mrf.mxu0
        %v4536 = vadd.f32 %v4495, %v4535
        %4537 = vmatmul.f32.gmra.mxu0 %v4135
        %v4538 = vpop.f32.mrf.mxu0
        %v4539 = vadd.f32 %v4498, %v4538
        %4540 = vmatmul.f32.gmra.mxu0 %v4141
        %v4541 = vpop.f32.mrf.mxu0
        %v4542 = vadd.f32 %v4501, %v4541
        %4543 = vmatmul.f32.gmra.mxu0 %v4147
        %v4544 = vpop.f32.mrf.mxu0
        %v4545 = vadd.f32 %v4504, %v4544
        %4546 = vmatmul.f32.gmra.mxu0 %v4153
        %v4547 = vpop.f32.mrf.mxu0
        %v4548 = vadd.f32 %v4507, %v4547
        %4549 = vmatmul.f32.gmra.mxu0 %v4159
        %v4550 = vpop.f32.mrf.mxu0
        %v4551 = vadd.f32 %v4510, %v4550
        %4552 = vmatmul.f32.gmra.mxu0 %v4165
        %v4553 = vpop.f32.mrf.mxu0
        %v4554 = vadd.f32 %v4513, %v4553
        %4555 = vmatmul.f32.gmra.mxu0 %v4171
        %v4556 = vpop.f32.mrf.mxu0
        %v4557 = vadd.f32 %v4516, %v4556
        %4558 = vdwg.mxu0
        %4559 = vmatpush.msra.mxu0 %v4291
        %4560 = vmatpush.msra.mxu0 %v4289
        %4561 = vmatpush.msra.mxu0 %v4287
        %4562 = vmatpush.msra.mxu0 %v4285
        %4563 = vmatpush.msra.mxu0 %v4283
        %4564 = vmatpush.msra.mxu0 %v4281
        %4565 = vmatpush.msra.mxu0 %v4279
        %4566 = vmatpush.msra.mxu0 %v4277
        %4567 = vmatpush.msra.mxu0 %v4275
        %4568 = vmatpush.msra.mxu0 %v4273
        %4569 = vmatpush.msra.mxu0 %v4271
        %4570 = vmatpush.msra.mxu0 %v4269
        %4571 = vmatpush.msra.mxu0 %v4255
        %4572 = vmatpush.msra.mxu0 %v4253
        %4573 = vmatpush.msra.mxu0 %v4251
        %4574 = vmatpush.msra.mxu0 %v4249
        %4575 = vmatmul.f32.gmra.mxu0 %v4130
        %v4576 = vpop.f32.mrf.mxu0
        %v4577 = vadd.f32 %v4536, %v4576
        %4578 = vmatmul.f32.gmra.mxu0 %v4136
        %v4579 = vpop.f32.mrf.mxu0
        %v4580 = vadd.f32 %v4539, %v4579
        %4581 = vmatmul.f32.gmra.mxu0 %v4142
        %v4582 = vpop.f32.mrf.mxu0
        %v4583 = vadd.f32 %v4542, %v4582
        %4584 = vmatmul.f32.gmra.mxu0 %v4148
        %v4585 = vpop.f32.mrf.mxu0
        %v4586 = vadd.f32 %v4545, %v4585
        %4587 = vmatmul.f32.gmra.mxu0 %v4154
        %v4588 = vpop.f32.mrf.mxu0
        %v4589 = vadd.f32 %v4548, %v4588
        %4590 = vmatmul.f32.gmra.mxu0 %v4160
        %v4591 = vpop.f32.mrf.mxu0
        %v4592 = vadd.f32 %v4551, %v4591
        %4593 = vmatmul.f32.gmra.mxu0 %v4166
        %v4594 = vpop.f32.mrf.mxu0
        %v4595 = vadd.f32 %v4554, %v4594
        %4596 = vmatmul.f32.gmra.mxu0 %v4172
        %v4597 = vpop.f32.mrf.mxu0
        %v4598 = vadd.f32 %v4557, %v4597
        %4599 = vdwg.mxu0
        %4600 = vmatpush.msra.mxu0 %v4347
        %4601 = vmatpush.msra.mxu0 %v4345
        %4602 = vmatpush.msra.mxu0 %v4343
        %4603 = vmatpush.msra.mxu0 %v4341
        %4604 = vmatpush.msra.mxu0 %v4327
        %4605 = vmatpush.msra.mxu0 %v4325
        %4606 = vmatpush.msra.mxu0 %v4323
        %4607 = vmatpush.msra.mxu0 %v4321
        %4608 = vmatpush.msra.mxu0 %v4319
        %4609 = vmatpush.msra.mxu0 %v4317
        %4610 = vmatpush.msra.mxu0 %v4315
        %4611 = vmatpush.msra.mxu0 %v4313
        %4612 = vmatpush.msra.mxu0 %v4311
        %4613 = vmatpush.msra.mxu0 %v4309
        %4614 = vmatpush.msra.mxu0 %v4307
        %4615 = vmatpush.msra.mxu0 %v4305
        %4616 = vmatmul.f32.gmra.mxu0 %v4131
        %v4617 = vpop.f32.mrf.mxu0
        %v4618 = vadd.f32 %v4577, %v4617
        %4619 = vmatmul.f32.gmra.mxu0 %v4137
        %v4620 = vpop.f32.mrf.mxu0
        %v4621 = vadd.f32 %v4580, %v4620
        %4622 = vmatmul.f32.gmra.mxu0 %v4143
        %v4623 = vpop.f32.mrf.mxu0
        %v4624 = vadd.f32 %v4583, %v4623
        %4625 = vmatmul.f32.gmra.mxu0 %v4149
        %v4626 = vpop.f32.mrf.mxu0
        %v4627 = vadd.f32 %v4586, %v4626
        %4628 = vmatmul.f32.gmra.mxu0 %v4155
        %v4629 = vpop.f32.mrf.mxu0
        %v4630 = vadd.f32 %v4589, %v4629
        %4631 = vmatmul.f32.gmra.mxu0 %v4161
        %v4632 = vpop.f32.mrf.mxu0
        %v4633 = vadd.f32 %v4592, %v4632
        %4634 = vmatmul.f32.gmra.mxu0 %v4167
        %v4635 = vpop.f32.mrf.mxu0
        %v4636 = vadd.f32 %v4595, %v4635
        %4637 = vmatmul.f32.gmra.mxu0 %v4173
        %v4638 = vpop.f32.mrf.mxu0
        %v4639 = vadd.f32 %v4598, %v4638
        %4640 = vdwg.mxu0
        %4641 = vmatpush.msra.mxu0 %v4391
        %4642 = vmatpush.msra.mxu0 %v4389
        %4643 = vmatpush.msra.mxu0 %v4387
        %4644 = vmatpush.msra.mxu0 %v4385
        %4645 = vmatpush.msra.mxu0 %v4383
        %4646 = vmatpush.msra.mxu0 %v4381
        %4647 = vmatpush.msra.mxu0 %v4379
        %4648 = vmatpush.msra.mxu0 %v4377
        %4649 = vmatpush.msra.mxu0 %v4363
        %4650 = vmatpush.msra.mxu0 %v4361
        %4651 = vmatpush.msra.mxu0 %v4359
        %4652 = vmatpush.msra.mxu0 %v4357
        %4653 = vmatpush.msra.mxu0 %v4355
        %4654 = vmatpush.msra.mxu0 %v4353
        %4655 = vmatpush.msra.mxu0 %v4351
        %4656 = vmatpush.msra.mxu0 %v4349
        %4657 = vmatmul.f32.gmra.mxu0 %v4132
        %v4658 = vpop.f32.mrf.mxu0
        %v4659 = vadd.f32 %v4618, %v4658
        %4660 = vmatmul.f32.gmra.mxu0 %v4138
        %v4661 = vpop.f32.mrf.mxu0
        %v4662 = vadd.f32 %v4621, %v4661
        %4663 = vmatmul.f32.gmra.mxu0 %v4144
        %v4664 = vpop.f32.mrf.mxu0
        %v4665 = vadd.f32 %v4624, %v4664
        %4666 = vmatmul.f32.gmra.mxu0 %v4150
        %v4667 = vpop.f32.mrf.mxu0
        %v4668 = vadd.f32 %v4627, %v4667
        %4669 = vmatmul.f32.gmra.mxu0 %v4156
        %v4670 = vpop.f32.mrf.mxu0
        %v4671 = vadd.f32 %v4630, %v4670
        %4672 = vmatmul.f32.gmra.mxu0 %v4162
        %v4673 = vpop.f32.mrf.mxu0
        %v4674 = vadd.f32 %v4633, %v4673
        %4675 = vmatmul.f32.gmra.mxu0 %v4168
        %v4676 = vpop.f32.mrf.mxu0
        %v4677 = vadd.f32 %v4636, %v4676
        %4678 = vmatmul.f32.gmra.mxu0 %v4174
        %v4679 = vpop.f32.mrf.mxu0
        %v4680 = vadd.f32 %v4639, %v4679
        %4681 = vdwg.mxu0
        %4682 = vmatpush.msra.mxu0 0.0
        %4683 = vmatpush.msra.mxu0 0.0
        %4684 = vmatpush.msra.mxu0 0.0
        %4685 = vmatpush.msra.mxu0 0.0
        %4686 = vmatpush.msra.mxu0 0.0
        %4687 = vmatpush.msra.mxu0 0.0
        %4688 = vmatpush.msra.mxu0 0.0
        %4689 = vmatpush.msra.mxu0 0.0
        %4690 = vmatpush.msra.mxu0 0.0
        %4691 = vmatpush.msra.mxu0 0.0
        %4692 = vmatpush.msra.mxu0 0.0
        %4693 = vmatpush.msra.mxu0 0.0
        %4694 = vmatpush.msra.mxu0 %v4399
        %4695 = vmatpush.msra.mxu0 %v4397
        %4696 = vmatpush.msra.mxu0 %v4395
        %4697 = vmatpush.msra.mxu0 %v4393
        %4698 = vmatmul.f32.gmra.mxu0 %v4454
        %v4699 = vpop.f32.mrf.mxu0
        %v4700 = vadd.f32 %v4659, %v4699
        %4701 = vmatmul.f32.gmra.mxu0 %v4457
        %v4702 = vpop.f32.mrf.mxu0
        %v4703 = vadd.f32 %v4662, %v4702
        %4704 = vmatmul.f32.gmra.mxu0 %v4460
        %v4705 = vpop.f32.mrf.mxu0
        %v4706 = vadd.f32 %v4665, %v4705
        %4707 = vmatmul.f32.gmra.mxu0 %v4463
        %v4708 = vpop.f32.mrf.mxu0
        %v4709 = vadd.f32 %v4668, %v4708
        %4710 = vmatmul.f32.gmra.mxu0 %v4466
        %v4711 = vpop.f32.mrf.mxu0
        %v4712 = vadd.f32 %v4671, %v4711
        %4713 = vmatmul.f32.gmra.mxu0 %v4469
        %v4714 = vpop.f32.mrf.mxu0
        %v4715 = vadd.f32 %v4674, %v4714
        %4716 = vmatmul.f32.gmra.mxu0 %v4472
        %v4717 = vpop.f32.mrf.mxu0
        %v4718 = vadd.f32 %v4677, %v4717
        %4719 = vmatmul.f32.gmra.mxu0 %v4475
        %v4720 = vpop.f32.mrf.mxu0
        %v4721 = vadd.f32 %v4680, %v4720
        %4722 = vdwg.mxu0
        %v4723 = vtanh.pop %v4700
        %v4724 = vtanh.pop %v4703
        %v4725 = vtanh.pop %v4706
        %v4726 = vtanh.pop %v4709
        %v4727 = vtanh.pop %v4712
        %v4728 = vtanh.pop %v4715
        %v4729 = vtanh.pop %v4718
        %v4730 = vtanh.pop %v4721
        %v4731 = vmul.u32 %v1039, 2
        %v4732 = vmul.u32 %v1040, 2
        %v4733 = vmul.u32 %v1041, 2
        %v4734 = vmul.u32 %v1042, 2
        %v4735 = vadd.s32 %v4731, 6
        %v4736 = vadd.s32 %v4732, 6
        %v4737 = vadd.s32 %v4733, 6
        %v4738 = vadd.s32 %v4734, 6
        %vm4739 = vcmp.eq.s32.totalorder %v1052, %v4735
        %vm4740 = vcmp.eq.s32.totalorder %v1052, %v4736
        %vm4741 = vcmp.eq.s32.totalorder %v1052, %v4737
        %vm4742 = vcmp.eq.s32.totalorder %v1052, %v4738
        %v4743 = vsel %vm4739, 1.0, 0.0
        %v4744 = vsel %vm4740, 1.0, 0.0
        %v4745 = vsel %vm4741, 1.0, 0.0
        %v4746 = vsel %vm4742, 1.0, 0.0
        %vm4747 = vcmask 474112
        %v4749 = vsel %vm4747, %v4723, 0
        %v4752 = vsel %vm4747, %v4724, 0
        %v4755 = vsel %vm4747, %v4725, 0
        %v4758 = vsel %vm4747, %v4726, 0
        %v4761 = vsel %vm4747, %v4727, 0
        %v4764 = vsel %vm4747, %v4728, 0
        %v4767 = vsel %vm4747, %v4729, 0
        %v4770 = vsel %vm4747, %v4730, 0
        %v4773 = vsel %vm1132, %v4746, 0
        %4775 = vmatpush.msra.mxu0 0.0
        %4776 = vmatpush.msra.mxu0 0.0
        %4777 = vmatpush.msra.mxu0 0.0
        %4778 = vmatpush.msra.mxu0 0.0
        %4779 = vmatpush.msra.mxu0 0.0
        %4780 = vmatpush.msra.mxu0 0.0
        %4781 = vmatpush.msra.mxu0 0.0
        %4782 = vmatpush.msra.mxu0 0.0
        %4783 = vmatpush.msra.mxu0 %v4773
        %4784 = vmatpush.msra.mxu0 %v4745
        %4785 = vmatpush.msra.mxu0 %v4744
        %4786 = vmatpush.msra.mxu0 %v4743
        %4787 = vmatpush.msra.mxu0 %v4035
        %4788 = vmatpush.msra.mxu0 %v4034
        %4789 = vmatpush.msra.mxu0 %v2657
        %4790 = vmatpush.msra.mxu0 %v2656
        %4791 = vmatmul.f32.gmra.mxu0 %v4749
        %v4792 = vpop.f32.mrf.mxu0
        %v4793 = vadd.f32 0.0, %v4792
        %4794 = vmatmul.f32.gmra.mxu0 %v4752
        %v4795 = vpop.f32.mrf.mxu0
        %v4796 = vadd.f32 0.0, %v4795
        %4797 = vmatmul.f32.gmra.mxu0 %v4755
        %v4798 = vpop.f32.mrf.mxu0
        %v4799 = vadd.f32 0.0, %v4798
        %4800 = vmatmul.f32.gmra.mxu0 %v4758
        %v4801 = vpop.f32.mrf.mxu0
        %v4802 = vadd.f32 0.0, %v4801
        %4803 = vmatmul.f32.gmra.mxu0 %v4761
        %v4804 = vpop.f32.mrf.mxu0
        %v4805 = vadd.f32 0.0, %v4804
        %4806 = vmatmul.f32.gmra.mxu0 %v4764
        %v4807 = vpop.f32.mrf.mxu0
        %v4808 = vadd.f32 0.0, %v4807
        %4809 = vmatmul.f32.gmra.mxu0 %v4767
        %v4810 = vpop.f32.mrf.mxu0
        %v4811 = vadd.f32 0.0, %v4810
        %4812 = vmatmul.f32.gmra.mxu0 %v4770
        %v4813 = vpop.f32.mrf.mxu0
        %v4814 = vadd.f32 0.0, %v4813
        %4815 = vdwg.mxu0
        %v4816 = vld [vmem:[#allocation11] sm:$0xff]
        %v4817 = vld [vmem:[#allocation11 + $0x8] sm:$0xff]
        %v4818 = vld [vmem:[#allocation11 + $0x10] sm:$0xff]
        %v4819 = vld [vmem:[#allocation11 + $0x18] sm:$0xff]
        %v4820 = vld [vmem:[#allocation11 + $0x20] sm:$0xff]
        %v4821 = vld [vmem:[#allocation11 + $0x28] sm:$0xff]
        %v4822 = vld [vmem:[#allocation11 + $0x30] sm:$0xff]
        %v4823 = vld [vmem:[#allocation11 + $0x38] sm:$0xff]
        %v4824 = vld [vmem:[#allocation11 + $0x40] sm:$0xff]
        %v4825 = vld [vmem:[#allocation11 + $0x48] sm:$0xff]
        %v4826 = vld [vmem:[#allocation11 + $0x50] sm:$0xff]
        %v4827 = vld [vmem:[#allocation11 + $0x58] sm:$0xff]
        %v4828 = vld [vmem:[#allocation11 + $0x60] sm:$0xff]
        %v4829 = vld [vmem:[#allocation11 + $0x68] sm:$0xff]
        %v4830 = vld [vmem:[#allocation11 + $0x70] sm:$0xff]
        %v4831 = vld [vmem:[#allocation11 + $0x78] sm:$0xff]
        %v4832 = vld [vmem:[%s18] sm:$0xff]
        %v4833 = vld [vmem:[%s18 + $0x8] sm:$0xff]
        %v4834 = vld [vmem:[%s18 + $0x10] sm:$0xff]
        %v4835 = vld [vmem:[%s18 + $0x18] sm:$0xff]
        %4844 = vrot.lane.b32.xlu0 %v4793, 127
        %v4845 = vpop.permute.xlu0 %4844
        %4846 = vrot.lane.b32.xlu0 %v4796, 127
        %v4847 = vpop.permute.xlu0 %4846
        %4848 = vrot.lane.b32.xlu0 %v4799, 127
        %v4849 = vpop.permute.xlu0 %4848
        %4850 = vrot.lane.b32.xlu0 %v4802, 127
        %v4851 = vpop.permute.xlu0 %4850
        %4852 = vrot.lane.b32.xlu0 %v4805, 127
        %v4853 = vpop.permute.xlu0 %4852
        %4854 = vrot.lane.b32.xlu0 %v4808, 127
        %v4855 = vpop.permute.xlu0 %4854
        %4856 = vrot.lane.b32.xlu0 %v4811, 127
        %v4857 = vpop.permute.xlu0 %4856
        %4858 = vrot.lane.b32.xlu0 %v4814, 127
        %v4859 = vpop.permute.xlu0 %4858
        %4868 = vrot.lane.b32.xlu0 %v4793, 126
        %v4869 = vpop.permute.xlu0 %4868
        %4870 = vrot.lane.b32.xlu0 %v4796, 126
        %v4871 = vpop.permute.xlu0 %4870
        %4872 = vrot.lane.b32.xlu0 %v4799, 126
        %v4873 = vpop.permute.xlu0 %4872
        %4874 = vrot.lane.b32.xlu0 %v4802, 126
        %v4875 = vpop.permute.xlu0 %4874
        %4876 = vrot.lane.b32.xlu0 %v4805, 126
        %v4877 = vpop.permute.xlu0 %4876
        %4878 = vrot.lane.b32.xlu0 %v4808, 126
        %v4879 = vpop.permute.xlu0 %4878
        %4880 = vrot.lane.b32.xlu0 %v4811, 126
        %v4881 = vpop.permute.xlu0 %4880
        %4882 = vrot.lane.b32.xlu0 %v4814, 126
        %v4883 = vpop.permute.xlu0 %4882
        %4892 = vrot.lane.b32.xlu0 %v4793, 125
        %v4893 = vpop.permute.xlu0 %4892
        %4894 = vrot.lane.b32.xlu0 %v4796, 125
        %v4895 = vpop.permute.xlu0 %4894
        %4896 = vrot.lane.b32.xlu0 %v4799, 125
        %v4897 = vpop.permute.xlu0 %4896
        %4898 = vrot.lane.b32.xlu0 %v4802, 125
        %v4899 = vpop.permute.xlu0 %4898
        %4900 = vrot.lane.b32.xlu0 %v4805, 125
        %v4901 = vpop.permute.xlu0 %4900
        %4902 = vrot.lane.b32.xlu0 %v4808, 125
        %v4903 = vpop.permute.xlu0 %4902
        %4904 = vrot.lane.b32.xlu0 %v4811, 125
        %v4905 = vpop.permute.xlu0 %4904
        %4906 = vrot.lane.b32.xlu0 %v4814, 125
        %v4907 = vpop.permute.xlu0 %4906
        %4916 = vrot.lane.b32.xlu0 %v4793, 124
        %v4917 = vpop.permute.xlu0 %4916
        %4918 = vrot.lane.b32.xlu0 %v4796, 124
        %v4919 = vpop.permute.xlu0 %4918
        %4920 = vrot.lane.b32.xlu0 %v4799, 124
        %v4921 = vpop.permute.xlu0 %4920
        %4922 = vrot.lane.b32.xlu0 %v4802, 124
        %v4923 = vpop.permute.xlu0 %4922
        %4924 = vrot.lane.b32.xlu0 %v4805, 124
        %v4925 = vpop.permute.xlu0 %4924
        %4926 = vrot.lane.b32.xlu0 %v4808, 124
        %v4927 = vpop.permute.xlu0 %4926
        %4928 = vrot.lane.b32.xlu0 %v4811, 124
        %v4929 = vpop.permute.xlu0 %4928
        %4930 = vrot.lane.b32.xlu0 %v4814, 124
        %v4931 = vpop.permute.xlu0 %4930
        %4940 = vrot.lane.b32.xlu0 %v4793, 123
        %v4941 = vpop.permute.xlu0 %4940
        %4942 = vrot.lane.b32.xlu0 %v4796, 123
        %v4943 = vpop.permute.xlu0 %4942
        %4944 = vrot.lane.b32.xlu0 %v4799, 123
        %v4945 = vpop.permute.xlu0 %4944
        %4946 = vrot.lane.b32.xlu0 %v4802, 123
        %v4947 = vpop.permute.xlu0 %4946
        %4948 = vrot.lane.b32.xlu0 %v4805, 123
        %v4949 = vpop.permute.xlu0 %4948
        %4950 = vrot.lane.b32.xlu0 %v4808, 123
        %v4951 = vpop.permute.xlu0 %4950
        %4952 = vrot.lane.b32.xlu0 %v4811, 123
        %v4953 = vpop.permute.xlu0 %4952
        %4954 = vrot.lane.b32.xlu0 %v4814, 123
        %v4955 = vpop.permute.xlu0 %4954
        %4964 = vrot.lane.b32.xlu0 %v4793, 122
        %v4965 = vpop.permute.xlu0 %4964
        %4966 = vrot.lane.b32.xlu0 %v4796, 122
        %v4967 = vpop.permute.xlu0 %4966
        %4968 = vrot.lane.b32.xlu0 %v4799, 122
        %v4969 = vpop.permute.xlu0 %4968
        %4970 = vrot.lane.b32.xlu0 %v4802, 122
        %v4971 = vpop.permute.xlu0 %4970
        %4972 = vrot.lane.b32.xlu0 %v4805, 122
        %v4973 = vpop.permute.xlu0 %4972
        %4974 = vrot.lane.b32.xlu0 %v4808, 122
        %v4975 = vpop.permute.xlu0 %4974
        %4976 = vrot.lane.b32.xlu0 %v4811, 122
        %v4977 = vpop.permute.xlu0 %4976
        %4978 = vrot.lane.b32.xlu0 %v4814, 122
        %v4979 = vpop.permute.xlu0 %4978
        %4989 = vset.pattern.permute.xlu0 0
        %4990 = vperm.xlu0 %4989, %v4832
        %v4991 = vpop.permute.xlu0 %4990
        %4994 = vset.pattern.permute.xlu0 0
        %4995 = vperm.xlu0 %4994, %v4833
        %v4996 = vpop.permute.xlu0 %4995
        %4999 = vset.pattern.permute.xlu0 0
        %5000 = vperm.xlu0 %4999, %v4834
        %v5001 = vpop.permute.xlu0 %5000
        %5004 = vset.pattern.permute.xlu0 0
        %5005 = vperm.xlu0 %5004, %v4835
        %v5006 = vpop.permute.xlu0 %5005
        %v5009 = vsel %vm1762, %v4819, 0
        %v5012 = vsel %vm1762, %v4823, 0
        %v5015 = vsel %vm1762, %v4827, 0
        %v5018 = vsel %vm1762, %v4831, 0
        %5020 = vmatpush.msra.mxu0 %v4859
        %5021 = vmatpush.msra.mxu0 %v4857
        %5022 = vmatpush.msra.mxu0 %v4855
        %5023 = vmatpush.msra.mxu0 %v4853
        %5024 = vmatpush.msra.mxu0 %v4851
        %5025 = vmatpush.msra.mxu0 %v4849
        %5026 = vmatpush.msra.mxu0 %v4847
        %5027 = vmatpush.msra.mxu0 %v4845
        %5028 = vmatpush.msra.mxu0 %v4814
        %5029 = vmatpush.msra.mxu0 %v4811
        %5030 = vmatpush.msra.mxu0 %v4808
        %5031 = vmatpush.msra.mxu0 %v4805
        %5032 = vmatpush.msra.mxu0 %v4802
        %5033 = vmatpush.msra.mxu0 %v4799
        %5034 = vmatpush.msra.mxu0 %v4796
        %5035 = vmatpush.msra.mxu0 %v4793
        %5036 = vmatmul.f32.gmra.mxu0 %v4816
        %v5037 = vpop.f32.mrf.mxu0
        %v5038 = vadd.f32 %v4991, %v5037
        %5039 = vmatmul.f32.gmra.mxu0 %v4820
        %v5040 = vpop.f32.mrf.mxu0
        %v5041 = vadd.f32 %v4996, %v5040
        %5042 = vmatmul.f32.gmra.mxu0 %v4824
        %v5043 = vpop.f32.mrf.mxu0
        %v5044 = vadd.f32 %v5001, %v5043
        %5045 = vmatmul.f32.gmra.mxu0 %v4828
        %v5046 = vpop.f32.mrf.mxu0
        %v5047 = vadd.f32 %v5006, %v5046
        %5048 = vdwg.mxu0
        %5049 = vmatpush.msra.mxu0 %v4907
        %5050 = vmatpush.msra.mxu0 %v4905
        %5051 = vmatpush.msra.mxu0 %v4903
        %5052 = vmatpush.msra.mxu0 %v4901
        %5053 = vmatpush.msra.mxu0 %v4899
        %5054 = vmatpush.msra.mxu0 %v4897
        %5055 = vmatpush.msra.mxu0 %v4895
        %5056 = vmatpush.msra.mxu0 %v4893
        %5057 = vmatpush.msra.mxu0 %v4883
        %5058 = vmatpush.msra.mxu0 %v4881
        %5059 = vmatpush.msra.mxu0 %v4879
        %5060 = vmatpush.msra.mxu0 %v4877
        %5061 = vmatpush.msra.mxu0 %v4875
        %5062 = vmatpush.msra.mxu0 %v4873
        %5063 = vmatpush.msra.mxu0 %v4871
        %5064 = vmatpush.msra.mxu0 %v4869
        %5065 = vmatmul.f32.gmra.mxu0 %v4817
        %v5066 = vpop.f32.mrf.mxu0
        %v5067 = vadd.f32 %v5038, %v5066
        %5068 = vmatmul.f32.gmra.mxu0 %v4821
        %v5069 = vpop.f32.mrf.mxu0
        %v5070 = vadd.f32 %v5041, %v5069
        %5071 = vmatmul.f32.gmra.mxu0 %v4825
        %v5072 = vpop.f32.mrf.mxu0
        %v5073 = vadd.f32 %v5044, %v5072
        %5074 = vmatmul.f32.gmra.mxu0 %v4829
        %v5075 = vpop.f32.mrf.mxu0
        %v5076 = vadd.f32 %v5047, %v5075
        %5077 = vdwg.mxu0
        %5078 = vmatpush.msra.mxu0 %v4955
        %5079 = vmatpush.msra.mxu0 %v4953
        %5080 = vmatpush.msra.mxu0 %v4951
        %5081 = vmatpush.msra.mxu0 %v4949
        %5082 = vmatpush.msra.mxu0 %v4947
        %5083 = vmatpush.msra.mxu0 %v4945
        %5084 = vmatpush.msra.mxu0 %v4943
        %5085 = vmatpush.msra.mxu0 %v4941
        %5086 = vmatpush.msra.mxu0 %v4931
        %5087 = vmatpush.msra.mxu0 %v4929
        %5088 = vmatpush.msra.mxu0 %v4927
        %5089 = vmatpush.msra.mxu0 %v4925
        %5090 = vmatpush.msra.mxu0 %v4923
        %5091 = vmatpush.msra.mxu0 %v4921
        %5092 = vmatpush.msra.mxu0 %v4919
        %5093 = vmatpush.msra.mxu0 %v4917
        %5094 = vmatmul.f32.gmra.mxu0 %v4818
        %v5095 = vpop.f32.mrf.mxu0
        %v5096 = vadd.f32 %v5067, %v5095
        %5097 = vmatmul.f32.gmra.mxu0 %v4822
        %v5098 = vpop.f32.mrf.mxu0
        %v5099 = vadd.f32 %v5070, %v5098
        %5100 = vmatmul.f32.gmra.mxu0 %v4826
        %v5101 = vpop.f32.mrf.mxu0
        %v5102 = vadd.f32 %v5073, %v5101
        %5103 = vmatmul.f32.gmra.mxu0 %v4830
        %v5104 = vpop.f32.mrf.mxu0
        %v5105 = vadd.f32 %v5076, %v5104
        %5106 = vdwg.mxu0
        %5107 = vmatpush.msra.mxu0 0.0
        %5108 = vmatpush.msra.mxu0 0.0
        %5109 = vmatpush.msra.mxu0 0.0
        %5110 = vmatpush.msra.mxu0 0.0
        %5111 = vmatpush.msra.mxu0 0.0
        %5112 = vmatpush.msra.mxu0 0.0
        %5113 = vmatpush.msra.mxu0 0.0
        %5114 = vmatpush.msra.mxu0 0.0
        %5115 = vmatpush.msra.mxu0 %v4979
        %5116 = vmatpush.msra.mxu0 %v4977
        %5117 = vmatpush.msra.mxu0 %v4975
        %5118 = vmatpush.msra.mxu0 %v4973
        %5119 = vmatpush.msra.mxu0 %v4971
        %5120 = vmatpush.msra.mxu0 %v4969
        %5121 = vmatpush.msra.mxu0 %v4967
        %5122 = vmatpush.msra.mxu0 %v4965
        %5123 = vmatmul.f32.gmra.mxu0 %v5009
        %v5124 = vpop.f32.mrf.mxu0
        %v5125 = vadd.f32 %v5096, %v5124
        %5126 = vmatmul.f32.gmra.mxu0 %v5012
        %v5127 = vpop.f32.mrf.mxu0
        %v5128 = vadd.f32 %v5099, %v5127
        %5129 = vmatmul.f32.gmra.mxu0 %v5015
        %v5130 = vpop.f32.mrf.mxu0
        %v5131 = vadd.f32 %v5102, %v5130
        %5132 = vmatmul.f32.gmra.mxu0 %v5018
        %v5133 = vpop.f32.mrf.mxu0
        %v5134 = vadd.f32 %v5105, %v5133
        %5135 = vdwg.mxu0
        %v5136 = vtanh.pop %v5125
        %v5137 = vtanh.pop %v5128
        %v5138 = vtanh.pop %v5131
        %v5139 = vtanh.pop %v5134
        %v5140 = vld [vmem:[#allocation3] sm:$0x1]
        %v5142 = vperm.slane %v5140, 0
        %5143 = vset.pattern.permute.xlu0 0
        %5144 = vperm.xlu0 %5143, %v5142
        %v5145 = vpop.permute.xlu0 %5144
        %v5147 = vmul.f32 %v5136, %v5145
        %v5148 = vmul.f32 %v5137, %v5145
        %v5149 = vmul.f32 %v5138, %v5145
        %v5150 = vmul.f32 %v5139, %v5145
        %v5151 = vld [vmem:[#allocation4] sm:$0x1]
        %v5153 = vperm.slane %v5151, 0
        %5154 = vset.pattern.permute.xlu0 0
        %5155 = vperm.xlu0 %5154, %v5153
        %v5156 = vpop.permute.xlu0 %5155
        %v5158 = vadd.f32 %v5147, %v5156
        %v5159 = vadd.f32 %v5148, %v5156
        %v5160 = vadd.f32 %v5149, %v5156
        %v5161 = vadd.f32 %v5150, %v5156
        %v5162 = vtanh.pop %v5158
        %v5163 = vtanh.pop %v5159
        %v5164 = vtanh.pop %v5160
        %v5165 = vtanh.pop %v5161
        %5166 = vst.msk [vmem:[%s725] sm:$0xff] %vm1119, %v5162
        %5167 = vst.msk [vmem:[%s725 + $0x8] sm:$0xff] %vm1119, %v5163
        %5168 = vst.msk [vmem:[%s725 + $0x10] sm:$0xff] %vm1119, %v5164
        %5169 = vst.msk [vmem:[%s725 + $0x18] sm:$0xff] %vm1119, %v5165
        %s5170 = sand.u32 %s500, 1
        %s5171 = scalar_lea.sflag [#allocation7], %s5170
        %s5172 = sand.u32 %s500, 1
        %s5173 = smul.addr %s5172, 32
        %s5174 = scalar_lea.vmem [#allocation13], %s5173
        // Predicated region
        $region121: #{autoencoder_forward.1} parent=103 // pred_check
          %p5175 = pneg %p510
        $region122: #{autoencoder_forward.1} parent=103 // pred_check_branch
          %5177 = sbr.rel (%p5175) target = $region124
        $region123: #{autoencoder_forward.1} parent=103 // pred_region
          %5179 = vsyncadd %s5171, 0
          %s5180 = smul.addr %s46, 4
          %s5181 = smul.addr %s5180, 8
          %s5182 = scalar_lea.hbm %s21, %s5181
          %s5183 = sshll.u32 %s5174, 4
          %s5184 = int_to_ptr.vmem [resolvable:$true] %s5183
          %s5185 = sshll.u32 %s5182, 4
          %s5186 = int_to_ptr.hbm [resolvable:$true] %s5185
          %5191 = dma.vmem_to_hbm [thread:$0]  %s5184, 512, %s5186, %s5171, 128, 128, 8
        $region124: #{autoencoder_forward.1} parent=103 // pred_fallthru
          _
      $region104: #{autoencoder_forward.1} parent=5 // pred_fallthru
        _
      %p5192 = scmp.le.s32.totalorder 2, %s41
      // Predicated region
      $region125: #{autoencoder_forward.1} parent=5 // pred_check
        %p5193 = pneg %p5192
      $region126: #{autoencoder_forward.1} parent=5 // pred_check_branch
        %5195 = sbr.rel (%p5193) target = $region128
      $region127: #{autoencoder_forward.1} parent=5 // pred_region
        %s5196 = ssub.s32 %s41, 2
        // Predicated region
        $region129: #{autoencoder_forward.1} parent=127 // pred_check
          %p5197 = pneg %p516
        $region130: #{autoencoder_forward.1} parent=127 // pred_check_branch
          %5199 = sbr.rel (%p5197) target = $region132
        $region131: #{autoencoder_forward.1} parent=127 // pred_region
          %s5200 = sand.u32 %s501, 1
          %s5201 = scalar_lea.sflag [#allocation7], %s5200
          %s5202 = sand.u32 %s501, 1
          %s5203 = smul.addr %s5202, 32
          %s5204 = scalar_lea.vmem [#allocation13], %s5203
          %5206 = dma.done %s5201, 512
        $region132: #{autoencoder_forward.1} parent=127 // pred_fallthru
          _
      $region128: #{autoencoder_forward.1} parent=5 // pred_fallthru
        _
    $region6: #{autoencoder_forward.1} parent=1 // loop_footer
      %s45 = sadd.s32 1, %s41
    $region7: #{autoencoder_forward.1} parent=1 // loop_footer_branch
      %40 = sbr.rel target = $region3
    $region8: #{autoencoder_forward.1} parent=1 // loop_exit
      _
    %5207 = vsyncpa [#allocation6], 1
    %s5208 = scalar_lea.sflag [#allocation6], 1
    %5209 = vsyncpa %s5208, 1
    %5210 = vsyncpa [#allocation9], 1
    %5211 = vsyncpa [#allocation12], 1
    %5212 = vsyncpa [#allocation7], 1
    %s5213 = scalar_lea.sflag [#allocation7], 1
    %5214 = vsyncpa %s5213, 1

</llo_original>
